<compile_context>
chip_gen: v5e
topology: v5e:2x2
jax: 0.10.0
libtpu: 0.0.40
codegen_flags: <defaults>
</compile_context>

<pallas_src>
import functools

import numpy as np

import jax
import jax.numpy as jnp
from jax.experimental import pallas as pl
from jax.experimental.pallas import tpu as pltpu


# ----------------------------------------------------------------------------
# Architecture constants (9x9x27 observation -> the PyTorch module's shapes).
# ----------------------------------------------------------------------------
H, W, C_IN = 9, 9, 27
OH1, OW1, C1 = 4, 4, 32      # conv1 (3x3, stride 2); both trunks fused (16+16)
OH2, OW2, C2 = 3, 3, 64      # conv2 (2x2, stride 1); both trunks fused (32+32)
K0 = H * W * C_IN            # 2187 raw NHWC-flat input features
K0_PAD = 2304                # padded to a multiple of 128 (18 * 128)
N1 = OH1 * OW1 * C1          # 512  conv1 output lanes (NHWC-flat)
N2 = OH2 * OW2 * C2          # 576  conv2 output lanes (NHWC-flat)
N2_PAD = 640                 # padded to a multiple of 128 (5 * 128)
NF = 512                     # fc1 output lanes (256 policy | 256 value)
HEAD_LANES = 128             # actor + value head lanes (unmasked vst)
TB_MAX = 256                 # per-grid-step batch tile (VMEM-safe on v7x 64 MiB)


def _round_up(x, m):
    return ((x + m - 1) // m) * m


# ----------------------------------------------------------------------------
# Single fused Pallas kernel: conv1 -> conv2 -> fc1 (both trunks) -> heads,
# each stage as one lane-dense MXU matmul on the batch tile.
# ----------------------------------------------------------------------------
def _fused_forward_kernel(x_ref, t1_ref, b1_ref, t2_ref, b2_ref,
                          wf_ref, bf_ref, wh_ref, bh_ref, o_ref):
    # conv1 (both trunks) as one block-Toeplitz matmul: (TB, 2304) @ (2304, 512).
    h1 = jnp.dot(x_ref[...], t1_ref[...], preferred_element_type=jnp.float32)
    h1 = jnp.maximum(h1 + b1_ref[...], 0.0).astype(jnp.bfloat16)

    # conv2 (both trunks, block-diagonal) as one matmul: (TB, 512) @ (512, 640).
    h2 = jnp.dot(h1, t2_ref[...], preferred_element_type=jnp.float32)
    h2 = jnp.maximum(h2 + b2_ref[...], 0.0).astype(jnp.bfloat16)

    # fc1 (both trunks; torch's NCHW flatten folded into the weight rows):
    # (TB, 640) @ (640, 512).
    h3 = jnp.dot(h2, wf_ref[...], preferred_element_type=jnp.float32)
    h3 = jnp.maximum(h3 + bf_ref[...], 0.0).astype(jnp.bfloat16)

    # Fused actor + value heads, 128 output lanes.
    y = jnp.dot(h3, wh_ref[...], preferred_element_type=jnp.float32)
    o_ref[...] = (y + bh_ref[...]).astype(o_ref.dtype)


def fused_forward(x_flat, fp, *, tb):
    """x_flat: (B_pad, K0_PAD) bf16, B_pad a multiple of tb. Returns (B_pad, 128) f32."""
    bp = x_flat.shape[0]
    weights = (fp["t1"], fp["b1"], fp["t2"], fp["b2"],
               fp["wf"], fp["bf"], fp["wh"], fp["bh"])
    # Constant index maps -> weights stay VMEM-resident across grid steps.
    # TODO(synk): if the bundle dump shows these grid-invariant weights being
    # re-DMA'd per step, pin them with pipeline_mode=pl.Buffered(1); on v7x the
    # fc1/head weights could additionally be stored fp8 for 2x MXU throughput.
    w_specs = [pl.BlockSpec(w.shape, lambda i: (0, 0)) for w in weights]
    return pl.pallas_call(
        _fused_forward_kernel,
        out_shape=jax.ShapeDtypeStruct((bp, HEAD_LANES), jnp.float32),
        grid=(bp // tb,),
        in_specs=[pl.BlockSpec((tb, K0_PAD), lambda i: (i, 0))] + w_specs,
        out_specs=pl.BlockSpec((tb, HEAD_LANES), lambda i: (i, 0)),
        compiler_params=pltpu.CompilerParams(
            dimension_semantics=("parallel",)),
    )(x_flat, *weights)


# ----------------------------------------------------------------------------
# Forward wrapper (matches ActorCritic.forward -> (distris, value)).
# ----------------------------------------------------------------------------
def actor_critic_forward(states_nhwc, packed, n_act):
    assert states_nhwc.shape[1:] == (H, W, C_IN), states_nhwc.shape
    B = states_nhwc.shape[0]
    tb = min(TB_MAX, _round_up(B, 16))
    bp = _round_up(B, tb)
    # One fused XLA op at the boundary: flatten NHWC, zero-pad rows/lanes, bf16.
    x = states_nhwc.reshape(B, K0)
    x = jnp.pad(x, ((0, bp - B), (0, K0_PAD - K0))).astype(jnp.bfloat16)
    out = fused_forward(x, packed, tb=tb)
    distris = out[:B, :n_act]
    value = out[:B, n_act:n_act + 1]
    return distris, value


# ----------------------------------------------------------------------------
# Host-side packing: per-trunk conv/fc params -> fused block-Toeplitz layouts.
# (numpy; one-time setup, keeps the trace free of 100s of scatter ops)
# ----------------------------------------------------------------------------
def pack_params(raw, n_act):
    g = lambda k: np.asarray(raw[k], np.float32)

    # conv1 -> block-Toeplitz (K0_PAD, N1).
    # rows: NHWC-flat input (h, w, ci); cols: NHWC-flat conv1 output (oh, ow, c)
    # with fused channels c = [policy 0:16 | value 16:32].
    w1 = np.concatenate([g("p_conv1_w"), g("v_conv1_w")], axis=-1)  # (3,3,27,32) HWIO
    t1 = np.zeros((K0_PAD, N1), np.float32)
    for oh in range(OH1):
        for ow in range(OW1):
            col = (oh * OW1 + ow) * C1
            for kh in range(3):
                for kw in range(3):
                    row = ((2 * oh + kh) * W + (2 * ow + kw)) * C_IN
                    t1[row:row + C_IN, col:col + C1] = w1[kh, kw]
    b1 = np.tile(np.concatenate([g("p_conv1_b"), g("v_conv1_b")]), OH1 * OW1)

    # conv2 -> block-Toeplitz (N1, N2_PAD); block-diagonal across the trunks.
    wp, wv = g("p_conv2_w"), g("v_conv2_w")                         # (2,2,16,32) HWIO
    t2 = np.zeros((N1, N2_PAD), np.float32)
    for oh in range(OH2):
        for ow in range(OW2):
            col = (oh * OW2 + ow) * C2
            for kh in range(2):
                for kw in range(2):
                    row = ((oh + kh) * OW1 + (ow + kw)) * C1
                    t2[row:row + 16, col:col + 32] = wp[kh, kw]
                    t2[row + 16:row + 32, col + 32:col + 64] = wv[kh, kw]
    b2 = np.zeros((N2_PAD,), np.float32)
    b2[:N2] = np.tile(np.concatenate([g("p_conv2_b"), g("v_conv2_b")]), OH2 * OW2)

    # fc1: fold torch Flatten's NCHW (c, oh, ow) row order into the weight rows;
    # block-diagonal across trunks.  Rows follow h2's NHWC-flat (s, c_fused) order.
    spatial = OH2 * OW2
    wf_blocks = np.zeros((spatial, C2, NF), np.float32)
    wf_blocks[:, 0:32, 0:256] = g("p_fc1_w").reshape(32, spatial, 256).transpose(1, 0, 2)
    wf_blocks[:, 32:64, 256:512] = g("v_fc1_w").reshape(32, spatial, 256).transpose(1, 0, 2)
    wf = np.zeros((N2_PAD, NF), np.float32)
    wf[:N2] = wf_blocks.reshape(N2, NF)
    bf = np.concatenate([g("p_fc1_b"), g("v_fc1_b")])

    # heads: actor (cols 0..n_act-1) + value (col n_act), lane-padded to 128.
    wh = np.zeros((NF, HEAD_LANES), np.float32)
    wh[0:256, 0:n_act] = g("actor_w")
    wh[256:512, n_act:n_act + 1] = g("value_w")
    bh = np.zeros((HEAD_LANES,), np.float32)
    bh[0:n_act] = g("actor_b")
    bh[n_act] = g("value_b")[0]

    return dict(t1=t1, b1=b1.reshape(1, N1),
                t2=t2, b2=b2.reshape(1, N2_PAD),
                wf=wf, bf=bf.reshape(1, NF),
                wh=wh, bh=bh.reshape(1, HEAD_LANES))


def cast_for_kernel(packed_f32):
    """Weight matrices -> bf16 (MXU feed); biases stay f32 (VPU add/ReLU)."""
    out = {}
    for k, v in packed_f32.items():
        a = jnp.asarray(v)
        out[k] = a.astype(jnp.bfloat16) if k in ("t1", "t2", "wf", "wh") else a
    return out


# ----------------------------------------------------------------------------
# Synthetic per-trunk parameters (deterministic scaled normals; stand-in for
# the orthogonal layer_init — initialization is not part of the forward math).
# ----------------------------------------------------------------------------
def make_params(key, action_space):
    n_act = int(sum(action_space))
    cnn_output_dim = 32 * OH2 * OW2
    ks = jax.random.split(key, 16)

    def w(k, shape, scale=0.1):
        return scale * jax.random.normal(k, shape, dtype=jnp.float32)

    raw = dict(
        p_conv1_w=w(ks[0], (3, 3, C_IN, 16)), p_conv1_b=w(ks[8], (16,)),
        p_conv2_w=w(ks[1], (2, 2, 16, 32)),   p_conv2_b=w(ks[9], (32,)),
        p_fc1_w=w(ks[2], (cnn_output_dim, 256)), p_fc1_b=w(ks[10], (256,)),
        v_conv1_w=w(ks[3], (3, 3, C_IN, 16)), v_conv1_b=w(ks[11], (16,)),
        v_conv2_w=w(ks[4], (2, 2, 16, 32)),   v_conv2_b=w(ks[12], (32,)),
        v_fc1_w=w(ks[5], (cnn_output_dim, 256)), v_fc1_b=w(ks[13], (256,)),
        actor_w=w(ks[6], (256, n_act)),       actor_b=w(ks[14], (n_act,)),
        value_w=w(ks[7], (256, 1), scale=1.0), value_b=w(ks[15], (1,)),
    )
    return raw, n_act


# ----------------------------------------------------------------------------
# References.
# ----------------------------------------------------------------------------
_HI = jax.lax.Precision.HIGHEST


def _reference_forward(states_nhwc, raw, n_act):
    """Unfused f32 reference mirroring the PyTorch module (HIGHEST precision)."""
    def conv(x, w, b, stride):
        y = jax.lax.conv_general_dilated(
            x, w, window_strides=(stride, stride), padding="VALID",
            dimension_numbers=("NHWC", "HWIO", "NHWC"), precision=_HI)
        return jnp.maximum(y + b, 0.0)

    def trunk(x, c1w, c1b, c2w, c2b, f1w, f1b):
        h = conv(x, c1w, c1b, 2)
        h = conv(h, c2w, c2b, 1)
        B = h.shape[0]
        h = jnp.transpose(h, (0, 3, 1, 2)).reshape(B, -1)   # NCHW flatten (torch)
        return jnp.maximum(jnp.dot(h, f1w, precision=_HI) + f1b, 0.0)

    pol = trunk(states_nhwc, raw["p_conv1_w"], raw["p_conv1_b"],
                raw["p_conv2_w"], raw["p_conv2_b"], raw["p_fc1_w"], raw["p_fc1_b"])
    val = trunk(states_nhwc, raw["v_conv1_w"], raw["v_conv1_b"],
                raw["v_conv2_w"], raw["v_conv2_b"], raw["v_fc1_w"], raw["v_fc1_b"])
    distris = jnp.dot(pol, raw["actor_w"], precision=_HI) + raw["actor_b"]
    value = jnp.dot(val, raw["value_w"], precision=_HI) + raw["value_b"]
    return distris, value


def _fused_reference_f32(states_nhwc, pk, n_act):
    """Same math as the kernel but plain JAX in f32/HIGHEST: validates packing."""
    B = states_nhwc.shape[0]
    x = jnp.pad(states_nhwc.reshape(B, K0), ((0, 0), (0, K0_PAD - K0)))
    h1 = jnp.maximum(jnp.dot(x, jnp.asarray(pk["t1"]), precision=_HI) + pk["b1"], 0.0)
    h2 = jnp.maximum(jnp.dot(h1, jnp.asarray(pk["t2"]), precision=_HI) + pk["b2"], 0.0)
    h3 = jnp.maximum(jnp.dot(h2, jnp.asarray(pk["wf"]), precision=_HI) + pk["bf"], 0.0)
    y = jnp.dot(h3, jnp.asarray(pk["wh"]), precision=_HI) + pk["bh"]
    return y[:, :n_act], y[:, n_act:n_act + 1]


if __name__ == "__main__":
    B = 2
    action_space = (3, 4)                      # sum = 7

    key = jax.random.PRNGKey(0)
    k_x, k_p = jax.random.split(key)
    states = jax.random.normal(k_x, (B, H, W, C_IN), dtype=jnp.float32)

    raw, n_act = make_params(k_p, action_space)
    packed_f32 = pack_params(raw, n_act)
    packed = cast_for_kernel(packed_f32)

    fwd = jax.jit(functools.partial(actor_critic_forward, n_act=n_act))
    distris, value = fwd(states, packed)
    jax.block_until_ready((distris, value))

    assert distris.shape == (B, n_act), distris.shape
    assert value.shape == (B, 1), value.shape

    # 1) Tight check of the block-Toeplitz packing itself (f32, plain JAX).
    ref_d, ref_v = _reference_forward(states, raw, n_act)
    pk_d, pk_v = _fused_reference_f32(states, packed_f32, n_act)
    assert jnp.allclose(pk_d, ref_d, rtol=1e-3, atol=1e-3)
    assert jnp.allclose(pk_v, ref_v, rtol=1e-3, atol=1e-3)

    # 2) Loose check of the Pallas kernel output (bf16 MXU feed).
    assert jnp.allclose(distris, ref_d, rtol=0.1, atol=0.1)
    assert jnp.allclose(value, ref_v, rtol=0.1, atol=0.1)

    print("KERNEL_OK")
</pallas_src>

<mosaic_0001>
module attributes {stable_mosaic.version = 11 : i64} {
  func.func @_fused_forward_kernel(%arg0: i32, %arg1: memref<16x2304xbf16, #tpu.memory_space<vmem>>, %arg2: memref<2304x512xbf16, #tpu.memory_space<vmem>>, %arg3: memref<1x512xf32, #tpu.memory_space<vmem>>, %arg4: memref<512x640xbf16, #tpu.memory_space<vmem>>, %arg5: memref<1x640xf32, #tpu.memory_space<vmem>>, %arg6: memref<640x512xbf16, #tpu.memory_space<vmem>>, %arg7: memref<1x512xf32, #tpu.memory_space<vmem>>, %arg8: memref<512x128xbf16, #tpu.memory_space<vmem>>, %arg9: memref<1x128xf32, #tpu.memory_space<vmem>>, %arg10: memref<16x128xf32, #tpu.memory_space<vmem>>) attributes {dimension_semantics = [#tpu.dimension_semantics<parallel>], iteration_bounds = array<i64: 1>, scalar_prefetch = 0 : i64, scratch_operands = 0 : i64, tpu.core_type = #tpu.core_type<tc>, window_params = [{transform_indices = @transform_0, window_bounds = array<i64: 16, 2304>}, {pipeline_mode = #tpu.pipeline_mode<synchronous>, transform_indices = @transform_1, window_bounds = array<i64: 2304, 512>}, {pipeline_mode = #tpu.pipeline_mode<synchronous>, transform_indices = @transform_2, window_bounds = array<i64: 1, 512>}, {pipeline_mode = #tpu.pipeline_mode<synchronous>, transform_indices = @transform_3, window_bounds = array<i64: 512, 640>}, {pipeline_mode = #tpu.pipeline_mode<synchronous>, transform_indices = @transform_4, window_bounds = array<i64: 1, 640>}, {pipeline_mode = #tpu.pipeline_mode<synchronous>, transform_indices = @transform_5, window_bounds = array<i64: 640, 512>}, {pipeline_mode = #tpu.pipeline_mode<synchronous>, transform_indices = @transform_6, window_bounds = array<i64: 1, 512>}, {pipeline_mode = #tpu.pipeline_mode<synchronous>, transform_indices = @transform_7, window_bounds = array<i64: 512, 128>}, {pipeline_mode = #tpu.pipeline_mode<synchronous>, transform_indices = @transform_8, window_bounds = array<i64: 1, 128>}, {transform_indices = @transform_9, window_bounds = array<i64: 16, 128>}]} {
    %c0 = arith.constant 0 : index
    %c0_0 = arith.constant 0 : index
    %0 = vector.load %arg1[%c0, %c0_0] : memref<16x2304xbf16, #tpu.memory_space<vmem>>, vector<16x2304xbf16>
    %c0_1 = arith.constant 0 : index
    %c0_2 = arith.constant 0 : index
    %1 = vector.load %arg2[%c0_1, %c0_2] : memref<2304x512xbf16, #tpu.memory_space<vmem>>, vector<2304x512xbf16>
    %cst = arith.constant dense<0.000000e+00> : vector<16x512xf32>
    %2 = tpu.matmul %0, %1, %cst {dimension_numbers = #tpu.dot_dimension_numbers<[1], [0], [0], [1], [0, 0, 1, 1], [], []>} : vector<16x2304xbf16>, vector<2304x512xbf16>, vector<16x512xf32> -> vector<16x512xf32>
    %c0_3 = arith.constant 0 : index
    %c0_4 = arith.constant 0 : index
    %3 = vector.load %arg3[%c0_3, %c0_4] : memref<1x512xf32, #tpu.memory_space<vmem>>, vector<1x512xf32>
    %4 = vector.broadcast %3 : vector<1x512xf32> to vector<16x512xf32>
    %5 = arith.addf %2, %4 : vector<16x512xf32>
    %cst_5 = arith.constant 0.000000e+00 : f32
    %6 = vector.broadcast %cst_5 : f32 to vector<16x512xf32>
    %7 = arith.maximumf %5, %6 : vector<16x512xf32>
    %8 = arith.truncf %7 : vector<16x512xf32> to vector<16x512xbf16>
    %c0_6 = arith.constant 0 : index
    %c0_7 = arith.constant 0 : index
    %9 = vector.load %arg4[%c0_6, %c0_7] : memref<512x640xbf16, #tpu.memory_space<vmem>>, vector<512x640xbf16>
    %cst_8 = arith.constant dense<0.000000e+00> : vector<16x640xf32>
    %10 = tpu.matmul %8, %9, %cst_8 {dimension_numbers = #tpu.dot_dimension_numbers<[1], [0], [0], [1], [0, 0, 1, 1], [], []>} : vector<16x512xbf16>, vector<512x640xbf16>, vector<16x640xf32> -> vector<16x640xf32>
    %c0_9 = arith.constant 0 : index
    %c0_10 = arith.constant 0 : index
    %11 = vector.load %arg5[%c0_9, %c0_10] : memref<1x640xf32, #tpu.memory_space<vmem>>, vector<1x640xf32>
    %12 = vector.broadcast %11 : vector<1x640xf32> to vector<16x640xf32>
    %13 = arith.addf %10, %12 : vector<16x640xf32>
    %cst_11 = arith.constant 0.000000e+00 : f32
    %14 = vector.broadcast %cst_11 : f32 to vector<16x640xf32>
    %15 = arith.maximumf %13, %14 : vector<16x640xf32>
    %16 = arith.truncf %15 : vector<16x640xf32> to vector<16x640xbf16>
    %c0_12 = arith.constant 0 : index
    %c0_13 = arith.constant 0 : index
    %17 = vector.load %arg6[%c0_12, %c0_13] : memref<640x512xbf16, #tpu.memory_space<vmem>>, vector<640x512xbf16>
    %cst_14 = arith.constant dense<0.000000e+00> : vector<16x512xf32>
    %18 = tpu.matmul %16, %17, %cst_14 {dimension_numbers = #tpu.dot_dimension_numbers<[1], [0], [0], [1], [0, 0, 1, 1], [], []>} : vector<16x640xbf16>, vector<640x512xbf16>, vector<16x512xf32> -> vector<16x512xf32>
    %c0_15 = arith.constant 0 : index
    %c0_16 = arith.constant 0 : index
    %19 = vector.load %arg7[%c0_15, %c0_16] : memref<1x512xf32, #tpu.memory_space<vmem>>, vector<1x512xf32>
    %20 = vector.broadcast %19 : vector<1x512xf32> to vector<16x512xf32>
    %21 = arith.addf %18, %20 : vector<16x512xf32>
    %cst_17 = arith.constant 0.000000e+00 : f32
    %22 = vector.broadcast %cst_17 : f32 to vector<16x512xf32>
    %23 = arith.maximumf %21, %22 : vector<16x512xf32>
    %24 = arith.truncf %23 : vector<16x512xf32> to vector<16x512xbf16>
    %c0_18 = arith.constant 0 : index
    %c0_19 = arith.constant 0 : index
    %25 = vector.load %arg8[%c0_18, %c0_19] : memref<512x128xbf16, #tpu.memory_space<vmem>>, vector<512x128xbf16>
    %cst_20 = arith.constant dense<0.000000e+00> : vector<16x128xf32>
    %26 = tpu.matmul %24, %25, %cst_20 {dimension_numbers = #tpu.dot_dimension_numbers<[1], [0], [0], [1], [0, 0, 1, 1], [], []>} : vector<16x512xbf16>, vector<512x128xbf16>, vector<16x128xf32> -> vector<16x128xf32>
    %c0_21 = arith.constant 0 : index
    %c0_22 = arith.constant 0 : index
    %27 = vector.load %arg9[%c0_21, %c0_22] : memref<1x128xf32, #tpu.memory_space<vmem>>, vector<1x128xf32>
    %28 = vector.broadcast %27 : vector<1x128xf32> to vector<16x128xf32>
    %29 = arith.addf %26, %28 : vector<16x128xf32>
    %c0_23 = arith.constant 0 : index
    %c0_24 = arith.constant 0 : index
    %30 = vector.load %arg10[%c0_23, %c0_24] : memref<16x128xf32, #tpu.memory_space<vmem>>, vector<16x128xf32>
    tpu.vector_store %arg10[%c0_23, %c0_24], %29 {strides = array<i32>} : memref<16x128xf32, #tpu.memory_space<vmem>>, vector<16x128xf32>,
    return
  }
  func.func @transform_0(%arg0: i32) -> (i32, i32) {
    %c0_i32 = arith.constant 0 : i32
    %c0_i32_0 = arith.constant 0 : i32
    return %arg0, %c0_i32 : i32, i32
  }
  func.func @transform_1(%arg0: i32) -> (i32, i32) {
    %c0_i32 = arith.constant 0 : i32
    %c0_i32_0 = arith.constant 0 : i32
    %c0_i32_1 = arith.constant 0 : i32
    return %c0_i32, %c0_i32_0 : i32, i32
  }
  func.func @transform_2(%arg0: i32) -> (i32, i32) {
    %c0_i32 = arith.constant 0 : i32
    %c0_i32_0 = arith.constant 0 : i32
    %c0_i32_1 = arith.constant 0 : i32
    return %c0_i32, %c0_i32_0 : i32, i32
  }
  func.func @transform_3(%arg0: i32) -> (i32, i32) {
    %c0_i32 = arith.constant 0 : i32
    %c0_i32_0 = arith.constant 0 : i32
    %c0_i32_1 = arith.constant 0 : i32
    return %c0_i32, %c0_i32_0 : i32, i32
  }
  func.func @transform_4(%arg0: i32) -> (i32, i32) {
    %c0_i32 = arith.constant 0 : i32
    %c0_i32_0 = arith.constant 0 : i32
    %c0_i32_1 = arith.constant 0 : i32
    return %c0_i32, %c0_i32_0 : i32, i32
  }
  func.func @transform_5(%arg0: i32) -> (i32, i32) {
    %c0_i32 = arith.constant 0 : i32
    %c0_i32_0 = arith.constant 0 : i32
    %c0_i32_1 = arith.constant 0 : i32
    return %c0_i32, %c0_i32_0 : i32, i32
  }
  func.func @transform_6(%arg0: i32) -> (i32, i32) {
    %c0_i32 = arith.constant 0 : i32
    %c0_i32_0 = arith.constant 0 : i32
    %c0_i32_1 = arith.constant 0 : i32
    return %c0_i32, %c0_i32_0 : i32, i32
  }
  func.func @transform_7(%arg0: i32) -> (i32, i32) {
    %c0_i32 = arith.constant 0 : i32
    %c0_i32_0 = arith.constant 0 : i32
    %c0_i32_1 = arith.constant 0 : i32
    return %c0_i32, %c0_i32_0 : i32, i32
  }
  func.func @transform_8(%arg0: i32) -> (i32, i32) {
    %c0_i32 = arith.constant 0 : i32
    %c0_i32_0 = arith.constant 0 : i32
    %c0_i32_1 = arith.constant 0 : i32
    return %c0_i32, %c0_i32_0 : i32, i32
  }
  func.func @transform_9(%arg0: i32) -> (i32, i32) {
    %c0_i32 = arith.constant 0 : i32
    %c0_i32_0 = arith.constant 0 : i32
    return %arg0, %c0_i32 : i32, i32
  }
}

</mosaic_0001>

<llo_original>
// kernel: actor_critic_forward.1
$region0: #{actor_critic_forward.1}
  #allocation0 [shape = 'u32[]', space=smem, size = 0x4, offset = 0x4, fixed_abs, tag = 'smem constant byte address 0x4 - core index']
  #allocation1 [shape = 'u32[72,128]{1,0:T(1,128)}', space=vmem, size = 0x9000, scoped, tag = 'internal scratch']
  %s0 = inlined_call_operand.vmem [shape: bf16[16,2304], index: 0, kind: input, shape index: {}]
  %s1 = inlined_call_operand.hbm [shape: bf16[2304,512], index: 1, kind: input, shape index: {}]
  %s2 = inlined_call_operand.hbm [shape: f32[1,512], index: 2, kind: input, shape index: {}]
  %s3 = inlined_call_operand.hbm [shape: bf16[512,640], index: 3, kind: input, shape index: {}]
  %s4 = inlined_call_operand.hbm [shape: f32[1,640], index: 4, kind: input, shape index: {}]
  %s5 = inlined_call_operand.hbm [shape: bf16[640,512], index: 5, kind: input, shape index: {}]
  %s6 = inlined_call_operand.hbm [shape: f32[1,512], index: 6, kind: input, shape index: {}]
  %s7 = inlined_call_operand.hbm [shape: bf16[512,128], index: 7, kind: input, shape index: {}]
  %s8 = inlined_call_operand.hbm [shape: f32[1,128], index: 8, kind: input, shape index: {}]
  %s9 = inlined_call_operand.vmem [shape: f32[16,128], index: 9, kind: output, shape index: {}]
  %s10 = sld [smem:[#allocation0]]
  $region78: #{actor_critic_forward.1} parent=0
    _
  %s12 = ssub.s32 1, %s10
  %s13 = scalar_select 0, %s12, %s10
  $region1: #{actor_critic_forward.1} parent=0
    #allocation2 [shape = 'u8[2359296]{0}', space=vmem, size = 0x240000, scoped, tag = 'input window, operand 1, single buffered']
    #allocation3 [shape = 's32[1]{0}', space=sflag, size = 0x4, scoped, tag = 'scoped memory for actor_critic_forward.1']
    #allocation4 [shape = 'u8[2048]{0}', space=vmem, size = 0x800, scoped, tag = 'input window, operand 2, single buffered']
    #allocation5 [shape = 's32[1]{0}', space=sflag, size = 0x4, scoped, tag = 'scoped memory for actor_critic_forward.1']
    #allocation6 [shape = 'u8[655360]{0}', space=vmem, size = 0xa0000, scoped, tag = 'input window, operand 3, single buffered']
    #allocation7 [shape = 'u8[2560]{0}', space=vmem, size = 0xc00, scoped, tag = 'input window, operand 4, single buffered']
    #allocation8 [shape = 's32[1]{0}', space=sflag, size = 0x4, scoped, tag = 'scoped memory for actor_critic_forward.1']
    #allocation9 [shape = 'u8[655360]{0}', space=vmem, size = 0xa0000, scoped, tag = 'input window, operand 5, single buffered']
    #allocation10 [shape = 'u8[2048]{0}', space=vmem, size = 0x800, scoped, tag = 'input window, operand 6, single buffered']
    #allocation11 [shape = 's32[1]{0}', space=sflag, size = 0x4, scoped, tag = 'scoped memory for actor_critic_forward.1']
    #allocation12 [shape = 'u8[131072]{0}', space=vmem, size = 0x20000, scoped, tag = 'input window, operand 7, single buffered']
    #allocation13 [shape = 'u8[512]{0}', space=vmem, size = 0x400, scoped, tag = 'input window, operand 8, single buffered']
    #allocation14 [shape = 's32[1]{0}', space=sflag, size = 0x4, scoped, tag = 'scoped memory for actor_critic_forward.1']
    %14 = vsyncpa [#allocation3], 0
    %15 = vsyncpa [#allocation5], 0
    %16 = vsyncpa [#allocation8], 0
    %17 = vsyncpa [#allocation11], 0
    %18 = vsyncpa [#allocation14], 0
    // Predicated region
    $region2: #{actor_critic_forward.1} parent=1 // pred_check
      _
    $region3: #{actor_critic_forward.1} parent=1 // pred_check_branch
      %20 = sbr.rel (0) target = $region5
    $region4: #{actor_critic_forward.1} parent=1 // pred_region
      _
    $region5: #{actor_critic_forward.1} parent=1 // pred_fallthru
      _
    // Predicated region
    $region6: #{actor_critic_forward.1} parent=1 // pred_check
      _
    $region7: #{actor_critic_forward.1} parent=1 // pred_check_branch
      %22 = sbr.rel (0) target = $region9
    $region8: #{actor_critic_forward.1} parent=1 // pred_region
      %24 = vsyncadd [#allocation3], 0
      %s25 = sshll.u32 %s1, 4
      %s26 = int_to_ptr.hbm [resolvable:$true] %s25
      %s27 = sshll.u32 [#allocation2], 4
      %s28 = int_to_ptr.vmem [resolvable:$true] %s27
      %33 = dma.hbm_to_vmem [thread:$0]  %s26, 73728, %s28, [#allocation3], 256, 256, 16
    $region9: #{actor_critic_forward.1} parent=1 // pred_fallthru
      _
    // Predicated region
    $region10: #{actor_critic_forward.1} parent=1 // pred_check
      _
    $region11: #{actor_critic_forward.1} parent=1 // pred_check_branch
      %35 = sbr.rel (0) target = $region13
    $region12: #{actor_critic_forward.1} parent=1 // pred_region
      %37 = vsyncadd [#allocation5], 0
      %s39 = sshll.u32 %s2, 4
      %s40 = int_to_ptr.hbm [resolvable:$true] %s39
      %s41 = sshll.u32 [#allocation4], 4
      %s42 = int_to_ptr.vmem [resolvable:$true] %s41
      %44 = dma.hbm_to_vmem [thread:$0]  %s40, 64, %s42, [#allocation5]
    $region13: #{actor_critic_forward.1} parent=1 // pred_fallthru
      _
    // Predicated region
    $region14: #{actor_critic_forward.1} parent=1 // pred_check
      _
    $region15: #{actor_critic_forward.1} parent=1 // pred_check_branch
      %46 = sbr.rel (0) target = $region17
    $region16: #{actor_critic_forward.1} parent=1 // pred_region
      %48 = vsyncadd [#allocation5], 0
      %s49 = sshll.u32 %s3, 4
      %s50 = int_to_ptr.hbm [resolvable:$true] %s49
      %s51 = sshll.u32 [#allocation6], 4
      %s52 = int_to_ptr.vmem [resolvable:$true] %s51
      %57 = dma.hbm_to_vmem [thread:$0]  %s50, 20480, %s52, [#allocation5], 320, 320, 20
    $region17: #{actor_critic_forward.1} parent=1 // pred_fallthru
      _
    // Predicated region
    $region18: #{actor_critic_forward.1} parent=1 // pred_check
      _
    $region19: #{actor_critic_forward.1} parent=1 // pred_check_branch
      %59 = sbr.rel (0) target = $region21
    $region20: #{actor_critic_forward.1} parent=1 // pred_region
      %61 = vsyncadd [#allocation8], 0
      %s63 = sshll.u32 %s4, 4
      %s64 = int_to_ptr.hbm [resolvable:$true] %s63
      %s65 = sshll.u32 [#allocation7], 4
      %s66 = int_to_ptr.vmem [resolvable:$true] %s65
      %68 = dma.hbm_to_vmem [thread:$0]  %s64, 80, %s66, [#allocation8]
    $region21: #{actor_critic_forward.1} parent=1 // pred_fallthru
      _
    // Predicated region
    $region22: #{actor_critic_forward.1} parent=1 // pred_check
      _
    $region23: #{actor_critic_forward.1} parent=1 // pred_check_branch
      %70 = sbr.rel (0) target = $region25
    $region24: #{actor_critic_forward.1} parent=1 // pred_region
      %72 = vsyncadd [#allocation8], 0
      %s73 = sshll.u32 %s5, 4
      %s74 = int_to_ptr.hbm [resolvable:$true] %s73
      %s75 = sshll.u32 [#allocation9], 4
      %s76 = int_to_ptr.vmem [resolvable:$true] %s75
      %81 = dma.hbm_to_vmem [thread:$0]  %s74, 20480, %s76, [#allocation8], 256, 256, 16
    $region25: #{actor_critic_forward.1} parent=1 // pred_fallthru
      _
    // Predicated region
    $region26: #{actor_critic_forward.1} parent=1 // pred_check
      _
    $region27: #{actor_critic_forward.1} parent=1 // pred_check_branch
      %83 = sbr.rel (0) target = $region29
    $region28: #{actor_critic_forward.1} parent=1 // pred_region
      %85 = vsyncadd [#allocation11], 0
      %s87 = sshll.u32 %s6, 4
      %s88 = int_to_ptr.hbm [resolvable:$true] %s87
      %s89 = sshll.u32 [#allocation10], 4
      %s90 = int_to_ptr.vmem [resolvable:$true] %s89
      %92 = dma.hbm_to_vmem [thread:$0]  %s88, 64, %s90, [#allocation11]
    $region29: #{actor_critic_forward.1} parent=1 // pred_fallthru
      _
    // Predicated region
    $region30: #{actor_critic_forward.1} parent=1 // pred_check
      _
    $region31: #{actor_critic_forward.1} parent=1 // pred_check_branch
      %94 = sbr.rel (0) target = $region33
    $region32: #{actor_critic_forward.1} parent=1 // pred_region
      %96 = vsyncadd [#allocation11], 0
      %s97 = sshll.u32 %s7, 4
      %s98 = int_to_ptr.hbm [resolvable:$true] %s97
      %s99 = sshll.u32 [#allocation12], 4
      %s100 = int_to_ptr.vmem [resolvable:$true] %s99
      %105 = dma.hbm_to_vmem [thread:$0]  %s98, 4096, %s100, [#allocation11], 64, 64, 4
    $region33: #{actor_critic_forward.1} parent=1 // pred_fallthru
      _
    // Predicated region
    $region34: #{actor_critic_forward.1} parent=1 // pred_check
      _
    $region35: #{actor_critic_forward.1} parent=1 // pred_check_branch
      %107 = sbr.rel (0) target = $region37
    $region36: #{actor_critic_forward.1} parent=1 // pred_region
      %109 = vsyncadd [#allocation14], 0
      %s111 = sshll.u32 %s8, 4
      %s112 = int_to_ptr.hbm [resolvable:$true] %s111
      %s113 = sshll.u32 [#allocation13], 4
      %s114 = int_to_ptr.vmem [resolvable:$true] %s113
      %116 = dma.hbm_to_vmem [thread:$0]  %s112, 16, %s114, [#allocation14]
    $region37: #{actor_critic_forward.1} parent=1 // pred_fallthru
      _
    // Predicated region
    $region38: #{actor_critic_forward.1} parent=1 // pred_check
      _
    $region39: #{actor_critic_forward.1} parent=1 // pred_check_branch
      %118 = sbr.rel (0) target = $region41
    $region40: #{actor_critic_forward.1} parent=1 // pred_region
      %120 = dma.done [#allocation3], 73728
    $region41: #{actor_critic_forward.1} parent=1 // pred_fallthru
      _
    // Predicated region
    $region42: #{actor_critic_forward.1} parent=1 // pred_check
      _
    $region43: #{actor_critic_forward.1} parent=1 // pred_check_branch
      %122 = sbr.rel (0) target = $region45
    $region44: #{actor_critic_forward.1} parent=1 // pred_region
      %124 = dma.done [#allocation5], 64
    $region45: #{actor_critic_forward.1} parent=1 // pred_fallthru
      _
    // Predicated region
    $region46: #{actor_critic_forward.1} parent=1 // pred_check
      _
    $region47: #{actor_critic_forward.1} parent=1 // pred_check_branch
      %126 = sbr.rel (0) target = $region49
    $region48: #{actor_critic_forward.1} parent=1 // pred_region
      %128 = dma.done [#allocation5], 20480
    $region49: #{actor_critic_forward.1} parent=1 // pred_fallthru
      _
    // Predicated region
    $region50: #{actor_critic_forward.1} parent=1 // pred_check
      _
    $region51: #{actor_critic_forward.1} parent=1 // pred_check_branch
      %130 = sbr.rel (0) target = $region53
    $region52: #{actor_critic_forward.1} parent=1 // pred_region
      %132 = dma.done [#allocation8], 80
    $region53: #{actor_critic_forward.1} parent=1 // pred_fallthru
      _
    // Predicated region
    $region54: #{actor_critic_forward.1} parent=1 // pred_check
      _
    $region55: #{actor_critic_forward.1} parent=1 // pred_check_branch
      %134 = sbr.rel (0) target = $region57
    $region56: #{actor_critic_forward.1} parent=1 // pred_region
      %136 = dma.done [#allocation8], 20480
    $region57: #{actor_critic_forward.1} parent=1 // pred_fallthru
      _
    // Predicated region
    $region58: #{actor_critic_forward.1} parent=1 // pred_check
      _
    $region59: #{actor_critic_forward.1} parent=1 // pred_check_branch
      %138 = sbr.rel (0) target = $region61
    $region60: #{actor_critic_forward.1} parent=1 // pred_region
      %140 = dma.done [#allocation11], 64
    $region61: #{actor_critic_forward.1} parent=1 // pred_fallthru
      _
    // Predicated region
    $region62: #{actor_critic_forward.1} parent=1 // pred_check
      _
    $region63: #{actor_critic_forward.1} parent=1 // pred_check_branch
      %142 = sbr.rel (0) target = $region65
    $region64: #{actor_critic_forward.1} parent=1 // pred_region
      %144 = dma.done [#allocation11], 4096
    $region65: #{actor_critic_forward.1} parent=1 // pred_fallthru
      _
    // Predicated region
    $region66: #{actor_critic_forward.1} parent=1 // pred_check
      _
    $region67: #{actor_critic_forward.1} parent=1 // pred_check_branch
      %146 = sbr.rel (0) target = $region69
    $region68: #{actor_critic_forward.1} parent=1 // pred_region
      %148 = dma.done [#allocation14], 16
    $region69: #{actor_critic_forward.1} parent=1 // pred_fallthru
      _
    %v149 = vld [vmem:[%s0] sm:$0xff]
    %v150 = vld [vmem:[%s0 + $0x8] sm:$0xff]
    %v151 = vld [vmem:[%s0 + $0x10] sm:$0xff]
    %v152 = vld [vmem:[%s0 + $0x18] sm:$0xff]
    %v153 = vld [vmem:[%s0 + $0x20] sm:$0xff]
    %v154 = vld [vmem:[%s0 + $0x28] sm:$0xff]
    %v155 = vld [vmem:[%s0 + $0x30] sm:$0xff]
    %v156 = vld [vmem:[%s0 + $0x38] sm:$0xff]
    %v157 = vld [vmem:[%s0 + $0x40] sm:$0xff]
    %v158 = vld [vmem:[%s0 + $0x48] sm:$0xff]
    %v159 = vld [vmem:[%s0 + $0x50] sm:$0xff]
    %v160 = vld [vmem:[%s0 + $0x58] sm:$0xff]
    %v161 = vld [vmem:[%s0 + $0x60] sm:$0xff]
    %v162 = vld [vmem:[%s0 + $0x68] sm:$0xff]
    %v163 = vld [vmem:[%s0 + $0x70] sm:$0xff]
    %v164 = vld [vmem:[%s0 + $0x78] sm:$0xff]
    %v165 = vld [vmem:[%s0 + $0x80] sm:$0xff]
    %v166 = vld [vmem:[%s0 + $0x88] sm:$0xff]
    %v167 = vld [vmem:[#allocation2] sm:$0xff]
    %v168 = vld [vmem:[#allocation2 + $0x8] sm:$0xff]
    %v169 = vld [vmem:[#allocation2 + $0x10] sm:$0xff]
    %v170 = vld [vmem:[#allocation2 + $0x18] sm:$0xff]
    %v171 = vld [vmem:[#allocation2 + $0x20] sm:$0xff]
    %v172 = vld [vmem:[#allocation2 + $0x28] sm:$0xff]
    %v173 = vld [vmem:[#allocation2 + $0x30] sm:$0xff]
    %v174 = vld [vmem:[#allocation2 + $0x38] sm:$0xff]
    %v175 = vld [vmem:[#allocation2 + $0x40] sm:$0xff]
    %v176 = vld [vmem:[#allocation2 + $0x48] sm:$0xff]
    %v177 = vld [vmem:[#allocation2 + $0x50] sm:$0xff]
    %v178 = vld [vmem:[#allocation2 + $0x58] sm:$0xff]
    %v179 = vld [vmem:[#allocation2 + $0x60] sm:$0xff]
    %v180 = vld [vmem:[#allocation2 + $0x68] sm:$0xff]
    %v181 = vld [vmem:[#allocation2 + $0x70] sm:$0xff]
    %v182 = vld [vmem:[#allocation2 + $0x78] sm:$0xff]
    %v183 = vld [vmem:[#allocation2 + $0x80] sm:$0xff]
    %v184 = vld [vmem:[#allocation2 + $0x88] sm:$0xff]
    %v185 = vld [vmem:[#allocation2 + $0x90] sm:$0xff]
    %v186 = vld [vmem:[#allocation2 + $0x98] sm:$0xff]
    %v187 = vld [vmem:[#allocation2 + $0xa0] sm:$0xff]
    %v188 = vld [vmem:[#allocation2 + $0xa8] sm:$0xff]
    %v189 = vld [vmem:[#allocation2 + $0xb0] sm:$0xff]
    %v190 = vld [vmem:[#allocation2 + $0xb8] sm:$0xff]
    %v191 = vld [vmem:[#allocation2 + $0xc0] sm:$0xff]
    %v192 = vld [vmem:[#allocation2 + $0xc8] sm:$0xff]
    %v193 = vld [vmem:[#allocation2 + $0xd0] sm:$0xff]
    %v194 = vld [vmem:[#allocation2 + $0xd8] sm:$0xff]
    %v195 = vld [vmem:[#allocation2 + $0xe0] sm:$0xff]
    %v196 = vld [vmem:[#allocation2 + $0xe8] sm:$0xff]
    %v197 = vld [vmem:[#allocation2 + $0xf0] sm:$0xff]
    %v198 = vld [vmem:[#allocation2 + $0xf8] sm:$0xff]
    %v199 = vld [vmem:[#allocation2 + $0x100] sm:$0xff]
    %v200 = vld [vmem:[#allocation2 + $0x108] sm:$0xff]
    %v201 = vld [vmem:[#allocation2 + $0x110] sm:$0xff]
    %v202 = vld [vmem:[#allocation2 + $0x118] sm:$0xff]
    %v203 = vld [vmem:[#allocation2 + $0x120] sm:$0xff]
    %v204 = vld [vmem:[#allocation2 + $0x128] sm:$0xff]
    %v205 = vld [vmem:[#allocation2 + $0x130] sm:$0xff]
    %v206 = vld [vmem:[#allocation2 + $0x138] sm:$0xff]
    %v207 = vld [vmem:[#allocation2 + $0x140] sm:$0xff]
    %v208 = vld [vmem:[#allocation2 + $0x148] sm:$0xff]
    %v209 = vld [vmem:[#allocation2 + $0x150] sm:$0xff]
    %v210 = vld [vmem:[#allocation2 + $0x158] sm:$0xff]
    %v211 = vld [vmem:[#allocation2 + $0x160] sm:$0xff]
    %v212 = vld [vmem:[#allocation2 + $0x168] sm:$0xff]
    %v213 = vld [vmem:[#allocation2 + $0x170] sm:$0xff]
    %v214 = vld [vmem:[#allocation2 + $0x178] sm:$0xff]
    %v215 = vld [vmem:[#allocation2 + $0x180] sm:$0xff]
    %v216 = vld [vmem:[#allocation2 + $0x188] sm:$0xff]
    %v217 = vld [vmem:[#allocation2 + $0x190] sm:$0xff]
    %v218 = vld [vmem:[#allocation2 + $0x198] sm:$0xff]
    %v219 = vld [vmem:[#allocation2 + $0x1a0] sm:$0xff]
    %v220 = vld [vmem:[#allocation2 + $0x1a8] sm:$0xff]
    %v221 = vld [vmem:[#allocation2 + $0x1b0] sm:$0xff]
    %v222 = vld [vmem:[#allocation2 + $0x1b8] sm:$0xff]
    %v223 = vld [vmem:[#allocation2 + $0x1c0] sm:$0xff]
    %v224 = vld [vmem:[#allocation2 + $0x1c8] sm:$0xff]
    %v225 = vld [vmem:[#allocation2 + $0x1d0] sm:$0xff]
    %v226 = vld [vmem:[#allocation2 + $0x1d8] sm:$0xff]
    %v227 = vld [vmem:[#allocation2 + $0x1e0] sm:$0xff]
    %v228 = vld [vmem:[#allocation2 + $0x1e8] sm:$0xff]
    %v229 = vld [vmem:[#allocation2 + $0x1f0] sm:$0xff]
    %v230 = vld [vmem:[#allocation2 + $0x1f8] sm:$0xff]
    %v231 = vld [vmem:[#allocation2 + $0x200] sm:$0xff]
    %v232 = vld [vmem:[#allocation2 + $0x208] sm:$0xff]
    %v233 = vld [vmem:[#allocation2 + $0x210] sm:$0xff]
    %v234 = vld [vmem:[#allocation2 + $0x218] sm:$0xff]
    %v235 = vld [vmem:[#allocation2 + $0x220] sm:$0xff]
    %v236 = vld [vmem:[#allocation2 + $0x228] sm:$0xff]
    %v237 = vld [vmem:[#allocation2 + $0x230] sm:$0xff]
    %v238 = vld [vmem:[#allocation2 + $0x238] sm:$0xff]
    %v239 = vld [vmem:[#allocation2 + $0x240] sm:$0xff]
    %v240 = vld [vmem:[#allocation2 + $0x248] sm:$0xff]
    %v241 = vld [vmem:[#allocation2 + $0x250] sm:$0xff]
    %v242 = vld [vmem:[#allocation2 + $0x258] sm:$0xff]
    %v243 = vld [vmem:[#allocation2 + $0x260] sm:$0xff]
    %v244 = vld [vmem:[#allocation2 + $0x268] sm:$0xff]
    %v245 = vld [vmem:[#allocation2 + $0x270] sm:$0xff]
    %v246 = vld [vmem:[#allocation2 + $0x278] sm:$0xff]
    %v247 = vld [vmem:[#allocation2 + $0x280] sm:$0xff]
    %v248 = vld [vmem:[#allocation2 + $0x288] sm:$0xff]
    %v249 = vld [vmem:[#allocation2 + $0x290] sm:$0xff]
    %v250 = vld [vmem:[#allocation2 + $0x298] sm:$0xff]
    %v251 = vld [vmem:[#allocation2 + $0x2a0] sm:$0xff]
    %v252 = vld [vmem:[#allocation2 + $0x2a8] sm:$0xff]
    %v253 = vld [vmem:[#allocation2 + $0x2b0] sm:$0xff]
    %v254 = vld [vmem:[#allocation2 + $0x2b8] sm:$0xff]
    %v255 = vld [vmem:[#allocation2 + $0x2c0] sm:$0xff]
    %v256 = vld [vmem:[#allocation2 + $0x2c8] sm:$0xff]
    %v257 = vld [vmem:[#allocation2 + $0x2d0] sm:$0xff]
    %v258 = vld [vmem:[#allocation2 + $0x2d8] sm:$0xff]
    %v259 = vld [vmem:[#allocation2 + $0x2e0] sm:$0xff]
    %v260 = vld [vmem:[#allocation2 + $0x2e8] sm:$0xff]
    %v261 = vld [vmem:[#allocation2 + $0x2f0] sm:$0xff]
    %v262 = vld [vmem:[#allocation2 + $0x2f8] sm:$0xff]
    %v263 = vld [vmem:[#allocation2 + $0x300] sm:$0xff]
    %v264 = vld [vmem:[#allocation2 + $0x308] sm:$0xff]
    %v265 = vld [vmem:[#allocation2 + $0x310] sm:$0xff]
    %v266 = vld [vmem:[#allocation2 + $0x318] sm:$0xff]
    %v267 = vld [vmem:[#allocation2 + $0x320] sm:$0xff]
    %v268 = vld [vmem:[#allocation2 + $0x328] sm:$0xff]
    %v269 = vld [vmem:[#allocation2 + $0x330] sm:$0xff]
    %v270 = vld [vmem:[#allocation2 + $0x338] sm:$0xff]
    %v271 = vld [vmem:[#allocation2 + $0x340] sm:$0xff]
    %v272 = vld [vmem:[#allocation2 + $0x348] sm:$0xff]
    %v273 = vld [vmem:[#allocation2 + $0x350] sm:$0xff]
    %v274 = vld [vmem:[#allocation2 + $0x358] sm:$0xff]
    %v275 = vld [vmem:[#allocation2 + $0x360] sm:$0xff]
    %v276 = vld [vmem:[#allocation2 + $0x368] sm:$0xff]
    %v277 = vld [vmem:[#allocation2 + $0x370] sm:$0xff]
    %v278 = vld [vmem:[#allocation2 + $0x378] sm:$0xff]
    %v279 = vld [vmem:[#allocation2 + $0x380] sm:$0xff]
    %v280 = vld [vmem:[#allocation2 + $0x388] sm:$0xff]
    %v281 = vld [vmem:[#allocation2 + $0x390] sm:$0xff]
    %v282 = vld [vmem:[#allocation2 + $0x398] sm:$0xff]
    %v283 = vld [vmem:[#allocation2 + $0x3a0] sm:$0xff]
    %v284 = vld [vmem:[#allocation2 + $0x3a8] sm:$0xff]
    %v285 = vld [vmem:[#allocation2 + $0x3b0] sm:$0xff]
    %v286 = vld [vmem:[#allocation2 + $0x3b8] sm:$0xff]
    %v287 = vld [vmem:[#allocation2 + $0x3c0] sm:$0xff]
    %v288 = vld [vmem:[#allocation2 + $0x3c8] sm:$0xff]
    %v289 = vld [vmem:[#allocation2 + $0x3d0] sm:$0xff]
    %v290 = vld [vmem:[#allocation2 + $0x3d8] sm:$0xff]
    %v291 = vld [vmem:[#allocation2 + $0x3e0] sm:$0xff]
    %v292 = vld [vmem:[#allocation2 + $0x3e8] sm:$0xff]
    %v293 = vld [vmem:[#allocation2 + $0x3f0] sm:$0xff]
    %v294 = vld [vmem:[#allocation2 + $0x3f8] sm:$0xff]
    %v295 = vld [vmem:[#allocation2 + $0x400] sm:$0xff]
    %v296 = vld [vmem:[#allocation2 + $0x408] sm:$0xff]
    %v297 = vld [vmem:[#allocation2 + $0x410] sm:$0xff]
    %v298 = vld [vmem:[#allocation2 + $0x418] sm:$0xff]
    %v299 = vld [vmem:[#allocation2 + $0x420] sm:$0xff]
    %v300 = vld [vmem:[#allocation2 + $0x428] sm:$0xff]
    %v301 = vld [vmem:[#allocation2 + $0x430] sm:$0xff]
    %v302 = vld [vmem:[#allocation2 + $0x438] sm:$0xff]
    %v303 = vld [vmem:[#allocation2 + $0x440] sm:$0xff]
    %v304 = vld [vmem:[#allocation2 + $0x448] sm:$0xff]
    %v305 = vld [vmem:[#allocation2 + $0x450] sm:$0xff]
    %v306 = vld [vmem:[#allocation2 + $0x458] sm:$0xff]
    %v307 = vld [vmem:[#allocation2 + $0x460] sm:$0xff]
    %v308 = vld [vmem:[#allocation2 + $0x468] sm:$0xff]
    %v309 = vld [vmem:[#allocation2 + $0x470] sm:$0xff]
    %v310 = vld [vmem:[#allocation2 + $0x478] sm:$0xff]
    %v311 = vld [vmem:[#allocation2 + $0x480] sm:$0xff]
    %v312 = vld [vmem:[#allocation2 + $0x488] sm:$0xff]
    %v313 = vld [vmem:[#allocation2 + $0x490] sm:$0xff]
    %v314 = vld [vmem:[#allocation2 + $0x498] sm:$0xff]
    %v315 = vld [vmem:[#allocation2 + $0x4a0] sm:$0xff]
    %v316 = vld [vmem:[#allocation2 + $0x4a8] sm:$0xff]
    %v317 = vld [vmem:[#allocation2 + $0x4b0] sm:$0xff]
    %v318 = vld [vmem:[#allocation2 + $0x4b8] sm:$0xff]
    %v319 = vld [vmem:[#allocation2 + $0x4c0] sm:$0xff]
    %v320 = vld [vmem:[#allocation2 + $0x4c8] sm:$0xff]
    %v321 = vld [vmem:[#allocation2 + $0x4d0] sm:$0xff]
    %v322 = vld [vmem:[#allocation2 + $0x4d8] sm:$0xff]
    %v323 = vld [vmem:[#allocation2 + $0x4e0] sm:$0xff]
    %v324 = vld [vmem:[#allocation2 + $0x4e8] sm:$0xff]
    %v325 = vld [vmem:[#allocation2 + $0x4f0] sm:$0xff]
    %v326 = vld [vmem:[#allocation2 + $0x4f8] sm:$0xff]
    %v327 = vld [vmem:[#allocation2 + $0x500] sm:$0xff]
    %v328 = vld [vmem:[#allocation2 + $0x508] sm:$0xff]
    %v329 = vld [vmem:[#allocation2 + $0x510] sm:$0xff]
    %v330 = vld [vmem:[#allocation2 + $0x518] sm:$0xff]
    %v331 = vld [vmem:[#allocation2 + $0x520] sm:$0xff]
    %v332 = vld [vmem:[#allocation2 + $0x528] sm:$0xff]
    %v333 = vld [vmem:[#allocation2 + $0x530] sm:$0xff]
    %v334 = vld [vmem:[#allocation2 + $0x538] sm:$0xff]
    %v335 = vld [vmem:[#allocation2 + $0x540] sm:$0xff]
    %v336 = vld [vmem:[#allocation2 + $0x548] sm:$0xff]
    %v337 = vld [vmem:[#allocation2 + $0x550] sm:$0xff]
    %v338 = vld [vmem:[#allocation2 + $0x558] sm:$0xff]
    %v339 = vld [vmem:[#allocation2 + $0x560] sm:$0xff]
    %v340 = vld [vmem:[#allocation2 + $0x568] sm:$0xff]
    %v341 = vld [vmem:[#allocation2 + $0x570] sm:$0xff]
    %v342 = vld [vmem:[#allocation2 + $0x578] sm:$0xff]
    %v343 = vld [vmem:[#allocation2 + $0x580] sm:$0xff]
    %v344 = vld [vmem:[#allocation2 + $0x588] sm:$0xff]
    %v345 = vld [vmem:[#allocation2 + $0x590] sm:$0xff]
    %v346 = vld [vmem:[#allocation2 + $0x598] sm:$0xff]
    %v347 = vld [vmem:[#allocation2 + $0x5a0] sm:$0xff]
    %v348 = vld [vmem:[#allocation2 + $0x5a8] sm:$0xff]
    %v349 = vld [vmem:[#allocation2 + $0x5b0] sm:$0xff]
    %v350 = vld [vmem:[#allocation2 + $0x5b8] sm:$0xff]
    %v351 = vld [vmem:[#allocation2 + $0x5c0] sm:$0xff]
    %v352 = vld [vmem:[#allocation2 + $0x5c8] sm:$0xff]
    %v353 = vld [vmem:[#allocation2 + $0x5d0] sm:$0xff]
    %v354 = vld [vmem:[#allocation2 + $0x5d8] sm:$0xff]
    %v355 = vld [vmem:[#allocation2 + $0x5e0] sm:$0xff]
    %v356 = vld [vmem:[#allocation2 + $0x5e8] sm:$0xff]
    %v357 = vld [vmem:[#allocation2 + $0x5f0] sm:$0xff]
    %v358 = vld [vmem:[#allocation2 + $0x5f8] sm:$0xff]
    %v359 = vld [vmem:[#allocation2 + $0x600] sm:$0xff]
    %v360 = vld [vmem:[#allocation2 + $0x608] sm:$0xff]
    %v361 = vld [vmem:[#allocation2 + $0x610] sm:$0xff]
    %v362 = vld [vmem:[#allocation2 + $0x618] sm:$0xff]
    %v363 = vld [vmem:[#allocation2 + $0x620] sm:$0xff]
    %v364 = vld [vmem:[#allocation2 + $0x628] sm:$0xff]
    %v365 = vld [vmem:[#allocation2 + $0x630] sm:$0xff]
    %v366 = vld [vmem:[#allocation2 + $0x638] sm:$0xff]
    %v367 = vld [vmem:[#allocation2 + $0x640] sm:$0xff]
    %v368 = vld [vmem:[#allocation2 + $0x648] sm:$0xff]
    %v369 = vld [vmem:[#allocation2 + $0x650] sm:$0xff]
    %v370 = vld [vmem:[#allocation2 + $0x658] sm:$0xff]
    %v371 = vld [vmem:[#allocation2 + $0x660] sm:$0xff]
    %v372 = vld [vmem:[#allocation2 + $0x668] sm:$0xff]
    %v373 = vld [vmem:[#allocation2 + $0x670] sm:$0xff]
    %v374 = vld [vmem:[#allocation2 + $0x678] sm:$0xff]
    %v375 = vld [vmem:[#allocation2 + $0x680] sm:$0xff]
    %v376 = vld [vmem:[#allocation2 + $0x688] sm:$0xff]
    %v377 = vld [vmem:[#allocation2 + $0x690] sm:$0xff]
    %v378 = vld [vmem:[#allocation2 + $0x698] sm:$0xff]
    %v379 = vld [vmem:[#allocation2 + $0x6a0] sm:$0xff]
    %v380 = vld [vmem:[#allocation2 + $0x6a8] sm:$0xff]
    %v381 = vld [vmem:[#allocation2 + $0x6b0] sm:$0xff]
    %v382 = vld [vmem:[#allocation2 + $0x6b8] sm:$0xff]
    %v383 = vld [vmem:[#allocation2 + $0x6c0] sm:$0xff]
    %v384 = vld [vmem:[#allocation2 + $0x6c8] sm:$0xff]
    %v385 = vld [vmem:[#allocation2 + $0x6d0] sm:$0xff]
    %v386 = vld [vmem:[#allocation2 + $0x6d8] sm:$0xff]
    %v387 = vld [vmem:[#allocation2 + $0x6e0] sm:$0xff]
    %v388 = vld [vmem:[#allocation2 + $0x6e8] sm:$0xff]
    %v389 = vld [vmem:[#allocation2 + $0x6f0] sm:$0xff]
    %v390 = vld [vmem:[#allocation2 + $0x6f8] sm:$0xff]
    %v391 = vld [vmem:[#allocation2 + $0x700] sm:$0xff]
    %v392 = vld [vmem:[#allocation2 + $0x708] sm:$0xff]
    %v393 = vld [vmem:[#allocation2 + $0x710] sm:$0xff]
    %v394 = vld [vmem:[#allocation2 + $0x718] sm:$0xff]
    %v395 = vld [vmem:[#allocation2 + $0x720] sm:$0xff]
    %v396 = vld [vmem:[#allocation2 + $0x728] sm:$0xff]
    %v397 = vld [vmem:[#allocation2 + $0x730] sm:$0xff]
    %v398 = vld [vmem:[#allocation2 + $0x738] sm:$0xff]
    %v399 = vld [vmem:[#allocation2 + $0x740] sm:$0xff]
    %v400 = vld [vmem:[#allocation2 + $0x748] sm:$0xff]
    %v401 = vld [vmem:[#allocation2 + $0x750] sm:$0xff]
    %v402 = vld [vmem:[#allocation2 + $0x758] sm:$0xff]
    %v403 = vld [vmem:[#allocation2 + $0x760] sm:$0xff]
    %v404 = vld [vmem:[#allocation2 + $0x768] sm:$0xff]
    %v405 = vld [vmem:[#allocation2 + $0x770] sm:$0xff]
    %v406 = vld [vmem:[#allocation2 + $0x778] sm:$0xff]
    %v407 = vld [vmem:[#allocation2 + $0x780] sm:$0xff]
    %v408 = vld [vmem:[#allocation2 + $0x788] sm:$0xff]
    %v409 = vld [vmem:[#allocation2 + $0x790] sm:$0xff]
    %v410 = vld [vmem:[#allocation2 + $0x798] sm:$0xff]
    %v411 = vld [vmem:[#allocation2 + $0x7a0] sm:$0xff]
    %v412 = vld [vmem:[#allocation2 + $0x7a8] sm:$0xff]
    %v413 = vld [vmem:[#allocation2 + $0x7b0] sm:$0xff]
    %v414 = vld [vmem:[#allocation2 + $0x7b8] sm:$0xff]
    %v415 = vld [vmem:[#allocation2 + $0x7c0] sm:$0xff]
    %v416 = vld [vmem:[#allocation2 + $0x7c8] sm:$0xff]
    %v417 = vld [vmem:[#allocation2 + $0x7d0] sm:$0xff]
    %v418 = vld [vmem:[#allocation2 + $0x7d8] sm:$0xff]
    %v419 = vld [vmem:[#allocation2 + $0x7e0] sm:$0xff]
    %v420 = vld [vmem:[#allocation2 + $0x7e8] sm:$0xff]
    %v421 = vld [vmem:[#allocation2 + $0x7f0] sm:$0xff]
    %v422 = vld [vmem:[#allocation2 + $0x7f8] sm:$0xff]
    %v423 = vld [vmem:[#allocation2 + $0x800] sm:$0xff]
    %v424 = vld [vmem:[#allocation2 + $0x808] sm:$0xff]
    %v425 = vld [vmem:[#allocation2 + $0x810] sm:$0xff]
    %v426 = vld [vmem:[#allocation2 + $0x818] sm:$0xff]
    %v427 = vld [vmem:[#allocation2 + $0x820] sm:$0xff]
    %v428 = vld [vmem:[#allocation2 + $0x828] sm:$0xff]
    %v429 = vld [vmem:[#allocation2 + $0x830] sm:$0xff]
    %v430 = vld [vmem:[#allocation2 + $0x838] sm:$0xff]
    %v431 = vld [vmem:[#allocation2 + $0x840] sm:$0xff]
    %v432 = vld [vmem:[#allocation2 + $0x848] sm:$0xff]
    %v433 = vld [vmem:[#allocation2 + $0x850] sm:$0xff]
    %v434 = vld [vmem:[#allocation2 + $0x858] sm:$0xff]
    %v435 = vld [vmem:[#allocation2 + $0x860] sm:$0xff]
    %v436 = vld [vmem:[#allocation2 + $0x868] sm:$0xff]
    %v437 = vld [vmem:[#allocation2 + $0x870] sm:$0xff]
    %v438 = vld [vmem:[#allocation2 + $0x878] sm:$0xff]
    %v439 = vld [vmem:[#allocation2 + $0x880] sm:$0xff]
    %v440 = vld [vmem:[#allocation2 + $0x888] sm:$0xff]
    %v441 = vld [vmem:[#allocation2 + $0x890] sm:$0xff]
    %v442 = vld [vmem:[#allocation2 + $0x898] sm:$0xff]
    %v443 = vld [vmem:[#allocation2 + $0x8a0] sm:$0xff]
    %v444 = vld [vmem:[#allocation2 + $0x8a8] sm:$0xff]
    %v445 = vld [vmem:[#allocation2 + $0x8b0] sm:$0xff]
    %v446 = vld [vmem:[#allocation2 + $0x8b8] sm:$0xff]
    %v447 = vld [vmem:[#allocation2 + $0x8c0] sm:$0xff]
    %v448 = vld [vmem:[#allocation2 + $0x8c8] sm:$0xff]
    %v449 = vld [vmem:[#allocation2 + $0x8d0] sm:$0xff]
    %v450 = vld [vmem:[#allocation2 + $0x8d8] sm:$0xff]
    %v451 = vld [vmem:[#allocation2 + $0x8e0] sm:$0xff]
    %v452 = vld [vmem:[#allocation2 + $0x8e8] sm:$0xff]
    %v453 = vld [vmem:[#allocation2 + $0x8f0] sm:$0xff]
    %v454 = vld [vmem:[#allocation2 + $0x8f8] sm:$0xff]
    %v455 = vld [vmem:[#allocation2 + $0x900] sm:$0xff]
    %v456 = vld [vmem:[#allocation2 + $0x908] sm:$0xff]
    %v457 = vld [vmem:[#allocation2 + $0x910] sm:$0xff]
    %v458 = vld [vmem:[#allocation2 + $0x918] sm:$0xff]
    %v459 = vld [vmem:[#allocation2 + $0x920] sm:$0xff]
    %v460 = vld [vmem:[#allocation2 + $0x928] sm:$0xff]
    %v461 = vld [vmem:[#allocation2 + $0x930] sm:$0xff]
    %v462 = vld [vmem:[#allocation2 + $0x938] sm:$0xff]
    %v463 = vld [vmem:[#allocation2 + $0x940] sm:$0xff]
    %v464 = vld [vmem:[#allocation2 + $0x948] sm:$0xff]
    %v465 = vld [vmem:[#allocation2 + $0x950] sm:$0xff]
    %v466 = vld [vmem:[#allocation2 + $0x958] sm:$0xff]
    %v467 = vld [vmem:[#allocation2 + $0x960] sm:$0xff]
    %v468 = vld [vmem:[#allocation2 + $0x968] sm:$0xff]
    %v469 = vld [vmem:[#allocation2 + $0x970] sm:$0xff]
    %v470 = vld [vmem:[#allocation2 + $0x978] sm:$0xff]
    %v471 = vld [vmem:[#allocation2 + $0x980] sm:$0xff]
    %v472 = vld [vmem:[#allocation2 + $0x988] sm:$0xff]
    %v473 = vld [vmem:[#allocation2 + $0x990] sm:$0xff]
    %v474 = vld [vmem:[#allocation2 + $0x998] sm:$0xff]
    %v475 = vld [vmem:[#allocation2 + $0x9a0] sm:$0xff]
    %v476 = vld [vmem:[#allocation2 + $0x9a8] sm:$0xff]
    %v477 = vld [vmem:[#allocation2 + $0x9b0] sm:$0xff]
    %v478 = vld [vmem:[#allocation2 + $0x9b8] sm:$0xff]
    %v479 = vld [vmem:[#allocation2 + $0x9c0] sm:$0xff]
    %v480 = vld [vmem:[#allocation2 + $0x9c8] sm:$0xff]
    %v481 = vld [vmem:[#allocation2 + $0x9d0] sm:$0xff]
    %v482 = vld [vmem:[#allocation2 + $0x9d8] sm:$0xff]
    %v483 = vld [vmem:[#allocation2 + $0x9e0] sm:$0xff]
    %v484 = vld [vmem:[#allocation2 + $0x9e8] sm:$0xff]
    %v485 = vld [vmem:[#allocation2 + $0x9f0] sm:$0xff]
    %v486 = vld [vmem:[#allocation2 + $0x9f8] sm:$0xff]
    %v487 = vld [vmem:[#allocation2 + $0xa00] sm:$0xff]
    %v488 = vld [vmem:[#allocation2 + $0xa08] sm:$0xff]
    %v489 = vld [vmem:[#allocation2 + $0xa10] sm:$0xff]
    %v490 = vld [vmem:[#allocation2 + $0xa18] sm:$0xff]
    %v491 = vld [vmem:[#allocation2 + $0xa20] sm:$0xff]
    %v492 = vld [vmem:[#allocation2 + $0xa28] sm:$0xff]
    %v493 = vld [vmem:[#allocation2 + $0xa30] sm:$0xff]
    %v494 = vld [vmem:[#allocation2 + $0xa38] sm:$0xff]
    %v495 = vld [vmem:[#allocation2 + $0xa40] sm:$0xff]
    %v496 = vld [vmem:[#allocation2 + $0xa48] sm:$0xff]
    %v497 = vld [vmem:[#allocation2 + $0xa50] sm:$0xff]
    %v498 = vld [vmem:[#allocation2 + $0xa58] sm:$0xff]
    %v499 = vld [vmem:[#allocation2 + $0xa60] sm:$0xff]
    %v500 = vld [vmem:[#allocation2 + $0xa68] sm:$0xff]
    %v501 = vld [vmem:[#allocation2 + $0xa70] sm:$0xff]
    %v502 = vld [vmem:[#allocation2 + $0xa78] sm:$0xff]
    %v503 = vld [vmem:[#allocation2 + $0xa80] sm:$0xff]
    %v504 = vld [vmem:[#allocation2 + $0xa88] sm:$0xff]
    %v505 = vld [vmem:[#allocation2 + $0xa90] sm:$0xff]
    %v506 = vld [vmem:[#allocation2 + $0xa98] sm:$0xff]
    %v507 = vld [vmem:[#allocation2 + $0xaa0] sm:$0xff]
    %v508 = vld [vmem:[#allocation2 + $0xaa8] sm:$0xff]
    %v509 = vld [vmem:[#allocation2 + $0xab0] sm:$0xff]
    %v510 = vld [vmem:[#allocation2 + $0xab8] sm:$0xff]
    %v511 = vld [vmem:[#allocation2 + $0xac0] sm:$0xff]
    %v512 = vld [vmem:[#allocation2 + $0xac8] sm:$0xff]
    %v513 = vld [vmem:[#allocation2 + $0xad0] sm:$0xff]
    %v514 = vld [vmem:[#allocation2 + $0xad8] sm:$0xff]
    %v515 = vld [vmem:[#allocation2 + $0xae0] sm:$0xff]
    %v516 = vld [vmem:[#allocation2 + $0xae8] sm:$0xff]
    %v517 = vld [vmem:[#allocation2 + $0xaf0] sm:$0xff]
    %v518 = vld [vmem:[#allocation2 + $0xaf8] sm:$0xff]
    %v519 = vld [vmem:[#allocation2 + $0xb00] sm:$0xff]
    %v520 = vld [vmem:[#allocation2 + $0xb08] sm:$0xff]
    %v521 = vld [vmem:[#allocation2 + $0xb10] sm:$0xff]
    %v522 = vld [vmem:[#allocation2 + $0xb18] sm:$0xff]
    %v523 = vld [vmem:[#allocation2 + $0xb20] sm:$0xff]
    %v524 = vld [vmem:[#allocation2 + $0xb28] sm:$0xff]
    %v525 = vld [vmem:[#allocation2 + $0xb30] sm:$0xff]
    %v526 = vld [vmem:[#allocation2 + $0xb38] sm:$0xff]
    %v527 = vld [vmem:[#allocation2 + $0xb40] sm:$0xff]
    %v528 = vld [vmem:[#allocation2 + $0xb48] sm:$0xff]
    %v529 = vld [vmem:[#allocation2 + $0xb50] sm:$0xff]
    %v530 = vld [vmem:[#allocation2 + $0xb58] sm:$0xff]
    %v531 = vld [vmem:[#allocation2 + $0xb60] sm:$0xff]
    %v532 = vld [vmem:[#allocation2 + $0xb68] sm:$0xff]
    %v533 = vld [vmem:[#allocation2 + $0xb70] sm:$0xff]
    %v534 = vld [vmem:[#allocation2 + $0xb78] sm:$0xff]
    %v535 = vld [vmem:[#allocation2 + $0xb80] sm:$0xff]
    %v536 = vld [vmem:[#allocation2 + $0xb88] sm:$0xff]
    %v537 = vld [vmem:[#allocation2 + $0xb90] sm:$0xff]
    %v538 = vld [vmem:[#allocation2 + $0xb98] sm:$0xff]
    %v539 = vld [vmem:[#allocation2 + $0xba0] sm:$0xff]
    %v540 = vld [vmem:[#allocation2 + $0xba8] sm:$0xff]
    %v541 = vld [vmem:[#allocation2 + $0xbb0] sm:$0xff]
    %v542 = vld [vmem:[#allocation2 + $0xbb8] sm:$0xff]
    %v543 = vld [vmem:[#allocation2 + $0xbc0] sm:$0xff]
    %v544 = vld [vmem:[#allocation2 + $0xbc8] sm:$0xff]
    %v545 = vld [vmem:[#allocation2 + $0xbd0] sm:$0xff]
    %v546 = vld [vmem:[#allocation2 + $0xbd8] sm:$0xff]
    %v547 = vld [vmem:[#allocation2 + $0xbe0] sm:$0xff]
    %v548 = vld [vmem:[#allocation2 + $0xbe8] sm:$0xff]
    %v549 = vld [vmem:[#allocation2 + $0xbf0] sm:$0xff]
    %v550 = vld [vmem:[#allocation2 + $0xbf8] sm:$0xff]
    %v551 = vld [vmem:[#allocation2 + $0xc00] sm:$0xff]
    %v552 = vld [vmem:[#allocation2 + $0xc08] sm:$0xff]
    %v553 = vld [vmem:[#allocation2 + $0xc10] sm:$0xff]
    %v554 = vld [vmem:[#allocation2 + $0xc18] sm:$0xff]
    %v555 = vld [vmem:[#allocation2 + $0xc20] sm:$0xff]
    %v556 = vld [vmem:[#allocation2 + $0xc28] sm:$0xff]
    %v557 = vld [vmem:[#allocation2 + $0xc30] sm:$0xff]
    %v558 = vld [vmem:[#allocation2 + $0xc38] sm:$0xff]
    %v559 = vld [vmem:[#allocation2 + $0xc40] sm:$0xff]
    %v560 = vld [vmem:[#allocation2 + $0xc48] sm:$0xff]
    %v561 = vld [vmem:[#allocation2 + $0xc50] sm:$0xff]
    %v562 = vld [vmem:[#allocation2 + $0xc58] sm:$0xff]
    %v563 = vld [vmem:[#allocation2 + $0xc60] sm:$0xff]
    %v564 = vld [vmem:[#allocation2 + $0xc68] sm:$0xff]
    %v565 = vld [vmem:[#allocation2 + $0xc70] sm:$0xff]
    %v566 = vld [vmem:[#allocation2 + $0xc78] sm:$0xff]
    %v567 = vld [vmem:[#allocation2 + $0xc80] sm:$0xff]
    %v568 = vld [vmem:[#allocation2 + $0xc88] sm:$0xff]
    %v569 = vld [vmem:[#allocation2 + $0xc90] sm:$0xff]
    %v570 = vld [vmem:[#allocation2 + $0xc98] sm:$0xff]
    %v571 = vld [vmem:[#allocation2 + $0xca0] sm:$0xff]
    %v572 = vld [vmem:[#allocation2 + $0xca8] sm:$0xff]
    %v573 = vld [vmem:[#allocation2 + $0xcb0] sm:$0xff]
    %v574 = vld [vmem:[#allocation2 + $0xcb8] sm:$0xff]
    %v575 = vld [vmem:[#allocation2 + $0xcc0] sm:$0xff]
    %v576 = vld [vmem:[#allocation2 + $0xcc8] sm:$0xff]
    %v577 = vld [vmem:[#allocation2 + $0xcd0] sm:$0xff]
    %v578 = vld [vmem:[#allocation2 + $0xcd8] sm:$0xff]
    %v579 = vld [vmem:[#allocation2 + $0xce0] sm:$0xff]
    %v580 = vld [vmem:[#allocation2 + $0xce8] sm:$0xff]
    %v581 = vld [vmem:[#allocation2 + $0xcf0] sm:$0xff]
    %v582 = vld [vmem:[#allocation2 + $0xcf8] sm:$0xff]
    %v583 = vld [vmem:[#allocation2 + $0xd00] sm:$0xff]
    %v584 = vld [vmem:[#allocation2 + $0xd08] sm:$0xff]
    %v585 = vld [vmem:[#allocation2 + $0xd10] sm:$0xff]
    %v586 = vld [vmem:[#allocation2 + $0xd18] sm:$0xff]
    %v587 = vld [vmem:[#allocation2 + $0xd20] sm:$0xff]
    %v588 = vld [vmem:[#allocation2 + $0xd28] sm:$0xff]
    %v589 = vld [vmem:[#allocation2 + $0xd30] sm:$0xff]
    %v590 = vld [vmem:[#allocation2 + $0xd38] sm:$0xff]
    %v591 = vld [vmem:[#allocation2 + $0xd40] sm:$0xff]
    %v592 = vld [vmem:[#allocation2 + $0xd48] sm:$0xff]
    %v593 = vld [vmem:[#allocation2 + $0xd50] sm:$0xff]
    %v594 = vld [vmem:[#allocation2 + $0xd58] sm:$0xff]
    %v595 = vld [vmem:[#allocation2 + $0xd60] sm:$0xff]
    %v596 = vld [vmem:[#allocation2 + $0xd68] sm:$0xff]
    %v597 = vld [vmem:[#allocation2 + $0xd70] sm:$0xff]
    %v598 = vld [vmem:[#allocation2 + $0xd78] sm:$0xff]
    %v599 = vld [vmem:[#allocation2 + $0xd80] sm:$0xff]
    %v600 = vld [vmem:[#allocation2 + $0xd88] sm:$0xff]
    %v601 = vld [vmem:[#allocation2 + $0xd90] sm:$0xff]
    %v602 = vld [vmem:[#allocation2 + $0xd98] sm:$0xff]
    %v603 = vld [vmem:[#allocation2 + $0xda0] sm:$0xff]
    %v604 = vld [vmem:[#allocation2 + $0xda8] sm:$0xff]
    %v605 = vld [vmem:[#allocation2 + $0xdb0] sm:$0xff]
    %v606 = vld [vmem:[#allocation2 + $0xdb8] sm:$0xff]
    %v607 = vld [vmem:[#allocation2 + $0xdc0] sm:$0xff]
    %v608 = vld [vmem:[#allocation2 + $0xdc8] sm:$0xff]
    %v609 = vld [vmem:[#allocation2 + $0xdd0] sm:$0xff]
    %v610 = vld [vmem:[#allocation2 + $0xdd8] sm:$0xff]
    %v611 = vld [vmem:[#allocation2 + $0xde0] sm:$0xff]
    %v612 = vld [vmem:[#allocation2 + $0xde8] sm:$0xff]
    %v613 = vld [vmem:[#allocation2 + $0xdf0] sm:$0xff]
    %v614 = vld [vmem:[#allocation2 + $0xdf8] sm:$0xff]
    %v615 = vld [vmem:[#allocation2 + $0xe00] sm:$0xff]
    %v616 = vld [vmem:[#allocation2 + $0xe08] sm:$0xff]
    %v617 = vld [vmem:[#allocation2 + $0xe10] sm:$0xff]
    %v618 = vld [vmem:[#allocation2 + $0xe18] sm:$0xff]
    %v619 = vld [vmem:[#allocation2 + $0xe20] sm:$0xff]
    %v620 = vld [vmem:[#allocation2 + $0xe28] sm:$0xff]
    %v621 = vld [vmem:[#allocation2 + $0xe30] sm:$0xff]
    %v622 = vld [vmem:[#allocation2 + $0xe38] sm:$0xff]
    %v623 = vld [vmem:[#allocation2 + $0xe40] sm:$0xff]
    %v624 = vld [vmem:[#allocation2 + $0xe48] sm:$0xff]
    %v625 = vld [vmem:[#allocation2 + $0xe50] sm:$0xff]
    %v626 = vld [vmem:[#allocation2 + $0xe58] sm:$0xff]
    %v627 = vld [vmem:[#allocation2 + $0xe60] sm:$0xff]
    %v628 = vld [vmem:[#allocation2 + $0xe68] sm:$0xff]
    %v629 = vld [vmem:[#allocation2 + $0xe70] sm:$0xff]
    %v630 = vld [vmem:[#allocation2 + $0xe78] sm:$0xff]
    %v631 = vld [vmem:[#allocation2 + $0xe80] sm:$0xff]
    %v632 = vld [vmem:[#allocation2 + $0xe88] sm:$0xff]
    %v633 = vld [vmem:[#allocation2 + $0xe90] sm:$0xff]
    %v634 = vld [vmem:[#allocation2 + $0xe98] sm:$0xff]
    %v635 = vld [vmem:[#allocation2 + $0xea0] sm:$0xff]
    %v636 = vld [vmem:[#allocation2 + $0xea8] sm:$0xff]
    %v637 = vld [vmem:[#allocation2 + $0xeb0] sm:$0xff]
    %v638 = vld [vmem:[#allocation2 + $0xeb8] sm:$0xff]
    %v639 = vld [vmem:[#allocation2 + $0xec0] sm:$0xff]
    %v640 = vld [vmem:[#allocation2 + $0xec8] sm:$0xff]
    %v641 = vld [vmem:[#allocation2 + $0xed0] sm:$0xff]
    %v642 = vld [vmem:[#allocation2 + $0xed8] sm:$0xff]
    %v643 = vld [vmem:[#allocation2 + $0xee0] sm:$0xff]
    %v644 = vld [vmem:[#allocation2 + $0xee8] sm:$0xff]
    %v645 = vld [vmem:[#allocation2 + $0xef0] sm:$0xff]
    %v646 = vld [vmem:[#allocation2 + $0xef8] sm:$0xff]
    %v647 = vld [vmem:[#allocation2 + $0xf00] sm:$0xff]
    %v648 = vld [vmem:[#allocation2 + $0xf08] sm:$0xff]
    %v649 = vld [vmem:[#allocation2 + $0xf10] sm:$0xff]
    %v650 = vld [vmem:[#allocation2 + $0xf18] sm:$0xff]
    %v651 = vld [vmem:[#allocation2 + $0xf20] sm:$0xff]
    %v652 = vld [vmem:[#allocation2 + $0xf28] sm:$0xff]
    %v653 = vld [vmem:[#allocation2 + $0xf30] sm:$0xff]
    %v654 = vld [vmem:[#allocation2 + $0xf38] sm:$0xff]
    %v655 = vld [vmem:[#allocation2 + $0xf40] sm:$0xff]
    %v656 = vld [vmem:[#allocation2 + $0xf48] sm:$0xff]
    %v657 = vld [vmem:[#allocation2 + $0xf50] sm:$0xff]
    %v658 = vld [vmem:[#allocation2 + $0xf58] sm:$0xff]
    %v659 = vld [vmem:[#allocation2 + $0xf60] sm:$0xff]
    %v660 = vld [vmem:[#allocation2 + $0xf68] sm:$0xff]
    %v661 = vld [vmem:[#allocation2 + $0xf70] sm:$0xff]
    %v662 = vld [vmem:[#allocation2 + $0xf78] sm:$0xff]
    %v663 = vld [vmem:[#allocation2 + $0xf80] sm:$0xff]
    %v664 = vld [vmem:[#allocation2 + $0xf88] sm:$0xff]
    %v665 = vld [vmem:[#allocation2 + $0xf90] sm:$0xff]
    %v666 = vld [vmem:[#allocation2 + $0xf98] sm:$0xff]
    %v667 = vld [vmem:[#allocation2 + $0xfa0] sm:$0xff]
    %v668 = vld [vmem:[#allocation2 + $0xfa8] sm:$0xff]
    %v669 = vld [vmem:[#allocation2 + $0xfb0] sm:$0xff]
    %v670 = vld [vmem:[#allocation2 + $0xfb8] sm:$0xff]
    %v671 = vld [vmem:[#allocation2 + $0xfc0] sm:$0xff]
    %v672 = vld [vmem:[#allocation2 + $0xfc8] sm:$0xff]
    %v673 = vld [vmem:[#allocation2 + $0xfd0] sm:$0xff]
    %v674 = vld [vmem:[#allocation2 + $0xfd8] sm:$0xff]
    %v675 = vld [vmem:[#allocation2 + $0xfe0] sm:$0xff]
    %v676 = vld [vmem:[#allocation2 + $0xfe8] sm:$0xff]
    %v677 = vld [vmem:[#allocation2 + $0xff0] sm:$0xff]
    %v678 = vld [vmem:[#allocation2 + $0xff8] sm:$0xff]
    %v679 = vld [vmem:[#allocation2 + $0x1000] sm:$0xff]
    %v680 = vld [vmem:[#allocation2 + $0x1008] sm:$0xff]
    %v681 = vld [vmem:[#allocation2 + $0x1010] sm:$0xff]
    %v682 = vld [vmem:[#allocation2 + $0x1018] sm:$0xff]
    %v683 = vld [vmem:[#allocation2 + $0x1020] sm:$0xff]
    %v684 = vld [vmem:[#allocation2 + $0x1028] sm:$0xff]
    %v685 = vld [vmem:[#allocation2 + $0x1030] sm:$0xff]
    %v686 = vld [vmem:[#allocation2 + $0x1038] sm:$0xff]
    %v687 = vld [vmem:[#allocation2 + $0x1040] sm:$0xff]
    %v688 = vld [vmem:[#allocation2 + $0x1048] sm:$0xff]
    %v689 = vld [vmem:[#allocation2 + $0x1050] sm:$0xff]
    %v690 = vld [vmem:[#allocation2 + $0x1058] sm:$0xff]
    %v691 = vld [vmem:[#allocation2 + $0x1060] sm:$0xff]
    %v692 = vld [vmem:[#allocation2 + $0x1068] sm:$0xff]
    %v693 = vld [vmem:[#allocation2 + $0x1070] sm:$0xff]
    %v694 = vld [vmem:[#allocation2 + $0x1078] sm:$0xff]
    %v695 = vld [vmem:[#allocation2 + $0x1080] sm:$0xff]
    %v696 = vld [vmem:[#allocation2 + $0x1088] sm:$0xff]
    %v697 = vld [vmem:[#allocation2 + $0x1090] sm:$0xff]
    %v698 = vld [vmem:[#allocation2 + $0x1098] sm:$0xff]
    %v699 = vld [vmem:[#allocation2 + $0x10a0] sm:$0xff]
    %v700 = vld [vmem:[#allocation2 + $0x10a8] sm:$0xff]
    %v701 = vld [vmem:[#allocation2 + $0x10b0] sm:$0xff]
    %v702 = vld [vmem:[#allocation2 + $0x10b8] sm:$0xff]
    %v703 = vld [vmem:[#allocation2 + $0x10c0] sm:$0xff]
    %v704 = vld [vmem:[#allocation2 + $0x10c8] sm:$0xff]
    %v705 = vld [vmem:[#allocation2 + $0x10d0] sm:$0xff]
    %v706 = vld [vmem:[#allocation2 + $0x10d8] sm:$0xff]
    %v707 = vld [vmem:[#allocation2 + $0x10e0] sm:$0xff]
    %v708 = vld [vmem:[#allocation2 + $0x10e8] sm:$0xff]
    %v709 = vld [vmem:[#allocation2 + $0x10f0] sm:$0xff]
    %v710 = vld [vmem:[#allocation2 + $0x10f8] sm:$0xff]
    %v711 = vld [vmem:[#allocation2 + $0x1100] sm:$0xff]
    %v712 = vld [vmem:[#allocation2 + $0x1108] sm:$0xff]
    %v713 = vld [vmem:[#allocation2 + $0x1110] sm:$0xff]
    %v714 = vld [vmem:[#allocation2 + $0x1118] sm:$0xff]
    %v715 = vld [vmem:[#allocation2 + $0x1120] sm:$0xff]
    %v716 = vld [vmem:[#allocation2 + $0x1128] sm:$0xff]
    %v717 = vld [vmem:[#allocation2 + $0x1130] sm:$0xff]
    %v718 = vld [vmem:[#allocation2 + $0x1138] sm:$0xff]
    %v719 = vld [vmem:[#allocation2 + $0x1140] sm:$0xff]
    %v720 = vld [vmem:[#allocation2 + $0x1148] sm:$0xff]
    %v721 = vld [vmem:[#allocation2 + $0x1150] sm:$0xff]
    %v722 = vld [vmem:[#allocation2 + $0x1158] sm:$0xff]
    %v723 = vld [vmem:[#allocation2 + $0x1160] sm:$0xff]
    %v724 = vld [vmem:[#allocation2 + $0x1168] sm:$0xff]
    %v725 = vld [vmem:[#allocation2 + $0x1170] sm:$0xff]
    %v726 = vld [vmem:[#allocation2 + $0x1178] sm:$0xff]
    %v727 = vld [vmem:[#allocation2 + $0x1180] sm:$0xff]
    %v728 = vld [vmem:[#allocation2 + $0x1188] sm:$0xff]
    %v729 = vld [vmem:[#allocation2 + $0x1190] sm:$0xff]
    %v730 = vld [vmem:[#allocation2 + $0x1198] sm:$0xff]
    %v731 = vld [vmem:[#allocation2 + $0x11a0] sm:$0xff]
    %v732 = vld [vmem:[#allocation2 + $0x11a8] sm:$0xff]
    %v733 = vld [vmem:[#allocation2 + $0x11b0] sm:$0xff]
    %v734 = vld [vmem:[#allocation2 + $0x11b8] sm:$0xff]
    %v735 = vld [vmem:[#allocation2 + $0x11c0] sm:$0xff]
    %v736 = vld [vmem:[#allocation2 + $0x11c8] sm:$0xff]
    %v737 = vld [vmem:[#allocation2 + $0x11d0] sm:$0xff]
    %v738 = vld [vmem:[#allocation2 + $0x11d8] sm:$0xff]
    %v739 = vld [vmem:[#allocation2 + $0x11e0] sm:$0xff]
    %v740 = vld [vmem:[#allocation2 + $0x11e8] sm:$0xff]
    %v741 = vld [vmem:[#allocation2 + $0x11f0] sm:$0xff]
    %v742 = vld [vmem:[#allocation2 + $0x11f8] sm:$0xff]
    %v743 = vld [vmem:[#allocation4] sm:$0xf]
    %v745 = vperm.slane %v743, 0
    %v746 = vperm.slane %v743, 1
    %v747 = vperm.slane %v743, 2
    %v748 = vperm.slane %v743, 3
    %v771 = vunpack.c.l.b16 %v149
    %v772 = vunpack.c.h.b16 %v149
    %v773 = vunpack.c.l.b16 %v150
    %v774 = vunpack.c.h.b16 %v150
    %v775 = vunpack.c.l.b16 %v151
    %v776 = vunpack.c.h.b16 %v151
    %v777 = vunpack.c.l.b16 %v152
    %v778 = vunpack.c.h.b16 %v152
    %v779 = vunpack.c.l.b16 %v153
    %v780 = vunpack.c.h.b16 %v153
    %v781 = vunpack.c.l.b16 %v154
    %v782 = vunpack.c.h.b16 %v154
    %v783 = vunpack.c.l.b16 %v155
    %v784 = vunpack.c.h.b16 %v155
    %v785 = vunpack.c.l.b16 %v156
    %v786 = vunpack.c.h.b16 %v156
    %v787 = vunpack.c.l.b16 %v157
    %v788 = vunpack.c.h.b16 %v157
    %v789 = vunpack.c.l.b16 %v158
    %v790 = vunpack.c.h.b16 %v158
    %v791 = vunpack.c.l.b16 %v159
    %v792 = vunpack.c.h.b16 %v159
    %v793 = vunpack.c.l.b16 %v160
    %v794 = vunpack.c.h.b16 %v160
    %v795 = vunpack.c.l.b16 %v161
    %v796 = vunpack.c.h.b16 %v161
    %v797 = vunpack.c.l.b16 %v162
    %v798 = vunpack.c.h.b16 %v162
    %v799 = vunpack.c.l.b16 %v163
    %v800 = vunpack.c.h.b16 %v163
    %v801 = vunpack.c.l.b16 %v164
    %v802 = vunpack.c.h.b16 %v164
    %v803 = vunpack.c.l.b16 %v165
    %v804 = vunpack.c.h.b16 %v165
    %v805 = vunpack.c.l.b16 %v166
    %v806 = vunpack.c.h.b16 %v166
    %v807 = vpack.c.b16 %v789, %v771
    %v808 = vpack.c.b16 %v790, %v772
    %v809 = vpack.c.b16 %v791, %v773
    %v810 = vpack.c.b16 %v792, %v774
    %v811 = vpack.c.b16 %v793, %v775
    %v812 = vpack.c.b16 %v794, %v776
    %v813 = vpack.c.b16 %v795, %v777
    %v814 = vpack.c.b16 %v796, %v778
    %v815 = vpack.c.b16 %v797, %v779
    %v816 = vpack.c.b16 %v798, %v780
    %v817 = vpack.c.b16 %v799, %v781
    %v818 = vpack.c.b16 %v800, %v782
    %v819 = vpack.c.b16 %v801, %v783
    %v820 = vpack.c.b16 %v802, %v784
    %v821 = vpack.c.b16 %v803, %v785
    %v822 = vpack.c.b16 %v804, %v786
    %v823 = vpack.c.b16 %v805, %v787
    %v824 = vpack.c.b16 %v806, %v788
    %v1419 = vunpack.c.l.b16 %v167
    %v1420 = vunpack.c.h.b16 %v167
    %v1421 = vunpack.c.l.b16 %v168
    %v1422 = vunpack.c.h.b16 %v168
    %v1423 = vunpack.c.l.b16 %v169
    %v1424 = vunpack.c.h.b16 %v169
    %v1425 = vunpack.c.l.b16 %v170
    %v1426 = vunpack.c.h.b16 %v170
    %v1427 = vunpack.c.l.b16 %v171
    %v1428 = vunpack.c.h.b16 %v171
    %v1429 = vunpack.c.l.b16 %v172
    %v1430 = vunpack.c.h.b16 %v172
    %v1431 = vunpack.c.l.b16 %v173
    %v1432 = vunpack.c.h.b16 %v173
    %v1433 = vunpack.c.l.b16 %v174
    %v1434 = vunpack.c.h.b16 %v174
    %v1435 = vunpack.c.l.b16 %v175
    %v1436 = vunpack.c.h.b16 %v175
    %v1437 = vunpack.c.l.b16 %v176
    %v1438 = vunpack.c.h.b16 %v176
    %v1439 = vunpack.c.l.b16 %v177
    %v1440 = vunpack.c.h.b16 %v177
    %v1441 = vunpack.c.l.b16 %v178
    %v1442 = vunpack.c.h.b16 %v178
    %v1443 = vunpack.c.l.b16 %v179
    %v1444 = vunpack.c.h.b16 %v179
    %v1445 = vunpack.c.l.b16 %v180
    %v1446 = vunpack.c.h.b16 %v180
    %v1447 = vunpack.c.l.b16 %v181
    %v1448 = vunpack.c.h.b16 %v181
    %v1449 = vunpack.c.l.b16 %v182
    %v1450 = vunpack.c.h.b16 %v182
    %v1451 = vunpack.c.l.b16 %v183
    %v1452 = vunpack.c.h.b16 %v183
    %v1453 = vunpack.c.l.b16 %v184
    %v1454 = vunpack.c.h.b16 %v184
    %v1455 = vunpack.c.l.b16 %v185
    %v1456 = vunpack.c.h.b16 %v185
    %v1457 = vunpack.c.l.b16 %v186
    %v1458 = vunpack.c.h.b16 %v186
    %v1459 = vunpack.c.l.b16 %v187
    %v1460 = vunpack.c.h.b16 %v187
    %v1461 = vunpack.c.l.b16 %v188
    %v1462 = vunpack.c.h.b16 %v188
    %v1463 = vunpack.c.l.b16 %v189
    %v1464 = vunpack.c.h.b16 %v189
    %v1465 = vunpack.c.l.b16 %v190
    %v1466 = vunpack.c.h.b16 %v190
    %v1467 = vunpack.c.l.b16 %v191
    %v1468 = vunpack.c.h.b16 %v191
    %v1469 = vunpack.c.l.b16 %v192
    %v1470 = vunpack.c.h.b16 %v192
    %v1471 = vunpack.c.l.b16 %v193
    %v1472 = vunpack.c.h.b16 %v193
    %v1473 = vunpack.c.l.b16 %v194
    %v1474 = vunpack.c.h.b16 %v194
    %v1475 = vunpack.c.l.b16 %v195
    %v1476 = vunpack.c.h.b16 %v195
    %v1477 = vunpack.c.l.b16 %v196
    %v1478 = vunpack.c.h.b16 %v196
    %v1479 = vunpack.c.l.b16 %v197
    %v1480 = vunpack.c.h.b16 %v197
    %v1481 = vunpack.c.l.b16 %v198
    %v1482 = vunpack.c.h.b16 %v198
    %v1483 = vunpack.c.l.b16 %v199
    %v1484 = vunpack.c.h.b16 %v199
    %v1485 = vunpack.c.l.b16 %v200
    %v1486 = vunpack.c.h.b16 %v200
    %v1487 = vunpack.c.l.b16 %v201
    %v1488 = vunpack.c.h.b16 %v201
    %v1489 = vunpack.c.l.b16 %v202
    %v1490 = vunpack.c.h.b16 %v202
    %v1491 = vunpack.c.l.b16 %v203
    %v1492 = vunpack.c.h.b16 %v203
    %v1493 = vunpack.c.l.b16 %v204
    %v1494 = vunpack.c.h.b16 %v204
    %v1495 = vunpack.c.l.b16 %v205
    %v1496 = vunpack.c.h.b16 %v205
    %v1497 = vunpack.c.l.b16 %v206
    %v1498 = vunpack.c.h.b16 %v206
    %v1499 = vunpack.c.l.b16 %v207
    %v1500 = vunpack.c.h.b16 %v207
    %v1501 = vunpack.c.l.b16 %v208
    %v1502 = vunpack.c.h.b16 %v208
    %v1503 = vunpack.c.l.b16 %v209
    %v1504 = vunpack.c.h.b16 %v209
    %v1505 = vunpack.c.l.b16 %v210
    %v1506 = vunpack.c.h.b16 %v210
    %v1507 = vunpack.c.l.b16 %v211
    %v1508 = vunpack.c.h.b16 %v211
    %v1509 = vunpack.c.l.b16 %v212
    %v1510 = vunpack.c.h.b16 %v212
    %v1511 = vunpack.c.l.b16 %v213
    %v1512 = vunpack.c.h.b16 %v213
    %v1513 = vunpack.c.l.b16 %v214
    %v1514 = vunpack.c.h.b16 %v214
    %v1515 = vunpack.c.l.b16 %v215
    %v1516 = vunpack.c.h.b16 %v215
    %v1517 = vunpack.c.l.b16 %v216
    %v1518 = vunpack.c.h.b16 %v216
    %v1519 = vunpack.c.l.b16 %v217
    %v1520 = vunpack.c.h.b16 %v217
    %v1521 = vunpack.c.l.b16 %v218
    %v1522 = vunpack.c.h.b16 %v218
    %v1523 = vunpack.c.l.b16 %v219
    %v1524 = vunpack.c.h.b16 %v219
    %v1525 = vunpack.c.l.b16 %v220
    %v1526 = vunpack.c.h.b16 %v220
    %v1527 = vunpack.c.l.b16 %v221
    %v1528 = vunpack.c.h.b16 %v221
    %v1529 = vunpack.c.l.b16 %v222
    %v1530 = vunpack.c.h.b16 %v222
    %v1531 = vunpack.c.l.b16 %v223
    %v1532 = vunpack.c.h.b16 %v223
    %v1533 = vunpack.c.l.b16 %v224
    %v1534 = vunpack.c.h.b16 %v224
    %v1535 = vunpack.c.l.b16 %v225
    %v1536 = vunpack.c.h.b16 %v225
    %v1537 = vunpack.c.l.b16 %v226
    %v1538 = vunpack.c.h.b16 %v226
    %v1539 = vunpack.c.l.b16 %v227
    %v1540 = vunpack.c.h.b16 %v227
    %v1541 = vunpack.c.l.b16 %v228
    %v1542 = vunpack.c.h.b16 %v228
    %v1543 = vunpack.c.l.b16 %v229
    %v1544 = vunpack.c.h.b16 %v229
    %v1545 = vunpack.c.l.b16 %v230
    %v1546 = vunpack.c.h.b16 %v230
    %v1547 = vunpack.c.l.b16 %v231
    %v1548 = vunpack.c.h.b16 %v231
    %v1549 = vunpack.c.l.b16 %v232
    %v1550 = vunpack.c.h.b16 %v232
    %v1551 = vunpack.c.l.b16 %v233
    %v1552 = vunpack.c.h.b16 %v233
    %v1553 = vunpack.c.l.b16 %v234
    %v1554 = vunpack.c.h.b16 %v234
    %v1555 = vunpack.c.l.b16 %v235
    %v1556 = vunpack.c.h.b16 %v235
    %v1557 = vunpack.c.l.b16 %v236
    %v1558 = vunpack.c.h.b16 %v236
    %v1559 = vunpack.c.l.b16 %v237
    %v1560 = vunpack.c.h.b16 %v237
    %v1561 = vunpack.c.l.b16 %v238
    %v1562 = vunpack.c.h.b16 %v238
    %v1563 = vunpack.c.l.b16 %v239
    %v1564 = vunpack.c.h.b16 %v239
    %v1565 = vunpack.c.l.b16 %v240
    %v1566 = vunpack.c.h.b16 %v240
    %v1567 = vunpack.c.l.b16 %v241
    %v1568 = vunpack.c.h.b16 %v241
    %v1569 = vunpack.c.l.b16 %v242
    %v1570 = vunpack.c.h.b16 %v242
    %v1571 = vunpack.c.l.b16 %v243
    %v1572 = vunpack.c.h.b16 %v243
    %v1573 = vunpack.c.l.b16 %v244
    %v1574 = vunpack.c.h.b16 %v244
    %v1575 = vunpack.c.l.b16 %v245
    %v1576 = vunpack.c.h.b16 %v245
    %v1577 = vunpack.c.l.b16 %v246
    %v1578 = vunpack.c.h.b16 %v246
    %v1579 = vunpack.c.l.b16 %v247
    %v1580 = vunpack.c.h.b16 %v247
    %v1581 = vunpack.c.l.b16 %v248
    %v1582 = vunpack.c.h.b16 %v248
    %v1583 = vunpack.c.l.b16 %v249
    %v1584 = vunpack.c.h.b16 %v249
    %v1585 = vunpack.c.l.b16 %v250
    %v1586 = vunpack.c.h.b16 %v250
    %v1587 = vunpack.c.l.b16 %v251
    %v1588 = vunpack.c.h.b16 %v251
    %v1589 = vunpack.c.l.b16 %v252
    %v1590 = vunpack.c.h.b16 %v252
    %v1591 = vunpack.c.l.b16 %v253
    %v1592 = vunpack.c.h.b16 %v253
    %v1593 = vunpack.c.l.b16 %v254
    %v1594 = vunpack.c.h.b16 %v254
    %v1595 = vunpack.c.l.b16 %v255
    %v1596 = vunpack.c.h.b16 %v255
    %v1597 = vunpack.c.l.b16 %v256
    %v1598 = vunpack.c.h.b16 %v256
    %v1599 = vunpack.c.l.b16 %v257
    %v1600 = vunpack.c.h.b16 %v257
    %v1601 = vunpack.c.l.b16 %v258
    %v1602 = vunpack.c.h.b16 %v258
    %v1603 = vunpack.c.l.b16 %v259
    %v1604 = vunpack.c.h.b16 %v259
    %v1605 = vunpack.c.l.b16 %v260
    %v1606 = vunpack.c.h.b16 %v260
    %v1607 = vunpack.c.l.b16 %v261
    %v1608 = vunpack.c.h.b16 %v261
    %v1609 = vunpack.c.l.b16 %v262
    %v1610 = vunpack.c.h.b16 %v262
    %v1611 = vunpack.c.l.b16 %v263
    %v1612 = vunpack.c.h.b16 %v263
    %v1613 = vunpack.c.l.b16 %v264
    %v1614 = vunpack.c.h.b16 %v264
    %v1615 = vunpack.c.l.b16 %v265
    %v1616 = vunpack.c.h.b16 %v265
    %v1617 = vunpack.c.l.b16 %v266
    %v1618 = vunpack.c.h.b16 %v266
    %v1619 = vunpack.c.l.b16 %v267
    %v1620 = vunpack.c.h.b16 %v267
    %v1621 = vunpack.c.l.b16 %v268
    %v1622 = vunpack.c.h.b16 %v268
    %v1623 = vunpack.c.l.b16 %v269
    %v1624 = vunpack.c.h.b16 %v269
    %v1625 = vunpack.c.l.b16 %v270
    %v1626 = vunpack.c.h.b16 %v270
    %v1627 = vunpack.c.l.b16 %v271
    %v1628 = vunpack.c.h.b16 %v271
    %v1629 = vunpack.c.l.b16 %v272
    %v1630 = vunpack.c.h.b16 %v272
    %v1631 = vunpack.c.l.b16 %v273
    %v1632 = vunpack.c.h.b16 %v273
    %v1633 = vunpack.c.l.b16 %v274
    %v1634 = vunpack.c.h.b16 %v274
    %v1635 = vunpack.c.l.b16 %v275
    %v1636 = vunpack.c.h.b16 %v275
    %v1637 = vunpack.c.l.b16 %v276
    %v1638 = vunpack.c.h.b16 %v276
    %v1639 = vunpack.c.l.b16 %v277
    %v1640 = vunpack.c.h.b16 %v277
    %v1641 = vunpack.c.l.b16 %v278
    %v1642 = vunpack.c.h.b16 %v278
    %v1643 = vunpack.c.l.b16 %v279
    %v1644 = vunpack.c.h.b16 %v279
    %v1645 = vunpack.c.l.b16 %v280
    %v1646 = vunpack.c.h.b16 %v280
    %v1647 = vunpack.c.l.b16 %v281
    %v1648 = vunpack.c.h.b16 %v281
    %v1649 = vunpack.c.l.b16 %v282
    %v1650 = vunpack.c.h.b16 %v282
    %v1651 = vunpack.c.l.b16 %v283
    %v1652 = vunpack.c.h.b16 %v283
    %v1653 = vunpack.c.l.b16 %v284
    %v1654 = vunpack.c.h.b16 %v284
    %v1655 = vunpack.c.l.b16 %v285
    %v1656 = vunpack.c.h.b16 %v285
    %v1657 = vunpack.c.l.b16 %v286
    %v1658 = vunpack.c.h.b16 %v286
    %v1659 = vunpack.c.l.b16 %v287
    %v1660 = vunpack.c.h.b16 %v287
    %v1661 = vunpack.c.l.b16 %v288
    %v1662 = vunpack.c.h.b16 %v288
    %v1663 = vunpack.c.l.b16 %v289
    %v1664 = vunpack.c.h.b16 %v289
    %v1665 = vunpack.c.l.b16 %v290
    %v1666 = vunpack.c.h.b16 %v290
    %v1667 = vunpack.c.l.b16 %v291
    %v1668 = vunpack.c.h.b16 %v291
    %v1669 = vunpack.c.l.b16 %v292
    %v1670 = vunpack.c.h.b16 %v292
    %v1671 = vunpack.c.l.b16 %v293
    %v1672 = vunpack.c.h.b16 %v293
    %v1673 = vunpack.c.l.b16 %v294
    %v1674 = vunpack.c.h.b16 %v294
    %v1675 = vunpack.c.l.b16 %v295
    %v1676 = vunpack.c.h.b16 %v295
    %v1677 = vunpack.c.l.b16 %v296
    %v1678 = vunpack.c.h.b16 %v296
    %v1679 = vunpack.c.l.b16 %v297
    %v1680 = vunpack.c.h.b16 %v297
    %v1681 = vunpack.c.l.b16 %v298
    %v1682 = vunpack.c.h.b16 %v298
    %v1683 = vunpack.c.l.b16 %v299
    %v1684 = vunpack.c.h.b16 %v299
    %v1685 = vunpack.c.l.b16 %v300
    %v1686 = vunpack.c.h.b16 %v300
    %v1687 = vunpack.c.l.b16 %v301
    %v1688 = vunpack.c.h.b16 %v301
    %v1689 = vunpack.c.l.b16 %v302
    %v1690 = vunpack.c.h.b16 %v302
    %v1691 = vunpack.c.l.b16 %v303
    %v1692 = vunpack.c.h.b16 %v303
    %v1693 = vunpack.c.l.b16 %v304
    %v1694 = vunpack.c.h.b16 %v304
    %v1695 = vunpack.c.l.b16 %v305
    %v1696 = vunpack.c.h.b16 %v305
    %v1697 = vunpack.c.l.b16 %v306
    %v1698 = vunpack.c.h.b16 %v306
    %v1699 = vunpack.c.l.b16 %v307
    %v1700 = vunpack.c.h.b16 %v307
    %v1701 = vunpack.c.l.b16 %v308
    %v1702 = vunpack.c.h.b16 %v308
    %v1703 = vunpack.c.l.b16 %v309
    %v1704 = vunpack.c.h.b16 %v309
    %v1705 = vunpack.c.l.b16 %v310
    %v1706 = vunpack.c.h.b16 %v310
    %v1707 = vunpack.c.l.b16 %v311
    %v1708 = vunpack.c.h.b16 %v311
    %v1709 = vunpack.c.l.b16 %v312
    %v1710 = vunpack.c.h.b16 %v312
    %v1711 = vunpack.c.l.b16 %v313
    %v1712 = vunpack.c.h.b16 %v313
    %v1713 = vunpack.c.l.b16 %v314
    %v1714 = vunpack.c.h.b16 %v314
    %v1715 = vunpack.c.l.b16 %v315
    %v1716 = vunpack.c.h.b16 %v315
    %v1717 = vunpack.c.l.b16 %v316
    %v1718 = vunpack.c.h.b16 %v316
    %v1719 = vunpack.c.l.b16 %v317
    %v1720 = vunpack.c.h.b16 %v317
    %v1721 = vunpack.c.l.b16 %v318
    %v1722 = vunpack.c.h.b16 %v318
    %v1723 = vunpack.c.l.b16 %v319
    %v1724 = vunpack.c.h.b16 %v319
    %v1725 = vunpack.c.l.b16 %v320
    %v1726 = vunpack.c.h.b16 %v320
    %v1727 = vunpack.c.l.b16 %v321
    %v1728 = vunpack.c.h.b16 %v321
    %v1729 = vunpack.c.l.b16 %v322
    %v1730 = vunpack.c.h.b16 %v322
    %v1731 = vunpack.c.l.b16 %v323
    %v1732 = vunpack.c.h.b16 %v323
    %v1733 = vunpack.c.l.b16 %v324
    %v1734 = vunpack.c.h.b16 %v324
    %v1735 = vunpack.c.l.b16 %v325
    %v1736 = vunpack.c.h.b16 %v325
    %v1737 = vunpack.c.l.b16 %v326
    %v1738 = vunpack.c.h.b16 %v326
    %v1739 = vunpack.c.l.b16 %v327
    %v1740 = vunpack.c.h.b16 %v327
    %v1741 = vunpack.c.l.b16 %v328
    %v1742 = vunpack.c.h.b16 %v328
    %v1743 = vunpack.c.l.b16 %v329
    %v1744 = vunpack.c.h.b16 %v329
    %v1745 = vunpack.c.l.b16 %v330
    %v1746 = vunpack.c.h.b16 %v330
    %v1747 = vunpack.c.l.b16 %v331
    %v1748 = vunpack.c.h.b16 %v331
    %v1749 = vunpack.c.l.b16 %v332
    %v1750 = vunpack.c.h.b16 %v332
    %v1751 = vunpack.c.l.b16 %v333
    %v1752 = vunpack.c.h.b16 %v333
    %v1753 = vunpack.c.l.b16 %v334
    %v1754 = vunpack.c.h.b16 %v334
    %v1755 = vunpack.c.l.b16 %v335
    %v1756 = vunpack.c.h.b16 %v335
    %v1757 = vunpack.c.l.b16 %v336
    %v1758 = vunpack.c.h.b16 %v336
    %v1759 = vunpack.c.l.b16 %v337
    %v1760 = vunpack.c.h.b16 %v337
    %v1761 = vunpack.c.l.b16 %v338
    %v1762 = vunpack.c.h.b16 %v338
    %v1763 = vunpack.c.l.b16 %v339
    %v1764 = vunpack.c.h.b16 %v339
    %v1765 = vunpack.c.l.b16 %v340
    %v1766 = vunpack.c.h.b16 %v340
    %v1767 = vunpack.c.l.b16 %v341
    %v1768 = vunpack.c.h.b16 %v341
    %v1769 = vunpack.c.l.b16 %v342
    %v1770 = vunpack.c.h.b16 %v342
    %v1771 = vunpack.c.l.b16 %v343
    %v1772 = vunpack.c.h.b16 %v343
    %v1773 = vunpack.c.l.b16 %v344
    %v1774 = vunpack.c.h.b16 %v344
    %v1775 = vunpack.c.l.b16 %v345
    %v1776 = vunpack.c.h.b16 %v345
    %v1777 = vunpack.c.l.b16 %v346
    %v1778 = vunpack.c.h.b16 %v346
    %v1779 = vunpack.c.l.b16 %v347
    %v1780 = vunpack.c.h.b16 %v347
    %v1781 = vunpack.c.l.b16 %v348
    %v1782 = vunpack.c.h.b16 %v348
    %v1783 = vunpack.c.l.b16 %v349
    %v1784 = vunpack.c.h.b16 %v349
    %v1785 = vunpack.c.l.b16 %v350
    %v1786 = vunpack.c.h.b16 %v350
    %v1787 = vunpack.c.l.b16 %v351
    %v1788 = vunpack.c.h.b16 %v351
    %v1789 = vunpack.c.l.b16 %v352
    %v1790 = vunpack.c.h.b16 %v352
    %v1791 = vunpack.c.l.b16 %v353
    %v1792 = vunpack.c.h.b16 %v353
    %v1793 = vunpack.c.l.b16 %v354
    %v1794 = vunpack.c.h.b16 %v354
    %v1795 = vunpack.c.l.b16 %v355
    %v1796 = vunpack.c.h.b16 %v355
    %v1797 = vunpack.c.l.b16 %v356
    %v1798 = vunpack.c.h.b16 %v356
    %v1799 = vunpack.c.l.b16 %v357
    %v1800 = vunpack.c.h.b16 %v357
    %v1801 = vunpack.c.l.b16 %v358
    %v1802 = vunpack.c.h.b16 %v358
    %v1803 = vunpack.c.l.b16 %v359
    %v1804 = vunpack.c.h.b16 %v359
    %v1805 = vunpack.c.l.b16 %v360
    %v1806 = vunpack.c.h.b16 %v360
    %v1807 = vunpack.c.l.b16 %v361
    %v1808 = vunpack.c.h.b16 %v361
    %v1809 = vunpack.c.l.b16 %v362
    %v1810 = vunpack.c.h.b16 %v362
    %v1811 = vunpack.c.l.b16 %v363
    %v1812 = vunpack.c.h.b16 %v363
    %v1813 = vunpack.c.l.b16 %v364
    %v1814 = vunpack.c.h.b16 %v364
    %v1815 = vunpack.c.l.b16 %v365
    %v1816 = vunpack.c.h.b16 %v365
    %v1817 = vunpack.c.l.b16 %v366
    %v1818 = vunpack.c.h.b16 %v366
    %v1819 = vunpack.c.l.b16 %v367
    %v1820 = vunpack.c.h.b16 %v367
    %v1821 = vunpack.c.l.b16 %v368
    %v1822 = vunpack.c.h.b16 %v368
    %v1823 = vunpack.c.l.b16 %v369
    %v1824 = vunpack.c.h.b16 %v369
    %v1825 = vunpack.c.l.b16 %v370
    %v1826 = vunpack.c.h.b16 %v370
    %v1827 = vunpack.c.l.b16 %v371
    %v1828 = vunpack.c.h.b16 %v371
    %v1829 = vunpack.c.l.b16 %v372
    %v1830 = vunpack.c.h.b16 %v372
    %v1831 = vunpack.c.l.b16 %v373
    %v1832 = vunpack.c.h.b16 %v373
    %v1833 = vunpack.c.l.b16 %v374
    %v1834 = vunpack.c.h.b16 %v374
    %v1835 = vunpack.c.l.b16 %v375
    %v1836 = vunpack.c.h.b16 %v375
    %v1837 = vunpack.c.l.b16 %v376
    %v1838 = vunpack.c.h.b16 %v376
    %v1839 = vunpack.c.l.b16 %v377
    %v1840 = vunpack.c.h.b16 %v377
    %v1841 = vunpack.c.l.b16 %v378
    %v1842 = vunpack.c.h.b16 %v378
    %v1843 = vunpack.c.l.b16 %v379
    %v1844 = vunpack.c.h.b16 %v379
    %v1845 = vunpack.c.l.b16 %v380
    %v1846 = vunpack.c.h.b16 %v380
    %v1847 = vunpack.c.l.b16 %v381
    %v1848 = vunpack.c.h.b16 %v381
    %v1849 = vunpack.c.l.b16 %v382
    %v1850 = vunpack.c.h.b16 %v382
    %v1851 = vunpack.c.l.b16 %v383
    %v1852 = vunpack.c.h.b16 %v383
    %v1853 = vunpack.c.l.b16 %v384
    %v1854 = vunpack.c.h.b16 %v384
    %v1855 = vunpack.c.l.b16 %v385
    %v1856 = vunpack.c.h.b16 %v385
    %v1857 = vunpack.c.l.b16 %v386
    %v1858 = vunpack.c.h.b16 %v386
    %v1859 = vunpack.c.l.b16 %v387
    %v1860 = vunpack.c.h.b16 %v387
    %v1861 = vunpack.c.l.b16 %v388
    %v1862 = vunpack.c.h.b16 %v388
    %v1863 = vunpack.c.l.b16 %v389
    %v1864 = vunpack.c.h.b16 %v389
    %v1865 = vunpack.c.l.b16 %v390
    %v1866 = vunpack.c.h.b16 %v390
    %v1867 = vunpack.c.l.b16 %v391
    %v1868 = vunpack.c.h.b16 %v391
    %v1869 = vunpack.c.l.b16 %v392
    %v1870 = vunpack.c.h.b16 %v392
    %v1871 = vunpack.c.l.b16 %v393
    %v1872 = vunpack.c.h.b16 %v393
    %v1873 = vunpack.c.l.b16 %v394
    %v1874 = vunpack.c.h.b16 %v394
    %v1875 = vunpack.c.l.b16 %v395
    %v1876 = vunpack.c.h.b16 %v395
    %v1877 = vunpack.c.l.b16 %v396
    %v1878 = vunpack.c.h.b16 %v396
    %v1879 = vunpack.c.l.b16 %v397
    %v1880 = vunpack.c.h.b16 %v397
    %v1881 = vunpack.c.l.b16 %v398
    %v1882 = vunpack.c.h.b16 %v398
    %v1883 = vunpack.c.l.b16 %v399
    %v1884 = vunpack.c.h.b16 %v399
    %v1885 = vunpack.c.l.b16 %v400
    %v1886 = vunpack.c.h.b16 %v400
    %v1887 = vunpack.c.l.b16 %v401
    %v1888 = vunpack.c.h.b16 %v401
    %v1889 = vunpack.c.l.b16 %v402
    %v1890 = vunpack.c.h.b16 %v402
    %v1891 = vunpack.c.l.b16 %v403
    %v1892 = vunpack.c.h.b16 %v403
    %v1893 = vunpack.c.l.b16 %v404
    %v1894 = vunpack.c.h.b16 %v404
    %v1895 = vunpack.c.l.b16 %v405
    %v1896 = vunpack.c.h.b16 %v405
    %v1897 = vunpack.c.l.b16 %v406
    %v1898 = vunpack.c.h.b16 %v406
    %v1899 = vunpack.c.l.b16 %v407
    %v1900 = vunpack.c.h.b16 %v407
    %v1901 = vunpack.c.l.b16 %v408
    %v1902 = vunpack.c.h.b16 %v408
    %v1903 = vunpack.c.l.b16 %v409
    %v1904 = vunpack.c.h.b16 %v409
    %v1905 = vunpack.c.l.b16 %v410
    %v1906 = vunpack.c.h.b16 %v410
    %v1907 = vunpack.c.l.b16 %v411
    %v1908 = vunpack.c.h.b16 %v411
    %v1909 = vunpack.c.l.b16 %v412
    %v1910 = vunpack.c.h.b16 %v412
    %v1911 = vunpack.c.l.b16 %v413
    %v1912 = vunpack.c.h.b16 %v413
    %v1913 = vunpack.c.l.b16 %v414
    %v1914 = vunpack.c.h.b16 %v414
    %v1915 = vunpack.c.l.b16 %v415
    %v1916 = vunpack.c.h.b16 %v415
    %v1917 = vunpack.c.l.b16 %v416
    %v1918 = vunpack.c.h.b16 %v416
    %v1919 = vunpack.c.l.b16 %v417
    %v1920 = vunpack.c.h.b16 %v417
    %v1921 = vunpack.c.l.b16 %v418
    %v1922 = vunpack.c.h.b16 %v418
    %v1923 = vunpack.c.l.b16 %v419
    %v1924 = vunpack.c.h.b16 %v419
    %v1925 = vunpack.c.l.b16 %v420
    %v1926 = vunpack.c.h.b16 %v420
    %v1927 = vunpack.c.l.b16 %v421
    %v1928 = vunpack.c.h.b16 %v421
    %v1929 = vunpack.c.l.b16 %v422
    %v1930 = vunpack.c.h.b16 %v422
    %v1931 = vunpack.c.l.b16 %v423
    %v1932 = vunpack.c.h.b16 %v423
    %v1933 = vunpack.c.l.b16 %v424
    %v1934 = vunpack.c.h.b16 %v424
    %v1935 = vunpack.c.l.b16 %v425
    %v1936 = vunpack.c.h.b16 %v425
    %v1937 = vunpack.c.l.b16 %v426
    %v1938 = vunpack.c.h.b16 %v426
    %v1939 = vunpack.c.l.b16 %v427
    %v1940 = vunpack.c.h.b16 %v427
    %v1941 = vunpack.c.l.b16 %v428
    %v1942 = vunpack.c.h.b16 %v428
    %v1943 = vunpack.c.l.b16 %v429
    %v1944 = vunpack.c.h.b16 %v429
    %v1945 = vunpack.c.l.b16 %v430
    %v1946 = vunpack.c.h.b16 %v430
    %v1947 = vunpack.c.l.b16 %v431
    %v1948 = vunpack.c.h.b16 %v431
    %v1949 = vunpack.c.l.b16 %v432
    %v1950 = vunpack.c.h.b16 %v432
    %v1951 = vunpack.c.l.b16 %v433
    %v1952 = vunpack.c.h.b16 %v433
    %v1953 = vunpack.c.l.b16 %v434
    %v1954 = vunpack.c.h.b16 %v434
    %v1955 = vunpack.c.l.b16 %v435
    %v1956 = vunpack.c.h.b16 %v435
    %v1957 = vunpack.c.l.b16 %v436
    %v1958 = vunpack.c.h.b16 %v436
    %v1959 = vunpack.c.l.b16 %v437
    %v1960 = vunpack.c.h.b16 %v437
    %v1961 = vunpack.c.l.b16 %v438
    %v1962 = vunpack.c.h.b16 %v438
    %v1963 = vunpack.c.l.b16 %v439
    %v1964 = vunpack.c.h.b16 %v439
    %v1965 = vunpack.c.l.b16 %v440
    %v1966 = vunpack.c.h.b16 %v440
    %v1967 = vunpack.c.l.b16 %v441
    %v1968 = vunpack.c.h.b16 %v441
    %v1969 = vunpack.c.l.b16 %v442
    %v1970 = vunpack.c.h.b16 %v442
    %v1971 = vunpack.c.l.b16 %v443
    %v1972 = vunpack.c.h.b16 %v443
    %v1973 = vunpack.c.l.b16 %v444
    %v1974 = vunpack.c.h.b16 %v444
    %v1975 = vunpack.c.l.b16 %v445
    %v1976 = vunpack.c.h.b16 %v445
    %v1977 = vunpack.c.l.b16 %v446
    %v1978 = vunpack.c.h.b16 %v446
    %v1979 = vunpack.c.l.b16 %v447
    %v1980 = vunpack.c.h.b16 %v447
    %v1981 = vunpack.c.l.b16 %v448
    %v1982 = vunpack.c.h.b16 %v448
    %v1983 = vunpack.c.l.b16 %v449
    %v1984 = vunpack.c.h.b16 %v449
    %v1985 = vunpack.c.l.b16 %v450
    %v1986 = vunpack.c.h.b16 %v450
    %v1987 = vunpack.c.l.b16 %v451
    %v1988 = vunpack.c.h.b16 %v451
    %v1989 = vunpack.c.l.b16 %v452
    %v1990 = vunpack.c.h.b16 %v452
    %v1991 = vunpack.c.l.b16 %v453
    %v1992 = vunpack.c.h.b16 %v453
    %v1993 = vunpack.c.l.b16 %v454
    %v1994 = vunpack.c.h.b16 %v454
    %v1995 = vunpack.c.l.b16 %v455
    %v1996 = vunpack.c.h.b16 %v455
    %v1997 = vunpack.c.l.b16 %v456
    %v1998 = vunpack.c.h.b16 %v456
    %v1999 = vunpack.c.l.b16 %v457
    %v2000 = vunpack.c.h.b16 %v457
    %v2001 = vunpack.c.l.b16 %v458
    %v2002 = vunpack.c.h.b16 %v458
    %v2003 = vunpack.c.l.b16 %v459
    %v2004 = vunpack.c.h.b16 %v459
    %v2005 = vunpack.c.l.b16 %v460
    %v2006 = vunpack.c.h.b16 %v460
    %v2007 = vunpack.c.l.b16 %v461
    %v2008 = vunpack.c.h.b16 %v461
    %v2009 = vunpack.c.l.b16 %v462
    %v2010 = vunpack.c.h.b16 %v462
    %v2011 = vunpack.c.l.b16 %v463
    %v2012 = vunpack.c.h.b16 %v463
    %v2013 = vunpack.c.l.b16 %v464
    %v2014 = vunpack.c.h.b16 %v464
    %v2015 = vunpack.c.l.b16 %v465
    %v2016 = vunpack.c.h.b16 %v465
    %v2017 = vunpack.c.l.b16 %v466
    %v2018 = vunpack.c.h.b16 %v466
    %v2019 = vunpack.c.l.b16 %v467
    %v2020 = vunpack.c.h.b16 %v467
    %v2021 = vunpack.c.l.b16 %v468
    %v2022 = vunpack.c.h.b16 %v468
    %v2023 = vunpack.c.l.b16 %v469
    %v2024 = vunpack.c.h.b16 %v469
    %v2025 = vunpack.c.l.b16 %v470
    %v2026 = vunpack.c.h.b16 %v470
    %v2027 = vunpack.c.l.b16 %v471
    %v2028 = vunpack.c.h.b16 %v471
    %v2029 = vunpack.c.l.b16 %v472
    %v2030 = vunpack.c.h.b16 %v472
    %v2031 = vunpack.c.l.b16 %v473
    %v2032 = vunpack.c.h.b16 %v473
    %v2033 = vunpack.c.l.b16 %v474
    %v2034 = vunpack.c.h.b16 %v474
    %v2035 = vunpack.c.l.b16 %v475
    %v2036 = vunpack.c.h.b16 %v475
    %v2037 = vunpack.c.l.b16 %v476
    %v2038 = vunpack.c.h.b16 %v476
    %v2039 = vunpack.c.l.b16 %v477
    %v2040 = vunpack.c.h.b16 %v477
    %v2041 = vunpack.c.l.b16 %v478
    %v2042 = vunpack.c.h.b16 %v478
    %v2043 = vunpack.c.l.b16 %v479
    %v2044 = vunpack.c.h.b16 %v479
    %v2045 = vunpack.c.l.b16 %v480
    %v2046 = vunpack.c.h.b16 %v480
    %v2047 = vunpack.c.l.b16 %v481
    %v2048 = vunpack.c.h.b16 %v481
    %v2049 = vunpack.c.l.b16 %v482
    %v2050 = vunpack.c.h.b16 %v482
    %v2051 = vunpack.c.l.b16 %v483
    %v2052 = vunpack.c.h.b16 %v483
    %v2053 = vunpack.c.l.b16 %v484
    %v2054 = vunpack.c.h.b16 %v484
    %v2055 = vunpack.c.l.b16 %v485
    %v2056 = vunpack.c.h.b16 %v485
    %v2057 = vunpack.c.l.b16 %v486
    %v2058 = vunpack.c.h.b16 %v486
    %v2059 = vunpack.c.l.b16 %v487
    %v2060 = vunpack.c.h.b16 %v487
    %v2061 = vunpack.c.l.b16 %v488
    %v2062 = vunpack.c.h.b16 %v488
    %v2063 = vunpack.c.l.b16 %v489
    %v2064 = vunpack.c.h.b16 %v489
    %v2065 = vunpack.c.l.b16 %v490
    %v2066 = vunpack.c.h.b16 %v490
    %v2067 = vunpack.c.l.b16 %v491
    %v2068 = vunpack.c.h.b16 %v491
    %v2069 = vunpack.c.l.b16 %v492
    %v2070 = vunpack.c.h.b16 %v492
    %v2071 = vunpack.c.l.b16 %v493
    %v2072 = vunpack.c.h.b16 %v493
    %v2073 = vunpack.c.l.b16 %v494
    %v2074 = vunpack.c.h.b16 %v494
    %v2075 = vunpack.c.l.b16 %v495
    %v2076 = vunpack.c.h.b16 %v495
    %v2077 = vunpack.c.l.b16 %v496
    %v2078 = vunpack.c.h.b16 %v496
    %v2079 = vunpack.c.l.b16 %v497
    %v2080 = vunpack.c.h.b16 %v497
    %v2081 = vunpack.c.l.b16 %v498
    %v2082 = vunpack.c.h.b16 %v498
    %v2083 = vunpack.c.l.b16 %v499
    %v2084 = vunpack.c.h.b16 %v499
    %v2085 = vunpack.c.l.b16 %v500
    %v2086 = vunpack.c.h.b16 %v500
    %v2087 = vunpack.c.l.b16 %v501
    %v2088 = vunpack.c.h.b16 %v501
    %v2089 = vunpack.c.l.b16 %v502
    %v2090 = vunpack.c.h.b16 %v502
    %v2091 = vunpack.c.l.b16 %v503
    %v2092 = vunpack.c.h.b16 %v503
    %v2093 = vunpack.c.l.b16 %v504
    %v2094 = vunpack.c.h.b16 %v504
    %v2095 = vunpack.c.l.b16 %v505
    %v2096 = vunpack.c.h.b16 %v505
    %v2097 = vunpack.c.l.b16 %v506
    %v2098 = vunpack.c.h.b16 %v506
    %v2099 = vunpack.c.l.b16 %v507
    %v2100 = vunpack.c.h.b16 %v507
    %v2101 = vunpack.c.l.b16 %v508
    %v2102 = vunpack.c.h.b16 %v508
    %v2103 = vunpack.c.l.b16 %v509
    %v2104 = vunpack.c.h.b16 %v509
    %v2105 = vunpack.c.l.b16 %v510
    %v2106 = vunpack.c.h.b16 %v510
    %v2107 = vunpack.c.l.b16 %v511
    %v2108 = vunpack.c.h.b16 %v511
    %v2109 = vunpack.c.l.b16 %v512
    %v2110 = vunpack.c.h.b16 %v512
    %v2111 = vunpack.c.l.b16 %v513
    %v2112 = vunpack.c.h.b16 %v513
    %v2113 = vunpack.c.l.b16 %v514
    %v2114 = vunpack.c.h.b16 %v514
    %v2115 = vunpack.c.l.b16 %v515
    %v2116 = vunpack.c.h.b16 %v515
    %v2117 = vunpack.c.l.b16 %v516
    %v2118 = vunpack.c.h.b16 %v516
    %v2119 = vunpack.c.l.b16 %v517
    %v2120 = vunpack.c.h.b16 %v517
    %v2121 = vunpack.c.l.b16 %v518
    %v2122 = vunpack.c.h.b16 %v518
    %v2123 = vunpack.c.l.b16 %v519
    %v2124 = vunpack.c.h.b16 %v519
    %v2125 = vunpack.c.l.b16 %v520
    %v2126 = vunpack.c.h.b16 %v520
    %v2127 = vunpack.c.l.b16 %v521
    %v2128 = vunpack.c.h.b16 %v521
    %v2129 = vunpack.c.l.b16 %v522
    %v2130 = vunpack.c.h.b16 %v522
    %v2131 = vunpack.c.l.b16 %v523
    %v2132 = vunpack.c.h.b16 %v523
    %v2133 = vunpack.c.l.b16 %v524
    %v2134 = vunpack.c.h.b16 %v524
    %v2135 = vunpack.c.l.b16 %v525
    %v2136 = vunpack.c.h.b16 %v525
    %v2137 = vunpack.c.l.b16 %v526
    %v2138 = vunpack.c.h.b16 %v526
    %v2139 = vunpack.c.l.b16 %v527
    %v2140 = vunpack.c.h.b16 %v527
    %v2141 = vunpack.c.l.b16 %v528
    %v2142 = vunpack.c.h.b16 %v528
    %v2143 = vunpack.c.l.b16 %v529
    %v2144 = vunpack.c.h.b16 %v529
    %v2145 = vunpack.c.l.b16 %v530
    %v2146 = vunpack.c.h.b16 %v530
    %v2147 = vunpack.c.l.b16 %v531
    %v2148 = vunpack.c.h.b16 %v531
    %v2149 = vunpack.c.l.b16 %v532
    %v2150 = vunpack.c.h.b16 %v532
    %v2151 = vunpack.c.l.b16 %v533
    %v2152 = vunpack.c.h.b16 %v533
    %v2153 = vunpack.c.l.b16 %v534
    %v2154 = vunpack.c.h.b16 %v534
    %v2155 = vunpack.c.l.b16 %v535
    %v2156 = vunpack.c.h.b16 %v535
    %v2157 = vunpack.c.l.b16 %v536
    %v2158 = vunpack.c.h.b16 %v536
    %v2159 = vunpack.c.l.b16 %v537
    %v2160 = vunpack.c.h.b16 %v537
    %v2161 = vunpack.c.l.b16 %v538
    %v2162 = vunpack.c.h.b16 %v538
    %v2163 = vunpack.c.l.b16 %v539
    %v2164 = vunpack.c.h.b16 %v539
    %v2165 = vunpack.c.l.b16 %v540
    %v2166 = vunpack.c.h.b16 %v540
    %v2167 = vunpack.c.l.b16 %v541
    %v2168 = vunpack.c.h.b16 %v541
    %v2169 = vunpack.c.l.b16 %v542
    %v2170 = vunpack.c.h.b16 %v542
    %v2171 = vunpack.c.l.b16 %v543
    %v2172 = vunpack.c.h.b16 %v543
    %v2173 = vunpack.c.l.b16 %v544
    %v2174 = vunpack.c.h.b16 %v544
    %v2175 = vunpack.c.l.b16 %v545
    %v2176 = vunpack.c.h.b16 %v545
    %v2177 = vunpack.c.l.b16 %v546
    %v2178 = vunpack.c.h.b16 %v546
    %v2179 = vunpack.c.l.b16 %v547
    %v2180 = vunpack.c.h.b16 %v547
    %v2181 = vunpack.c.l.b16 %v548
    %v2182 = vunpack.c.h.b16 %v548
    %v2183 = vunpack.c.l.b16 %v549
    %v2184 = vunpack.c.h.b16 %v549
    %v2185 = vunpack.c.l.b16 %v550
    %v2186 = vunpack.c.h.b16 %v550
    %v2187 = vunpack.c.l.b16 %v551
    %v2188 = vunpack.c.h.b16 %v551
    %v2189 = vunpack.c.l.b16 %v552
    %v2190 = vunpack.c.h.b16 %v552
    %v2191 = vunpack.c.l.b16 %v553
    %v2192 = vunpack.c.h.b16 %v553
    %v2193 = vunpack.c.l.b16 %v554
    %v2194 = vunpack.c.h.b16 %v554
    %v2195 = vunpack.c.l.b16 %v555
    %v2196 = vunpack.c.h.b16 %v555
    %v2197 = vunpack.c.l.b16 %v556
    %v2198 = vunpack.c.h.b16 %v556
    %v2199 = vunpack.c.l.b16 %v557
    %v2200 = vunpack.c.h.b16 %v557
    %v2201 = vunpack.c.l.b16 %v558
    %v2202 = vunpack.c.h.b16 %v558
    %v2203 = vunpack.c.l.b16 %v559
    %v2204 = vunpack.c.h.b16 %v559
    %v2205 = vunpack.c.l.b16 %v560
    %v2206 = vunpack.c.h.b16 %v560
    %v2207 = vunpack.c.l.b16 %v561
    %v2208 = vunpack.c.h.b16 %v561
    %v2209 = vunpack.c.l.b16 %v562
    %v2210 = vunpack.c.h.b16 %v562
    %v2211 = vunpack.c.l.b16 %v563
    %v2212 = vunpack.c.h.b16 %v563
    %v2213 = vunpack.c.l.b16 %v564
    %v2214 = vunpack.c.h.b16 %v564
    %v2215 = vunpack.c.l.b16 %v565
    %v2216 = vunpack.c.h.b16 %v565
    %v2217 = vunpack.c.l.b16 %v566
    %v2218 = vunpack.c.h.b16 %v566
    %v2219 = vunpack.c.l.b16 %v567
    %v2220 = vunpack.c.h.b16 %v567
    %v2221 = vunpack.c.l.b16 %v568
    %v2222 = vunpack.c.h.b16 %v568
    %v2223 = vunpack.c.l.b16 %v569
    %v2224 = vunpack.c.h.b16 %v569
    %v2225 = vunpack.c.l.b16 %v570
    %v2226 = vunpack.c.h.b16 %v570
    %v2227 = vunpack.c.l.b16 %v571
    %v2228 = vunpack.c.h.b16 %v571
    %v2229 = vunpack.c.l.b16 %v572
    %v2230 = vunpack.c.h.b16 %v572
    %v2231 = vunpack.c.l.b16 %v573
    %v2232 = vunpack.c.h.b16 %v573
    %v2233 = vunpack.c.l.b16 %v574
    %v2234 = vunpack.c.h.b16 %v574
    %v2235 = vunpack.c.l.b16 %v575
    %v2236 = vunpack.c.h.b16 %v575
    %v2237 = vunpack.c.l.b16 %v576
    %v2238 = vunpack.c.h.b16 %v576
    %v2239 = vunpack.c.l.b16 %v577
    %v2240 = vunpack.c.h.b16 %v577
    %v2241 = vunpack.c.l.b16 %v578
    %v2242 = vunpack.c.h.b16 %v578
    %v2243 = vunpack.c.l.b16 %v579
    %v2244 = vunpack.c.h.b16 %v579
    %v2245 = vunpack.c.l.b16 %v580
    %v2246 = vunpack.c.h.b16 %v580
    %v2247 = vunpack.c.l.b16 %v581
    %v2248 = vunpack.c.h.b16 %v581
    %v2249 = vunpack.c.l.b16 %v582
    %v2250 = vunpack.c.h.b16 %v582
    %v2251 = vunpack.c.l.b16 %v583
    %v2252 = vunpack.c.h.b16 %v583
    %v2253 = vunpack.c.l.b16 %v584
    %v2254 = vunpack.c.h.b16 %v584
    %v2255 = vunpack.c.l.b16 %v585
    %v2256 = vunpack.c.h.b16 %v585
    %v2257 = vunpack.c.l.b16 %v586
    %v2258 = vunpack.c.h.b16 %v586
    %v2259 = vunpack.c.l.b16 %v587
    %v2260 = vunpack.c.h.b16 %v587
    %v2261 = vunpack.c.l.b16 %v588
    %v2262 = vunpack.c.h.b16 %v588
    %v2263 = vunpack.c.l.b16 %v589
    %v2264 = vunpack.c.h.b16 %v589
    %v2265 = vunpack.c.l.b16 %v590
    %v2266 = vunpack.c.h.b16 %v590
    %v2267 = vunpack.c.l.b16 %v591
    %v2268 = vunpack.c.h.b16 %v591
    %v2269 = vunpack.c.l.b16 %v592
    %v2270 = vunpack.c.h.b16 %v592
    %v2271 = vunpack.c.l.b16 %v593
    %v2272 = vunpack.c.h.b16 %v593
    %v2273 = vunpack.c.l.b16 %v594
    %v2274 = vunpack.c.h.b16 %v594
    %v2275 = vunpack.c.l.b16 %v595
    %v2276 = vunpack.c.h.b16 %v595
    %v2277 = vunpack.c.l.b16 %v596
    %v2278 = vunpack.c.h.b16 %v596
    %v2279 = vunpack.c.l.b16 %v597
    %v2280 = vunpack.c.h.b16 %v597
    %v2281 = vunpack.c.l.b16 %v598
    %v2282 = vunpack.c.h.b16 %v598
    %v2283 = vunpack.c.l.b16 %v599
    %v2284 = vunpack.c.h.b16 %v599
    %v2285 = vunpack.c.l.b16 %v600
    %v2286 = vunpack.c.h.b16 %v600
    %v2287 = vunpack.c.l.b16 %v601
    %v2288 = vunpack.c.h.b16 %v601
    %v2289 = vunpack.c.l.b16 %v602
    %v2290 = vunpack.c.h.b16 %v602
    %v2291 = vunpack.c.l.b16 %v603
    %v2292 = vunpack.c.h.b16 %v603
    %v2293 = vunpack.c.l.b16 %v604
    %v2294 = vunpack.c.h.b16 %v604
    %v2295 = vunpack.c.l.b16 %v605
    %v2296 = vunpack.c.h.b16 %v605
    %v2297 = vunpack.c.l.b16 %v606
    %v2298 = vunpack.c.h.b16 %v606
    %v2299 = vunpack.c.l.b16 %v607
    %v2300 = vunpack.c.h.b16 %v607
    %v2301 = vunpack.c.l.b16 %v608
    %v2302 = vunpack.c.h.b16 %v608
    %v2303 = vunpack.c.l.b16 %v609
    %v2304 = vunpack.c.h.b16 %v609
    %v2305 = vunpack.c.l.b16 %v610
    %v2306 = vunpack.c.h.b16 %v610
    %v2307 = vunpack.c.l.b16 %v611
    %v2308 = vunpack.c.h.b16 %v611
    %v2309 = vunpack.c.l.b16 %v612
    %v2310 = vunpack.c.h.b16 %v612
    %v2311 = vunpack.c.l.b16 %v613
    %v2312 = vunpack.c.h.b16 %v613
    %v2313 = vunpack.c.l.b16 %v614
    %v2314 = vunpack.c.h.b16 %v614
    %v2315 = vunpack.c.l.b16 %v615
    %v2316 = vunpack.c.h.b16 %v615
    %v2317 = vunpack.c.l.b16 %v616
    %v2318 = vunpack.c.h.b16 %v616
    %v2319 = vunpack.c.l.b16 %v617
    %v2320 = vunpack.c.h.b16 %v617
    %v2321 = vunpack.c.l.b16 %v618
    %v2322 = vunpack.c.h.b16 %v618
    %v2323 = vunpack.c.l.b16 %v619
    %v2324 = vunpack.c.h.b16 %v619
    %v2325 = vunpack.c.l.b16 %v620
    %v2326 = vunpack.c.h.b16 %v620
    %v2327 = vunpack.c.l.b16 %v621
    %v2328 = vunpack.c.h.b16 %v621
    %v2329 = vunpack.c.l.b16 %v622
    %v2330 = vunpack.c.h.b16 %v622
    %v2331 = vunpack.c.l.b16 %v623
    %v2332 = vunpack.c.h.b16 %v623
    %v2333 = vunpack.c.l.b16 %v624
    %v2334 = vunpack.c.h.b16 %v624
    %v2335 = vunpack.c.l.b16 %v625
    %v2336 = vunpack.c.h.b16 %v625
    %v2337 = vunpack.c.l.b16 %v626
    %v2338 = vunpack.c.h.b16 %v626
    %v2339 = vunpack.c.l.b16 %v627
    %v2340 = vunpack.c.h.b16 %v627
    %v2341 = vunpack.c.l.b16 %v628
    %v2342 = vunpack.c.h.b16 %v628
    %v2343 = vunpack.c.l.b16 %v629
    %v2344 = vunpack.c.h.b16 %v629
    %v2345 = vunpack.c.l.b16 %v630
    %v2346 = vunpack.c.h.b16 %v630
    %v2347 = vunpack.c.l.b16 %v631
    %v2348 = vunpack.c.h.b16 %v631
    %v2349 = vunpack.c.l.b16 %v632
    %v2350 = vunpack.c.h.b16 %v632
    %v2351 = vunpack.c.l.b16 %v633
    %v2352 = vunpack.c.h.b16 %v633
    %v2353 = vunpack.c.l.b16 %v634
    %v2354 = vunpack.c.h.b16 %v634
    %v2355 = vunpack.c.l.b16 %v635
    %v2356 = vunpack.c.h.b16 %v635
    %v2357 = vunpack.c.l.b16 %v636
    %v2358 = vunpack.c.h.b16 %v636
    %v2359 = vunpack.c.l.b16 %v637
    %v2360 = vunpack.c.h.b16 %v637
    %v2361 = vunpack.c.l.b16 %v638
    %v2362 = vunpack.c.h.b16 %v638
    %v2363 = vunpack.c.l.b16 %v639
    %v2364 = vunpack.c.h.b16 %v639
    %v2365 = vunpack.c.l.b16 %v640
    %v2366 = vunpack.c.h.b16 %v640
    %v2367 = vunpack.c.l.b16 %v641
    %v2368 = vunpack.c.h.b16 %v641
    %v2369 = vunpack.c.l.b16 %v642
    %v2370 = vunpack.c.h.b16 %v642
    %v2371 = vunpack.c.l.b16 %v643
    %v2372 = vunpack.c.h.b16 %v643
    %v2373 = vunpack.c.l.b16 %v644
    %v2374 = vunpack.c.h.b16 %v644
    %v2375 = vunpack.c.l.b16 %v645
    %v2376 = vunpack.c.h.b16 %v645
    %v2377 = vunpack.c.l.b16 %v646
    %v2378 = vunpack.c.h.b16 %v646
    %v2379 = vunpack.c.l.b16 %v647
    %v2380 = vunpack.c.h.b16 %v647
    %v2381 = vunpack.c.l.b16 %v648
    %v2382 = vunpack.c.h.b16 %v648
    %v2383 = vunpack.c.l.b16 %v649
    %v2384 = vunpack.c.h.b16 %v649
    %v2385 = vunpack.c.l.b16 %v650
    %v2386 = vunpack.c.h.b16 %v650
    %v2387 = vunpack.c.l.b16 %v651
    %v2388 = vunpack.c.h.b16 %v651
    %v2389 = vunpack.c.l.b16 %v652
    %v2390 = vunpack.c.h.b16 %v652
    %v2391 = vunpack.c.l.b16 %v653
    %v2392 = vunpack.c.h.b16 %v653
    %v2393 = vunpack.c.l.b16 %v654
    %v2394 = vunpack.c.h.b16 %v654
    %v2395 = vunpack.c.l.b16 %v655
    %v2396 = vunpack.c.h.b16 %v655
    %v2397 = vunpack.c.l.b16 %v656
    %v2398 = vunpack.c.h.b16 %v656
    %v2399 = vunpack.c.l.b16 %v657
    %v2400 = vunpack.c.h.b16 %v657
    %v2401 = vunpack.c.l.b16 %v658
    %v2402 = vunpack.c.h.b16 %v658
    %v2403 = vunpack.c.l.b16 %v659
    %v2404 = vunpack.c.h.b16 %v659
    %v2405 = vunpack.c.l.b16 %v660
    %v2406 = vunpack.c.h.b16 %v660
    %v2407 = vunpack.c.l.b16 %v661
    %v2408 = vunpack.c.h.b16 %v661
    %v2409 = vunpack.c.l.b16 %v662
    %v2410 = vunpack.c.h.b16 %v662
    %v2411 = vunpack.c.l.b16 %v663
    %v2412 = vunpack.c.h.b16 %v663
    %v2413 = vunpack.c.l.b16 %v664
    %v2414 = vunpack.c.h.b16 %v664
    %v2415 = vunpack.c.l.b16 %v665
    %v2416 = vunpack.c.h.b16 %v665
    %v2417 = vunpack.c.l.b16 %v666
    %v2418 = vunpack.c.h.b16 %v666
    %v2419 = vunpack.c.l.b16 %v667
    %v2420 = vunpack.c.h.b16 %v667
    %v2421 = vunpack.c.l.b16 %v668
    %v2422 = vunpack.c.h.b16 %v668
    %v2423 = vunpack.c.l.b16 %v669
    %v2424 = vunpack.c.h.b16 %v669
    %v2425 = vunpack.c.l.b16 %v670
    %v2426 = vunpack.c.h.b16 %v670
    %v2427 = vunpack.c.l.b16 %v671
    %v2428 = vunpack.c.h.b16 %v671
    %v2429 = vunpack.c.l.b16 %v672
    %v2430 = vunpack.c.h.b16 %v672
    %v2431 = vunpack.c.l.b16 %v673
    %v2432 = vunpack.c.h.b16 %v673
    %v2433 = vunpack.c.l.b16 %v674
    %v2434 = vunpack.c.h.b16 %v674
    %v2435 = vunpack.c.l.b16 %v675
    %v2436 = vunpack.c.h.b16 %v675
    %v2437 = vunpack.c.l.b16 %v676
    %v2438 = vunpack.c.h.b16 %v676
    %v2439 = vunpack.c.l.b16 %v677
    %v2440 = vunpack.c.h.b16 %v677
    %v2441 = vunpack.c.l.b16 %v678
    %v2442 = vunpack.c.h.b16 %v678
    %v2443 = vunpack.c.l.b16 %v679
    %v2444 = vunpack.c.h.b16 %v679
    %v2445 = vunpack.c.l.b16 %v680
    %v2446 = vunpack.c.h.b16 %v680
    %v2447 = vunpack.c.l.b16 %v681
    %v2448 = vunpack.c.h.b16 %v681
    %v2449 = vunpack.c.l.b16 %v682
    %v2450 = vunpack.c.h.b16 %v682
    %v2451 = vunpack.c.l.b16 %v683
    %v2452 = vunpack.c.h.b16 %v683
    %v2453 = vunpack.c.l.b16 %v684
    %v2454 = vunpack.c.h.b16 %v684
    %v2455 = vunpack.c.l.b16 %v685
    %v2456 = vunpack.c.h.b16 %v685
    %v2457 = vunpack.c.l.b16 %v686
    %v2458 = vunpack.c.h.b16 %v686
    %v2459 = vunpack.c.l.b16 %v687
    %v2460 = vunpack.c.h.b16 %v687
    %v2461 = vunpack.c.l.b16 %v688
    %v2462 = vunpack.c.h.b16 %v688
    %v2463 = vunpack.c.l.b16 %v689
    %v2464 = vunpack.c.h.b16 %v689
    %v2465 = vunpack.c.l.b16 %v690
    %v2466 = vunpack.c.h.b16 %v690
    %v2467 = vunpack.c.l.b16 %v691
    %v2468 = vunpack.c.h.b16 %v691
    %v2469 = vunpack.c.l.b16 %v692
    %v2470 = vunpack.c.h.b16 %v692
    %v2471 = vunpack.c.l.b16 %v693
    %v2472 = vunpack.c.h.b16 %v693
    %v2473 = vunpack.c.l.b16 %v694
    %v2474 = vunpack.c.h.b16 %v694
    %v2475 = vunpack.c.l.b16 %v695
    %v2476 = vunpack.c.h.b16 %v695
    %v2477 = vunpack.c.l.b16 %v696
    %v2478 = vunpack.c.h.b16 %v696
    %v2479 = vunpack.c.l.b16 %v697
    %v2480 = vunpack.c.h.b16 %v697
    %v2481 = vunpack.c.l.b16 %v698
    %v2482 = vunpack.c.h.b16 %v698
    %v2483 = vunpack.c.l.b16 %v699
    %v2484 = vunpack.c.h.b16 %v699
    %v2485 = vunpack.c.l.b16 %v700
    %v2486 = vunpack.c.h.b16 %v700
    %v2487 = vunpack.c.l.b16 %v701
    %v2488 = vunpack.c.h.b16 %v701
    %v2489 = vunpack.c.l.b16 %v702
    %v2490 = vunpack.c.h.b16 %v702
    %v2491 = vunpack.c.l.b16 %v703
    %v2492 = vunpack.c.h.b16 %v703
    %v2493 = vunpack.c.l.b16 %v704
    %v2494 = vunpack.c.h.b16 %v704
    %v2495 = vunpack.c.l.b16 %v705
    %v2496 = vunpack.c.h.b16 %v705
    %v2497 = vunpack.c.l.b16 %v706
    %v2498 = vunpack.c.h.b16 %v706
    %v2499 = vunpack.c.l.b16 %v707
    %v2500 = vunpack.c.h.b16 %v707
    %v2501 = vunpack.c.l.b16 %v708
    %v2502 = vunpack.c.h.b16 %v708
    %v2503 = vunpack.c.l.b16 %v709
    %v2504 = vunpack.c.h.b16 %v709
    %v2505 = vunpack.c.l.b16 %v710
    %v2506 = vunpack.c.h.b16 %v710
    %v2507 = vunpack.c.l.b16 %v711
    %v2508 = vunpack.c.h.b16 %v711
    %v2509 = vunpack.c.l.b16 %v712
    %v2510 = vunpack.c.h.b16 %v712
    %v2511 = vunpack.c.l.b16 %v713
    %v2512 = vunpack.c.h.b16 %v713
    %v2513 = vunpack.c.l.b16 %v714
    %v2514 = vunpack.c.h.b16 %v714
    %v2515 = vunpack.c.l.b16 %v715
    %v2516 = vunpack.c.h.b16 %v715
    %v2517 = vunpack.c.l.b16 %v716
    %v2518 = vunpack.c.h.b16 %v716
    %v2519 = vunpack.c.l.b16 %v717
    %v2520 = vunpack.c.h.b16 %v717
    %v2521 = vunpack.c.l.b16 %v718
    %v2522 = vunpack.c.h.b16 %v718
    %v2523 = vunpack.c.l.b16 %v719
    %v2524 = vunpack.c.h.b16 %v719
    %v2525 = vunpack.c.l.b16 %v720
    %v2526 = vunpack.c.h.b16 %v720
    %v2527 = vunpack.c.l.b16 %v721
    %v2528 = vunpack.c.h.b16 %v721
    %v2529 = vunpack.c.l.b16 %v722
    %v2530 = vunpack.c.h.b16 %v722
    %v2531 = vunpack.c.l.b16 %v723
    %v2532 = vunpack.c.h.b16 %v723
    %v2533 = vunpack.c.l.b16 %v724
    %v2534 = vunpack.c.h.b16 %v724
    %v2535 = vunpack.c.l.b16 %v725
    %v2536 = vunpack.c.h.b16 %v725
    %v2537 = vunpack.c.l.b16 %v726
    %v2538 = vunpack.c.h.b16 %v726
    %v2539 = vunpack.c.l.b16 %v727
    %v2540 = vunpack.c.h.b16 %v727
    %v2541 = vunpack.c.l.b16 %v728
    %v2542 = vunpack.c.h.b16 %v728
    %v2543 = vunpack.c.l.b16 %v729
    %v2544 = vunpack.c.h.b16 %v729
    %v2545 = vunpack.c.l.b16 %v730
    %v2546 = vunpack.c.h.b16 %v730
    %v2547 = vunpack.c.l.b16 %v731
    %v2548 = vunpack.c.h.b16 %v731
    %v2549 = vunpack.c.l.b16 %v732
    %v2550 = vunpack.c.h.b16 %v732
    %v2551 = vunpack.c.l.b16 %v733
    %v2552 = vunpack.c.h.b16 %v733
    %v2553 = vunpack.c.l.b16 %v734
    %v2554 = vunpack.c.h.b16 %v734
    %v2555 = vunpack.c.l.b16 %v735
    %v2556 = vunpack.c.h.b16 %v735
    %v2557 = vunpack.c.l.b16 %v736
    %v2558 = vunpack.c.h.b16 %v736
    %v2559 = vunpack.c.l.b16 %v737
    %v2560 = vunpack.c.h.b16 %v737
    %v2561 = vunpack.c.l.b16 %v738
    %v2562 = vunpack.c.h.b16 %v738
    %v2563 = vunpack.c.l.b16 %v739
    %v2564 = vunpack.c.h.b16 %v739
    %v2565 = vunpack.c.l.b16 %v740
    %v2566 = vunpack.c.h.b16 %v740
    %v2567 = vunpack.c.l.b16 %v741
    %v2568 = vunpack.c.h.b16 %v741
    %v2569 = vunpack.c.l.b16 %v742
    %v2570 = vunpack.c.h.b16 %v742
    %v2571 = vpack.c.b16 %v1423, %v1419
    %v2572 = vpack.c.b16 %v1424, %v1420
    %v2573 = vpack.c.b16 %v1425, %v1421
    %v2574 = vpack.c.b16 %v1426, %v1422
    %v2575 = vpack.c.b16 %v1431, %v1427
    %v2576 = vpack.c.b16 %v1432, %v1428
    %v2577 = vpack.c.b16 %v1433, %v1429
    %v2578 = vpack.c.b16 %v1434, %v1430
    %v2579 = vpack.c.b16 %v1439, %v1435
    %v2580 = vpack.c.b16 %v1440, %v1436
    %v2581 = vpack.c.b16 %v1441, %v1437
    %v2582 = vpack.c.b16 %v1442, %v1438
    %v2583 = vpack.c.b16 %v1447, %v1443
    %v2584 = vpack.c.b16 %v1448, %v1444
    %v2585 = vpack.c.b16 %v1449, %v1445
    %v2586 = vpack.c.b16 %v1450, %v1446
    %v2587 = vpack.c.b16 %v1455, %v1451
    %v2588 = vpack.c.b16 %v1456, %v1452
    %v2589 = vpack.c.b16 %v1457, %v1453
    %v2590 = vpack.c.b16 %v1458, %v1454
    %v2591 = vpack.c.b16 %v1463, %v1459
    %v2592 = vpack.c.b16 %v1464, %v1460
    %v2593 = vpack.c.b16 %v1465, %v1461
    %v2594 = vpack.c.b16 %v1466, %v1462
    %v2595 = vpack.c.b16 %v1471, %v1467
    %v2596 = vpack.c.b16 %v1472, %v1468
    %v2597 = vpack.c.b16 %v1473, %v1469
    %v2598 = vpack.c.b16 %v1474, %v1470
    %v2599 = vpack.c.b16 %v1479, %v1475
    %v2600 = vpack.c.b16 %v1480, %v1476
    %v2601 = vpack.c.b16 %v1481, %v1477
    %v2602 = vpack.c.b16 %v1482, %v1478
    %v2603 = vpack.c.b16 %v1487, %v1483
    %v2604 = vpack.c.b16 %v1488, %v1484
    %v2605 = vpack.c.b16 %v1489, %v1485
    %v2606 = vpack.c.b16 %v1490, %v1486
    %v2607 = vpack.c.b16 %v1495, %v1491
    %v2608 = vpack.c.b16 %v1496, %v1492
    %v2609 = vpack.c.b16 %v1497, %v1493
    %v2610 = vpack.c.b16 %v1498, %v1494
    %v2611 = vpack.c.b16 %v1503, %v1499
    %v2612 = vpack.c.b16 %v1504, %v1500
    %v2613 = vpack.c.b16 %v1505, %v1501
    %v2614 = vpack.c.b16 %v1506, %v1502
    %v2615 = vpack.c.b16 %v1511, %v1507
    %v2616 = vpack.c.b16 %v1512, %v1508
    %v2617 = vpack.c.b16 %v1513, %v1509
    %v2618 = vpack.c.b16 %v1514, %v1510
    %v2619 = vpack.c.b16 %v1519, %v1515
    %v2620 = vpack.c.b16 %v1520, %v1516
    %v2621 = vpack.c.b16 %v1521, %v1517
    %v2622 = vpack.c.b16 %v1522, %v1518
    %v2623 = vpack.c.b16 %v1527, %v1523
    %v2624 = vpack.c.b16 %v1528, %v1524
    %v2625 = vpack.c.b16 %v1529, %v1525
    %v2626 = vpack.c.b16 %v1530, %v1526
    %v2627 = vpack.c.b16 %v1535, %v1531
    %v2628 = vpack.c.b16 %v1536, %v1532
    %v2629 = vpack.c.b16 %v1537, %v1533
    %v2630 = vpack.c.b16 %v1538, %v1534
    %v2631 = vpack.c.b16 %v1543, %v1539
    %v2632 = vpack.c.b16 %v1544, %v1540
    %v2633 = vpack.c.b16 %v1545, %v1541
    %v2634 = vpack.c.b16 %v1546, %v1542
    %v2635 = vpack.c.b16 %v1551, %v1547
    %v2636 = vpack.c.b16 %v1552, %v1548
    %v2637 = vpack.c.b16 %v1553, %v1549
    %v2638 = vpack.c.b16 %v1554, %v1550
    %v2639 = vpack.c.b16 %v1559, %v1555
    %v2640 = vpack.c.b16 %v1560, %v1556
    %v2641 = vpack.c.b16 %v1561, %v1557
    %v2642 = vpack.c.b16 %v1562, %v1558
    %v2643 = vpack.c.b16 %v1567, %v1563
    %v2644 = vpack.c.b16 %v1568, %v1564
    %v2645 = vpack.c.b16 %v1569, %v1565
    %v2646 = vpack.c.b16 %v1570, %v1566
    %v2647 = vpack.c.b16 %v1575, %v1571
    %v2648 = vpack.c.b16 %v1576, %v1572
    %v2649 = vpack.c.b16 %v1577, %v1573
    %v2650 = vpack.c.b16 %v1578, %v1574
    %v2651 = vpack.c.b16 %v1583, %v1579
    %v2652 = vpack.c.b16 %v1584, %v1580
    %v2653 = vpack.c.b16 %v1585, %v1581
    %v2654 = vpack.c.b16 %v1586, %v1582
    %v2655 = vpack.c.b16 %v1591, %v1587
    %v2656 = vpack.c.b16 %v1592, %v1588
    %v2657 = vpack.c.b16 %v1593, %v1589
    %v2658 = vpack.c.b16 %v1594, %v1590
    %v2659 = vpack.c.b16 %v1599, %v1595
    %v2660 = vpack.c.b16 %v1600, %v1596
    %v2661 = vpack.c.b16 %v1601, %v1597
    %v2662 = vpack.c.b16 %v1602, %v1598
    %v2663 = vpack.c.b16 %v1607, %v1603
    %v2664 = vpack.c.b16 %v1608, %v1604
    %v2665 = vpack.c.b16 %v1609, %v1605
    %v2666 = vpack.c.b16 %v1610, %v1606
    %v2667 = vpack.c.b16 %v1615, %v1611
    %v2668 = vpack.c.b16 %v1616, %v1612
    %v2669 = vpack.c.b16 %v1617, %v1613
    %v2670 = vpack.c.b16 %v1618, %v1614
    %v2671 = vpack.c.b16 %v1623, %v1619
    %v2672 = vpack.c.b16 %v1624, %v1620
    %v2673 = vpack.c.b16 %v1625, %v1621
    %v2674 = vpack.c.b16 %v1626, %v1622
    %v2675 = vpack.c.b16 %v1631, %v1627
    %v2676 = vpack.c.b16 %v1632, %v1628
    %v2677 = vpack.c.b16 %v1633, %v1629
    %v2678 = vpack.c.b16 %v1634, %v1630
    %v2679 = vpack.c.b16 %v1639, %v1635
    %v2680 = vpack.c.b16 %v1640, %v1636
    %v2681 = vpack.c.b16 %v1641, %v1637
    %v2682 = vpack.c.b16 %v1642, %v1638
    %v2683 = vpack.c.b16 %v1647, %v1643
    %v2684 = vpack.c.b16 %v1648, %v1644
    %v2685 = vpack.c.b16 %v1649, %v1645
    %v2686 = vpack.c.b16 %v1650, %v1646
    %v2687 = vpack.c.b16 %v1655, %v1651
    %v2688 = vpack.c.b16 %v1656, %v1652
    %v2689 = vpack.c.b16 %v1657, %v1653
    %v2690 = vpack.c.b16 %v1658, %v1654
    %v2691 = vpack.c.b16 %v1663, %v1659
    %v2692 = vpack.c.b16 %v1664, %v1660
    %v2693 = vpack.c.b16 %v1665, %v1661
    %v2694 = vpack.c.b16 %v1666, %v1662
    %v2695 = vpack.c.b16 %v1671, %v1667
    %v2696 = vpack.c.b16 %v1672, %v1668
    %v2697 = vpack.c.b16 %v1673, %v1669
    %v2698 = vpack.c.b16 %v1674, %v1670
    %v2699 = vpack.c.b16 %v1679, %v1675
    %v2700 = vpack.c.b16 %v1680, %v1676
    %v2701 = vpack.c.b16 %v1681, %v1677
    %v2702 = vpack.c.b16 %v1682, %v1678
    %v2703 = vpack.c.b16 %v1687, %v1683
    %v2704 = vpack.c.b16 %v1688, %v1684
    %v2705 = vpack.c.b16 %v1689, %v1685
    %v2706 = vpack.c.b16 %v1690, %v1686
    %v2707 = vpack.c.b16 %v1695, %v1691
    %v2708 = vpack.c.b16 %v1696, %v1692
    %v2709 = vpack.c.b16 %v1697, %v1693
    %v2710 = vpack.c.b16 %v1698, %v1694
    %v2711 = vpack.c.b16 %v1703, %v1699
    %v2712 = vpack.c.b16 %v1704, %v1700
    %v2713 = vpack.c.b16 %v1705, %v1701
    %v2714 = vpack.c.b16 %v1706, %v1702
    %v2715 = vpack.c.b16 %v1711, %v1707
    %v2716 = vpack.c.b16 %v1712, %v1708
    %v2717 = vpack.c.b16 %v1713, %v1709
    %v2718 = vpack.c.b16 %v1714, %v1710
    %v2719 = vpack.c.b16 %v1719, %v1715
    %v2720 = vpack.c.b16 %v1720, %v1716
    %v2721 = vpack.c.b16 %v1721, %v1717
    %v2722 = vpack.c.b16 %v1722, %v1718
    %v2723 = vpack.c.b16 %v1727, %v1723
    %v2724 = vpack.c.b16 %v1728, %v1724
    %v2725 = vpack.c.b16 %v1729, %v1725
    %v2726 = vpack.c.b16 %v1730, %v1726
    %v2727 = vpack.c.b16 %v1735, %v1731
    %v2728 = vpack.c.b16 %v1736, %v1732
    %v2729 = vpack.c.b16 %v1737, %v1733
    %v2730 = vpack.c.b16 %v1738, %v1734
    %v2731 = vpack.c.b16 %v1743, %v1739
    %v2732 = vpack.c.b16 %v1744, %v1740
    %v2733 = vpack.c.b16 %v1745, %v1741
    %v2734 = vpack.c.b16 %v1746, %v1742
    %v2735 = vpack.c.b16 %v1751, %v1747
    %v2736 = vpack.c.b16 %v1752, %v1748
    %v2737 = vpack.c.b16 %v1753, %v1749
    %v2738 = vpack.c.b16 %v1754, %v1750
    %v2739 = vpack.c.b16 %v1759, %v1755
    %v2740 = vpack.c.b16 %v1760, %v1756
    %v2741 = vpack.c.b16 %v1761, %v1757
    %v2742 = vpack.c.b16 %v1762, %v1758
    %v2743 = vpack.c.b16 %v1767, %v1763
    %v2744 = vpack.c.b16 %v1768, %v1764
    %v2745 = vpack.c.b16 %v1769, %v1765
    %v2746 = vpack.c.b16 %v1770, %v1766
    %v2747 = vpack.c.b16 %v1775, %v1771
    %v2748 = vpack.c.b16 %v1776, %v1772
    %v2749 = vpack.c.b16 %v1777, %v1773
    %v2750 = vpack.c.b16 %v1778, %v1774
    %v2751 = vpack.c.b16 %v1783, %v1779
    %v2752 = vpack.c.b16 %v1784, %v1780
    %v2753 = vpack.c.b16 %v1785, %v1781
    %v2754 = vpack.c.b16 %v1786, %v1782
    %v2755 = vpack.c.b16 %v1791, %v1787
    %v2756 = vpack.c.b16 %v1792, %v1788
    %v2757 = vpack.c.b16 %v1793, %v1789
    %v2758 = vpack.c.b16 %v1794, %v1790
    %v2759 = vpack.c.b16 %v1799, %v1795
    %v2760 = vpack.c.b16 %v1800, %v1796
    %v2761 = vpack.c.b16 %v1801, %v1797
    %v2762 = vpack.c.b16 %v1802, %v1798
    %v2763 = vpack.c.b16 %v1807, %v1803
    %v2764 = vpack.c.b16 %v1808, %v1804
    %v2765 = vpack.c.b16 %v1809, %v1805
    %v2766 = vpack.c.b16 %v1810, %v1806
    %v2767 = vpack.c.b16 %v1815, %v1811
    %v2768 = vpack.c.b16 %v1816, %v1812
    %v2769 = vpack.c.b16 %v1817, %v1813
    %v2770 = vpack.c.b16 %v1818, %v1814
    %v2771 = vpack.c.b16 %v1823, %v1819
    %v2772 = vpack.c.b16 %v1824, %v1820
    %v2773 = vpack.c.b16 %v1825, %v1821
    %v2774 = vpack.c.b16 %v1826, %v1822
    %v2775 = vpack.c.b16 %v1831, %v1827
    %v2776 = vpack.c.b16 %v1832, %v1828
    %v2777 = vpack.c.b16 %v1833, %v1829
    %v2778 = vpack.c.b16 %v1834, %v1830
    %v2779 = vpack.c.b16 %v1839, %v1835
    %v2780 = vpack.c.b16 %v1840, %v1836
    %v2781 = vpack.c.b16 %v1841, %v1837
    %v2782 = vpack.c.b16 %v1842, %v1838
    %v2783 = vpack.c.b16 %v1847, %v1843
    %v2784 = vpack.c.b16 %v1848, %v1844
    %v2785 = vpack.c.b16 %v1849, %v1845
    %v2786 = vpack.c.b16 %v1850, %v1846
    %v2787 = vpack.c.b16 %v1855, %v1851
    %v2788 = vpack.c.b16 %v1856, %v1852
    %v2789 = vpack.c.b16 %v1857, %v1853
    %v2790 = vpack.c.b16 %v1858, %v1854
    %v2791 = vpack.c.b16 %v1863, %v1859
    %v2792 = vpack.c.b16 %v1864, %v1860
    %v2793 = vpack.c.b16 %v1865, %v1861
    %v2794 = vpack.c.b16 %v1866, %v1862
    %v2795 = vpack.c.b16 %v1871, %v1867
    %v2796 = vpack.c.b16 %v1872, %v1868
    %v2797 = vpack.c.b16 %v1873, %v1869
    %v2798 = vpack.c.b16 %v1874, %v1870
    %v2799 = vpack.c.b16 %v1879, %v1875
    %v2800 = vpack.c.b16 %v1880, %v1876
    %v2801 = vpack.c.b16 %v1881, %v1877
    %v2802 = vpack.c.b16 %v1882, %v1878
    %v2803 = vpack.c.b16 %v1887, %v1883
    %v2804 = vpack.c.b16 %v1888, %v1884
    %v2805 = vpack.c.b16 %v1889, %v1885
    %v2806 = vpack.c.b16 %v1890, %v1886
    %v2807 = vpack.c.b16 %v1895, %v1891
    %v2808 = vpack.c.b16 %v1896, %v1892
    %v2809 = vpack.c.b16 %v1897, %v1893
    %v2810 = vpack.c.b16 %v1898, %v1894
    %v2811 = vpack.c.b16 %v1903, %v1899
    %v2812 = vpack.c.b16 %v1904, %v1900
    %v2813 = vpack.c.b16 %v1905, %v1901
    %v2814 = vpack.c.b16 %v1906, %v1902
    %v2815 = vpack.c.b16 %v1911, %v1907
    %v2816 = vpack.c.b16 %v1912, %v1908
    %v2817 = vpack.c.b16 %v1913, %v1909
    %v2818 = vpack.c.b16 %v1914, %v1910
    %v2819 = vpack.c.b16 %v1919, %v1915
    %v2820 = vpack.c.b16 %v1920, %v1916
    %v2821 = vpack.c.b16 %v1921, %v1917
    %v2822 = vpack.c.b16 %v1922, %v1918
    %v2823 = vpack.c.b16 %v1927, %v1923
    %v2824 = vpack.c.b16 %v1928, %v1924
    %v2825 = vpack.c.b16 %v1929, %v1925
    %v2826 = vpack.c.b16 %v1930, %v1926
    %v2827 = vpack.c.b16 %v1935, %v1931
    %v2828 = vpack.c.b16 %v1936, %v1932
    %v2829 = vpack.c.b16 %v1937, %v1933
    %v2830 = vpack.c.b16 %v1938, %v1934
    %v2831 = vpack.c.b16 %v1943, %v1939
    %v2832 = vpack.c.b16 %v1944, %v1940
    %v2833 = vpack.c.b16 %v1945, %v1941
    %v2834 = vpack.c.b16 %v1946, %v1942
    %v2835 = vpack.c.b16 %v1951, %v1947
    %v2836 = vpack.c.b16 %v1952, %v1948
    %v2837 = vpack.c.b16 %v1953, %v1949
    %v2838 = vpack.c.b16 %v1954, %v1950
    %v2839 = vpack.c.b16 %v1959, %v1955
    %v2840 = vpack.c.b16 %v1960, %v1956
    %v2841 = vpack.c.b16 %v1961, %v1957
    %v2842 = vpack.c.b16 %v1962, %v1958
    %v2843 = vpack.c.b16 %v1967, %v1963
    %v2844 = vpack.c.b16 %v1968, %v1964
    %v2845 = vpack.c.b16 %v1969, %v1965
    %v2846 = vpack.c.b16 %v1970, %v1966
    %v2847 = vpack.c.b16 %v1975, %v1971
    %v2848 = vpack.c.b16 %v1976, %v1972
    %v2849 = vpack.c.b16 %v1977, %v1973
    %v2850 = vpack.c.b16 %v1978, %v1974
    %v2851 = vpack.c.b16 %v1983, %v1979
    %v2852 = vpack.c.b16 %v1984, %v1980
    %v2853 = vpack.c.b16 %v1985, %v1981
    %v2854 = vpack.c.b16 %v1986, %v1982
    %v2855 = vpack.c.b16 %v1991, %v1987
    %v2856 = vpack.c.b16 %v1992, %v1988
    %v2857 = vpack.c.b16 %v1993, %v1989
    %v2858 = vpack.c.b16 %v1994, %v1990
    %v2859 = vpack.c.b16 %v1999, %v1995
    %v2860 = vpack.c.b16 %v2000, %v1996
    %v2861 = vpack.c.b16 %v2001, %v1997
    %v2862 = vpack.c.b16 %v2002, %v1998
    %v2863 = vpack.c.b16 %v2007, %v2003
    %v2864 = vpack.c.b16 %v2008, %v2004
    %v2865 = vpack.c.b16 %v2009, %v2005
    %v2866 = vpack.c.b16 %v2010, %v2006
    %v2867 = vpack.c.b16 %v2015, %v2011
    %v2868 = vpack.c.b16 %v2016, %v2012
    %v2869 = vpack.c.b16 %v2017, %v2013
    %v2870 = vpack.c.b16 %v2018, %v2014
    %v2871 = vpack.c.b16 %v2023, %v2019
    %v2872 = vpack.c.b16 %v2024, %v2020
    %v2873 = vpack.c.b16 %v2025, %v2021
    %v2874 = vpack.c.b16 %v2026, %v2022
    %v2875 = vpack.c.b16 %v2031, %v2027
    %v2876 = vpack.c.b16 %v2032, %v2028
    %v2877 = vpack.c.b16 %v2033, %v2029
    %v2878 = vpack.c.b16 %v2034, %v2030
    %v2879 = vpack.c.b16 %v2039, %v2035
    %v2880 = vpack.c.b16 %v2040, %v2036
    %v2881 = vpack.c.b16 %v2041, %v2037
    %v2882 = vpack.c.b16 %v2042, %v2038
    %v2883 = vpack.c.b16 %v2047, %v2043
    %v2884 = vpack.c.b16 %v2048, %v2044
    %v2885 = vpack.c.b16 %v2049, %v2045
    %v2886 = vpack.c.b16 %v2050, %v2046
    %v2887 = vpack.c.b16 %v2055, %v2051
    %v2888 = vpack.c.b16 %v2056, %v2052
    %v2889 = vpack.c.b16 %v2057, %v2053
    %v2890 = vpack.c.b16 %v2058, %v2054
    %v2891 = vpack.c.b16 %v2063, %v2059
    %v2892 = vpack.c.b16 %v2064, %v2060
    %v2893 = vpack.c.b16 %v2065, %v2061
    %v2894 = vpack.c.b16 %v2066, %v2062
    %v2895 = vpack.c.b16 %v2071, %v2067
    %v2896 = vpack.c.b16 %v2072, %v2068
    %v2897 = vpack.c.b16 %v2073, %v2069
    %v2898 = vpack.c.b16 %v2074, %v2070
    %v2899 = vpack.c.b16 %v2079, %v2075
    %v2900 = vpack.c.b16 %v2080, %v2076
    %v2901 = vpack.c.b16 %v2081, %v2077
    %v2902 = vpack.c.b16 %v2082, %v2078
    %v2903 = vpack.c.b16 %v2087, %v2083
    %v2904 = vpack.c.b16 %v2088, %v2084
    %v2905 = vpack.c.b16 %v2089, %v2085
    %v2906 = vpack.c.b16 %v2090, %v2086
    %v2907 = vpack.c.b16 %v2095, %v2091
    %v2908 = vpack.c.b16 %v2096, %v2092
    %v2909 = vpack.c.b16 %v2097, %v2093
    %v2910 = vpack.c.b16 %v2098, %v2094
    %v2911 = vpack.c.b16 %v2103, %v2099
    %v2912 = vpack.c.b16 %v2104, %v2100
    %v2913 = vpack.c.b16 %v2105, %v2101
    %v2914 = vpack.c.b16 %v2106, %v2102
    %v2915 = vpack.c.b16 %v2111, %v2107
    %v2916 = vpack.c.b16 %v2112, %v2108
    %v2917 = vpack.c.b16 %v2113, %v2109
    %v2918 = vpack.c.b16 %v2114, %v2110
    %v2919 = vpack.c.b16 %v2119, %v2115
    %v2920 = vpack.c.b16 %v2120, %v2116
    %v2921 = vpack.c.b16 %v2121, %v2117
    %v2922 = vpack.c.b16 %v2122, %v2118
    %v2923 = vpack.c.b16 %v2127, %v2123
    %v2924 = vpack.c.b16 %v2128, %v2124
    %v2925 = vpack.c.b16 %v2129, %v2125
    %v2926 = vpack.c.b16 %v2130, %v2126
    %v2927 = vpack.c.b16 %v2135, %v2131
    %v2928 = vpack.c.b16 %v2136, %v2132
    %v2929 = vpack.c.b16 %v2137, %v2133
    %v2930 = vpack.c.b16 %v2138, %v2134
    %v2931 = vpack.c.b16 %v2143, %v2139
    %v2932 = vpack.c.b16 %v2144, %v2140
    %v2933 = vpack.c.b16 %v2145, %v2141
    %v2934 = vpack.c.b16 %v2146, %v2142
    %v2935 = vpack.c.b16 %v2151, %v2147
    %v2936 = vpack.c.b16 %v2152, %v2148
    %v2937 = vpack.c.b16 %v2153, %v2149
    %v2938 = vpack.c.b16 %v2154, %v2150
    %v2939 = vpack.c.b16 %v2159, %v2155
    %v2940 = vpack.c.b16 %v2160, %v2156
    %v2941 = vpack.c.b16 %v2161, %v2157
    %v2942 = vpack.c.b16 %v2162, %v2158
    %v2943 = vpack.c.b16 %v2167, %v2163
    %v2944 = vpack.c.b16 %v2168, %v2164
    %v2945 = vpack.c.b16 %v2169, %v2165
    %v2946 = vpack.c.b16 %v2170, %v2166
    %v2947 = vpack.c.b16 %v2175, %v2171
    %v2948 = vpack.c.b16 %v2176, %v2172
    %v2949 = vpack.c.b16 %v2177, %v2173
    %v2950 = vpack.c.b16 %v2178, %v2174
    %v2951 = vpack.c.b16 %v2183, %v2179
    %v2952 = vpack.c.b16 %v2184, %v2180
    %v2953 = vpack.c.b16 %v2185, %v2181
    %v2954 = vpack.c.b16 %v2186, %v2182
    %v2955 = vpack.c.b16 %v2191, %v2187
    %v2956 = vpack.c.b16 %v2192, %v2188
    %v2957 = vpack.c.b16 %v2193, %v2189
    %v2958 = vpack.c.b16 %v2194, %v2190
    %v2959 = vpack.c.b16 %v2199, %v2195
    %v2960 = vpack.c.b16 %v2200, %v2196
    %v2961 = vpack.c.b16 %v2201, %v2197
    %v2962 = vpack.c.b16 %v2202, %v2198
    %v2963 = vpack.c.b16 %v2207, %v2203
    %v2964 = vpack.c.b16 %v2208, %v2204
    %v2965 = vpack.c.b16 %v2209, %v2205
    %v2966 = vpack.c.b16 %v2210, %v2206
    %v2967 = vpack.c.b16 %v2215, %v2211
    %v2968 = vpack.c.b16 %v2216, %v2212
    %v2969 = vpack.c.b16 %v2217, %v2213
    %v2970 = vpack.c.b16 %v2218, %v2214
    %v2971 = vpack.c.b16 %v2223, %v2219
    %v2972 = vpack.c.b16 %v2224, %v2220
    %v2973 = vpack.c.b16 %v2225, %v2221
    %v2974 = vpack.c.b16 %v2226, %v2222
    %v2975 = vpack.c.b16 %v2231, %v2227
    %v2976 = vpack.c.b16 %v2232, %v2228
    %v2977 = vpack.c.b16 %v2233, %v2229
    %v2978 = vpack.c.b16 %v2234, %v2230
    %v2979 = vpack.c.b16 %v2239, %v2235
    %v2980 = vpack.c.b16 %v2240, %v2236
    %v2981 = vpack.c.b16 %v2241, %v2237
    %v2982 = vpack.c.b16 %v2242, %v2238
    %v2983 = vpack.c.b16 %v2247, %v2243
    %v2984 = vpack.c.b16 %v2248, %v2244
    %v2985 = vpack.c.b16 %v2249, %v2245
    %v2986 = vpack.c.b16 %v2250, %v2246
    %v2987 = vpack.c.b16 %v2255, %v2251
    %v2988 = vpack.c.b16 %v2256, %v2252
    %v2989 = vpack.c.b16 %v2257, %v2253
    %v2990 = vpack.c.b16 %v2258, %v2254
    %v2991 = vpack.c.b16 %v2263, %v2259
    %v2992 = vpack.c.b16 %v2264, %v2260
    %v2993 = vpack.c.b16 %v2265, %v2261
    %v2994 = vpack.c.b16 %v2266, %v2262
    %v2995 = vpack.c.b16 %v2271, %v2267
    %v2996 = vpack.c.b16 %v2272, %v2268
    %v2997 = vpack.c.b16 %v2273, %v2269
    %v2998 = vpack.c.b16 %v2274, %v2270
    %v2999 = vpack.c.b16 %v2279, %v2275
    %v3000 = vpack.c.b16 %v2280, %v2276
    %v3001 = vpack.c.b16 %v2281, %v2277
    %v3002 = vpack.c.b16 %v2282, %v2278
    %v3003 = vpack.c.b16 %v2287, %v2283
    %v3004 = vpack.c.b16 %v2288, %v2284
    %v3005 = vpack.c.b16 %v2289, %v2285
    %v3006 = vpack.c.b16 %v2290, %v2286
    %v3007 = vpack.c.b16 %v2295, %v2291
    %v3008 = vpack.c.b16 %v2296, %v2292
    %v3009 = vpack.c.b16 %v2297, %v2293
    %v3010 = vpack.c.b16 %v2298, %v2294
    %v3011 = vpack.c.b16 %v2303, %v2299
    %v3012 = vpack.c.b16 %v2304, %v2300
    %v3013 = vpack.c.b16 %v2305, %v2301
    %v3014 = vpack.c.b16 %v2306, %v2302
    %v3015 = vpack.c.b16 %v2311, %v2307
    %v3016 = vpack.c.b16 %v2312, %v2308
    %v3017 = vpack.c.b16 %v2313, %v2309
    %v3018 = vpack.c.b16 %v2314, %v2310
    %v3019 = vpack.c.b16 %v2319, %v2315
    %v3020 = vpack.c.b16 %v2320, %v2316
    %v3021 = vpack.c.b16 %v2321, %v2317
    %v3022 = vpack.c.b16 %v2322, %v2318
    %v3023 = vpack.c.b16 %v2327, %v2323
    %v3024 = vpack.c.b16 %v2328, %v2324
    %v3025 = vpack.c.b16 %v2329, %v2325
    %v3026 = vpack.c.b16 %v2330, %v2326
    %v3027 = vpack.c.b16 %v2335, %v2331
    %v3028 = vpack.c.b16 %v2336, %v2332
    %v3029 = vpack.c.b16 %v2337, %v2333
    %v3030 = vpack.c.b16 %v2338, %v2334
    %v3031 = vpack.c.b16 %v2343, %v2339
    %v3032 = vpack.c.b16 %v2344, %v2340
    %v3033 = vpack.c.b16 %v2345, %v2341
    %v3034 = vpack.c.b16 %v2346, %v2342
    %v3035 = vpack.c.b16 %v2351, %v2347
    %v3036 = vpack.c.b16 %v2352, %v2348
    %v3037 = vpack.c.b16 %v2353, %v2349
    %v3038 = vpack.c.b16 %v2354, %v2350
    %v3039 = vpack.c.b16 %v2359, %v2355
    %v3040 = vpack.c.b16 %v2360, %v2356
    %v3041 = vpack.c.b16 %v2361, %v2357
    %v3042 = vpack.c.b16 %v2362, %v2358
    %v3043 = vpack.c.b16 %v2367, %v2363
    %v3044 = vpack.c.b16 %v2368, %v2364
    %v3045 = vpack.c.b16 %v2369, %v2365
    %v3046 = vpack.c.b16 %v2370, %v2366
    %v3047 = vpack.c.b16 %v2375, %v2371
    %v3048 = vpack.c.b16 %v2376, %v2372
    %v3049 = vpack.c.b16 %v2377, %v2373
    %v3050 = vpack.c.b16 %v2378, %v2374
    %v3051 = vpack.c.b16 %v2383, %v2379
    %v3052 = vpack.c.b16 %v2384, %v2380
    %v3053 = vpack.c.b16 %v2385, %v2381
    %v3054 = vpack.c.b16 %v2386, %v2382
    %v3055 = vpack.c.b16 %v2391, %v2387
    %v3056 = vpack.c.b16 %v2392, %v2388
    %v3057 = vpack.c.b16 %v2393, %v2389
    %v3058 = vpack.c.b16 %v2394, %v2390
    %v3059 = vpack.c.b16 %v2399, %v2395
    %v3060 = vpack.c.b16 %v2400, %v2396
    %v3061 = vpack.c.b16 %v2401, %v2397
    %v3062 = vpack.c.b16 %v2402, %v2398
    %v3063 = vpack.c.b16 %v2407, %v2403
    %v3064 = vpack.c.b16 %v2408, %v2404
    %v3065 = vpack.c.b16 %v2409, %v2405
    %v3066 = vpack.c.b16 %v2410, %v2406
    %v3067 = vpack.c.b16 %v2415, %v2411
    %v3068 = vpack.c.b16 %v2416, %v2412
    %v3069 = vpack.c.b16 %v2417, %v2413
    %v3070 = vpack.c.b16 %v2418, %v2414
    %v3071 = vpack.c.b16 %v2423, %v2419
    %v3072 = vpack.c.b16 %v2424, %v2420
    %v3073 = vpack.c.b16 %v2425, %v2421
    %v3074 = vpack.c.b16 %v2426, %v2422
    %v3075 = vpack.c.b16 %v2431, %v2427
    %v3076 = vpack.c.b16 %v2432, %v2428
    %v3077 = vpack.c.b16 %v2433, %v2429
    %v3078 = vpack.c.b16 %v2434, %v2430
    %v3079 = vpack.c.b16 %v2439, %v2435
    %v3080 = vpack.c.b16 %v2440, %v2436
    %v3081 = vpack.c.b16 %v2441, %v2437
    %v3082 = vpack.c.b16 %v2442, %v2438
    %v3083 = vpack.c.b16 %v2447, %v2443
    %v3084 = vpack.c.b16 %v2448, %v2444
    %v3085 = vpack.c.b16 %v2449, %v2445
    %v3086 = vpack.c.b16 %v2450, %v2446
    %v3087 = vpack.c.b16 %v2455, %v2451
    %v3088 = vpack.c.b16 %v2456, %v2452
    %v3089 = vpack.c.b16 %v2457, %v2453
    %v3090 = vpack.c.b16 %v2458, %v2454
    %v3091 = vpack.c.b16 %v2463, %v2459
    %v3092 = vpack.c.b16 %v2464, %v2460
    %v3093 = vpack.c.b16 %v2465, %v2461
    %v3094 = vpack.c.b16 %v2466, %v2462
    %v3095 = vpack.c.b16 %v2471, %v2467
    %v3096 = vpack.c.b16 %v2472, %v2468
    %v3097 = vpack.c.b16 %v2473, %v2469
    %v3098 = vpack.c.b16 %v2474, %v2470
    %v3099 = vpack.c.b16 %v2479, %v2475
    %v3100 = vpack.c.b16 %v2480, %v2476
    %v3101 = vpack.c.b16 %v2481, %v2477
    %v3102 = vpack.c.b16 %v2482, %v2478
    %v3103 = vpack.c.b16 %v2487, %v2483
    %v3104 = vpack.c.b16 %v2488, %v2484
    %v3105 = vpack.c.b16 %v2489, %v2485
    %v3106 = vpack.c.b16 %v2490, %v2486
    %v3107 = vpack.c.b16 %v2495, %v2491
    %v3108 = vpack.c.b16 %v2496, %v2492
    %v3109 = vpack.c.b16 %v2497, %v2493
    %v3110 = vpack.c.b16 %v2498, %v2494
    %v3111 = vpack.c.b16 %v2503, %v2499
    %v3112 = vpack.c.b16 %v2504, %v2500
    %v3113 = vpack.c.b16 %v2505, %v2501
    %v3114 = vpack.c.b16 %v2506, %v2502
    %v3115 = vpack.c.b16 %v2511, %v2507
    %v3116 = vpack.c.b16 %v2512, %v2508
    %v3117 = vpack.c.b16 %v2513, %v2509
    %v3118 = vpack.c.b16 %v2514, %v2510
    %v3119 = vpack.c.b16 %v2519, %v2515
    %v3120 = vpack.c.b16 %v2520, %v2516
    %v3121 = vpack.c.b16 %v2521, %v2517
    %v3122 = vpack.c.b16 %v2522, %v2518
    %v3123 = vpack.c.b16 %v2527, %v2523
    %v3124 = vpack.c.b16 %v2528, %v2524
    %v3125 = vpack.c.b16 %v2529, %v2525
    %v3126 = vpack.c.b16 %v2530, %v2526
    %v3127 = vpack.c.b16 %v2535, %v2531
    %v3128 = vpack.c.b16 %v2536, %v2532
    %v3129 = vpack.c.b16 %v2537, %v2533
    %v3130 = vpack.c.b16 %v2538, %v2534
    %v3131 = vpack.c.b16 %v2543, %v2539
    %v3132 = vpack.c.b16 %v2544, %v2540
    %v3133 = vpack.c.b16 %v2545, %v2541
    %v3134 = vpack.c.b16 %v2546, %v2542
    %v3135 = vpack.c.b16 %v2551, %v2547
    %v3136 = vpack.c.b16 %v2552, %v2548
    %v3137 = vpack.c.b16 %v2553, %v2549
    %v3138 = vpack.c.b16 %v2554, %v2550
    %v3139 = vpack.c.b16 %v2559, %v2555
    %v3140 = vpack.c.b16 %v2560, %v2556
    %v3141 = vpack.c.b16 %v2561, %v2557
    %v3142 = vpack.c.b16 %v2562, %v2558
    %v3143 = vpack.c.b16 %v2567, %v2563
    %v3144 = vpack.c.b16 %v2568, %v2564
    %v3145 = vpack.c.b16 %v2569, %v2565
    %v3146 = vpack.c.b16 %v2570, %v2566
    %3723 = vmatpush.bf16.msra.mxu0 %v2599
    %3724 = vmatpush.bf16.msra.mxu0 %v2595
    %3725 = vmatpush.bf16.msra.mxu0 %v2591
    %3726 = vmatpush.bf16.msra.mxu0 %v2587
    %3727 = vmatpush.bf16.msra.mxu0 %v2583
    %3728 = vmatpush.bf16.msra.mxu0 %v2579
    %3729 = vmatpush.bf16.msra.mxu0 %v2575
    %3730 = vmatpush.bf16.msra.mxu0 %v2571
    %3731 = vmatmul.bf16.gmra.mxu0 %v807
    %v3732 = vpop.f32.mrf.mxu0
    %v3733 = vadd.f32 %v745, %v3732
    %v3734 = vpop.f32.mrf.mxu0
    %v3735 = vadd.f32 %v745, %v3734
    %3736 = vdwg.mxu0
    %3737 = vmatpush.bf16.msra.mxu0 %v2631
    %3738 = vmatpush.bf16.msra.mxu0 %v2627
    %3739 = vmatpush.bf16.msra.mxu0 %v2623
    %3740 = vmatpush.bf16.msra.mxu0 %v2619
    %3741 = vmatpush.bf16.msra.mxu0 %v2615
    %3742 = vmatpush.bf16.msra.mxu0 %v2611
    %3743 = vmatpush.bf16.msra.mxu0 %v2607
    %3744 = vmatpush.bf16.msra.mxu0 %v2603
    %3745 = vmatmul.bf16.gmra.mxu0 %v808
    %v3746 = vpop.f32.mrf.mxu0
    %v3747 = vadd.f32 %v3733, %v3746
    %v3748 = vpop.f32.mrf.mxu0
    %v3749 = vadd.f32 %v3735, %v3748
    %3750 = vdwg.mxu0
    %3751 = vmatpush.bf16.msra.mxu0 %v2663
    %3752 = vmatpush.bf16.msra.mxu0 %v2659
    %3753 = vmatpush.bf16.msra.mxu0 %v2655
    %3754 = vmatpush.bf16.msra.mxu0 %v2651
    %3755 = vmatpush.bf16.msra.mxu0 %v2647
    %3756 = vmatpush.bf16.msra.mxu0 %v2643
    %3757 = vmatpush.bf16.msra.mxu0 %v2639
    %3758 = vmatpush.bf16.msra.mxu0 %v2635
    %3759 = vmatmul.bf16.gmra.mxu0 %v809
    %v3760 = vpop.f32.mrf.mxu0
    %v3761 = vadd.f32 %v3747, %v3760
    %v3762 = vpop.f32.mrf.mxu0
    %v3763 = vadd.f32 %v3749, %v3762
    %3764 = vdwg.mxu0
    %3765 = vmatpush.bf16.msra.mxu0 %v2695
    %3766 = vmatpush.bf16.msra.mxu0 %v2691
    %3767 = vmatpush.bf16.msra.mxu0 %v2687
    %3768 = vmatpush.bf16.msra.mxu0 %v2683
    %3769 = vmatpush.bf16.msra.mxu0 %v2679
    %3770 = vmatpush.bf16.msra.mxu0 %v2675
    %3771 = vmatpush.bf16.msra.mxu0 %v2671
    %3772 = vmatpush.bf16.msra.mxu0 %v2667
    %3773 = vmatmul.bf16.gmra.mxu0 %v810
    %v3774 = vpop.f32.mrf.mxu0
    %v3775 = vadd.f32 %v3761, %v3774
    %v3776 = vpop.f32.mrf.mxu0
    %v3777 = vadd.f32 %v3763, %v3776
    %3778 = vdwg.mxu0
    %3779 = vmatpush.bf16.msra.mxu0 %v2727
    %3780 = vmatpush.bf16.msra.mxu0 %v2723
    %3781 = vmatpush.bf16.msra.mxu0 %v2719
    %3782 = vmatpush.bf16.msra.mxu0 %v2715
    %3783 = vmatpush.bf16.msra.mxu0 %v2711
    %3784 = vmatpush.bf16.msra.mxu0 %v2707
    %3785 = vmatpush.bf16.msra.mxu0 %v2703
    %3786 = vmatpush.bf16.msra.mxu0 %v2699
    %3787 = vmatmul.bf16.gmra.mxu0 %v811
    %v3788 = vpop.f32.mrf.mxu0
    %v3789 = vadd.f32 %v3775, %v3788
    %v3790 = vpop.f32.mrf.mxu0
    %v3791 = vadd.f32 %v3777, %v3790
    %3792 = vdwg.mxu0
    %3793 = vmatpush.bf16.msra.mxu0 %v2759
    %3794 = vmatpush.bf16.msra.mxu0 %v2755
    %3795 = vmatpush.bf16.msra.mxu0 %v2751
    %3796 = vmatpush.bf16.msra.mxu0 %v2747
    %3797 = vmatpush.bf16.msra.mxu0 %v2743
    %3798 = vmatpush.bf16.msra.mxu0 %v2739
    %3799 = vmatpush.bf16.msra.mxu0 %v2735
    %3800 = vmatpush.bf16.msra.mxu0 %v2731
    %3801 = vmatmul.bf16.gmra.mxu0 %v812
    %v3802 = vpop.f32.mrf.mxu0
    %v3803 = vadd.f32 %v3789, %v3802
    %v3804 = vpop.f32.mrf.mxu0
    %v3805 = vadd.f32 %v3791, %v3804
    %3806 = vdwg.mxu0
    %3807 = vmatpush.bf16.msra.mxu0 %v2791
    %3808 = vmatpush.bf16.msra.mxu0 %v2787
    %3809 = vmatpush.bf16.msra.mxu0 %v2783
    %3810 = vmatpush.bf16.msra.mxu0 %v2779
    %3811 = vmatpush.bf16.msra.mxu0 %v2775
    %3812 = vmatpush.bf16.msra.mxu0 %v2771
    %3813 = vmatpush.bf16.msra.mxu0 %v2767
    %3814 = vmatpush.bf16.msra.mxu0 %v2763
    %3815 = vmatmul.bf16.gmra.mxu0 %v813
    %v3816 = vpop.f32.mrf.mxu0
    %v3817 = vadd.f32 %v3803, %v3816
    %v3818 = vpop.f32.mrf.mxu0
    %v3819 = vadd.f32 %v3805, %v3818
    %3820 = vdwg.mxu0
    %3821 = vmatpush.bf16.msra.mxu0 %v2823
    %3822 = vmatpush.bf16.msra.mxu0 %v2819
    %3823 = vmatpush.bf16.msra.mxu0 %v2815
    %3824 = vmatpush.bf16.msra.mxu0 %v2811
    %3825 = vmatpush.bf16.msra.mxu0 %v2807
    %3826 = vmatpush.bf16.msra.mxu0 %v2803
    %3827 = vmatpush.bf16.msra.mxu0 %v2799
    %3828 = vmatpush.bf16.msra.mxu0 %v2795
    %3829 = vmatmul.bf16.gmra.mxu0 %v814
    %v3830 = vpop.f32.mrf.mxu0
    %v3831 = vadd.f32 %v3817, %v3830
    %v3832 = vpop.f32.mrf.mxu0
    %v3833 = vadd.f32 %v3819, %v3832
    %3834 = vdwg.mxu0
    %3835 = vmatpush.bf16.msra.mxu0 %v2855
    %3836 = vmatpush.bf16.msra.mxu0 %v2851
    %3837 = vmatpush.bf16.msra.mxu0 %v2847
    %3838 = vmatpush.bf16.msra.mxu0 %v2843
    %3839 = vmatpush.bf16.msra.mxu0 %v2839
    %3840 = vmatpush.bf16.msra.mxu0 %v2835
    %3841 = vmatpush.bf16.msra.mxu0 %v2831
    %3842 = vmatpush.bf16.msra.mxu0 %v2827
    %3843 = vmatmul.bf16.gmra.mxu0 %v815
    %v3844 = vpop.f32.mrf.mxu0
    %v3845 = vadd.f32 %v3831, %v3844
    %v3846 = vpop.f32.mrf.mxu0
    %v3847 = vadd.f32 %v3833, %v3846
    %3848 = vdwg.mxu0
    %3849 = vmatpush.bf16.msra.mxu0 %v2887
    %3850 = vmatpush.bf16.msra.mxu0 %v2883
    %3851 = vmatpush.bf16.msra.mxu0 %v2879
    %3852 = vmatpush.bf16.msra.mxu0 %v2875
    %3853 = vmatpush.bf16.msra.mxu0 %v2871
    %3854 = vmatpush.bf16.msra.mxu0 %v2867
    %3855 = vmatpush.bf16.msra.mxu0 %v2863
    %3856 = vmatpush.bf16.msra.mxu0 %v2859
    %3857 = vmatmul.bf16.gmra.mxu0 %v816
    %v3858 = vpop.f32.mrf.mxu0
    %v3859 = vadd.f32 %v3845, %v3858
    %v3860 = vpop.f32.mrf.mxu0
    %v3861 = vadd.f32 %v3847, %v3860
    %3862 = vdwg.mxu0
    %3863 = vmatpush.bf16.msra.mxu0 %v2919
    %3864 = vmatpush.bf16.msra.mxu0 %v2915
    %3865 = vmatpush.bf16.msra.mxu0 %v2911
    %3866 = vmatpush.bf16.msra.mxu0 %v2907
    %3867 = vmatpush.bf16.msra.mxu0 %v2903
    %3868 = vmatpush.bf16.msra.mxu0 %v2899
    %3869 = vmatpush.bf16.msra.mxu0 %v2895
    %3870 = vmatpush.bf16.msra.mxu0 %v2891
    %3871 = vmatmul.bf16.gmra.mxu0 %v817
    %v3872 = vpop.f32.mrf.mxu0
    %v3873 = vadd.f32 %v3859, %v3872
    %v3874 = vpop.f32.mrf.mxu0
    %v3875 = vadd.f32 %v3861, %v3874
    %3876 = vdwg.mxu0
    %3877 = vmatpush.bf16.msra.mxu0 %v2951
    %3878 = vmatpush.bf16.msra.mxu0 %v2947
    %3879 = vmatpush.bf16.msra.mxu0 %v2943
    %3880 = vmatpush.bf16.msra.mxu0 %v2939
    %3881 = vmatpush.bf16.msra.mxu0 %v2935
    %3882 = vmatpush.bf16.msra.mxu0 %v2931
    %3883 = vmatpush.bf16.msra.mxu0 %v2927
    %3884 = vmatpush.bf16.msra.mxu0 %v2923
    %3885 = vmatmul.bf16.gmra.mxu0 %v818
    %v3886 = vpop.f32.mrf.mxu0
    %v3887 = vadd.f32 %v3873, %v3886
    %v3888 = vpop.f32.mrf.mxu0
    %v3889 = vadd.f32 %v3875, %v3888
    %3890 = vdwg.mxu0
    %3891 = vmatpush.bf16.msra.mxu0 %v2983
    %3892 = vmatpush.bf16.msra.mxu0 %v2979
    %3893 = vmatpush.bf16.msra.mxu0 %v2975
    %3894 = vmatpush.bf16.msra.mxu0 %v2971
    %3895 = vmatpush.bf16.msra.mxu0 %v2967
    %3896 = vmatpush.bf16.msra.mxu0 %v2963
    %3897 = vmatpush.bf16.msra.mxu0 %v2959
    %3898 = vmatpush.bf16.msra.mxu0 %v2955
    %3899 = vmatmul.bf16.gmra.mxu0 %v819
    %v3900 = vpop.f32.mrf.mxu0
    %v3901 = vadd.f32 %v3887, %v3900
    %v3902 = vpop.f32.mrf.mxu0
    %v3903 = vadd.f32 %v3889, %v3902
    %3904 = vdwg.mxu0
    %3905 = vmatpush.bf16.msra.mxu0 %v3015
    %3906 = vmatpush.bf16.msra.mxu0 %v3011
    %3907 = vmatpush.bf16.msra.mxu0 %v3007
    %3908 = vmatpush.bf16.msra.mxu0 %v3003
    %3909 = vmatpush.bf16.msra.mxu0 %v2999
    %3910 = vmatpush.bf16.msra.mxu0 %v2995
    %3911 = vmatpush.bf16.msra.mxu0 %v2991
    %3912 = vmatpush.bf16.msra.mxu0 %v2987
    %3913 = vmatmul.bf16.gmra.mxu0 %v820
    %v3914 = vpop.f32.mrf.mxu0
    %v3915 = vadd.f32 %v3901, %v3914
    %v3916 = vpop.f32.mrf.mxu0
    %v3917 = vadd.f32 %v3903, %v3916
    %3918 = vdwg.mxu0
    %3919 = vmatpush.bf16.msra.mxu0 %v3047
    %3920 = vmatpush.bf16.msra.mxu0 %v3043
    %3921 = vmatpush.bf16.msra.mxu0 %v3039
    %3922 = vmatpush.bf16.msra.mxu0 %v3035
    %3923 = vmatpush.bf16.msra.mxu0 %v3031
    %3924 = vmatpush.bf16.msra.mxu0 %v3027
    %3925 = vmatpush.bf16.msra.mxu0 %v3023
    %3926 = vmatpush.bf16.msra.mxu0 %v3019
    %3927 = vmatmul.bf16.gmra.mxu0 %v821
    %v3928 = vpop.f32.mrf.mxu0
    %v3929 = vadd.f32 %v3915, %v3928
    %v3930 = vpop.f32.mrf.mxu0
    %v3931 = vadd.f32 %v3917, %v3930
    %3932 = vdwg.mxu0
    %3933 = vmatpush.bf16.msra.mxu0 %v3079
    %3934 = vmatpush.bf16.msra.mxu0 %v3075
    %3935 = vmatpush.bf16.msra.mxu0 %v3071
    %3936 = vmatpush.bf16.msra.mxu0 %v3067
    %3937 = vmatpush.bf16.msra.mxu0 %v3063
    %3938 = vmatpush.bf16.msra.mxu0 %v3059
    %3939 = vmatpush.bf16.msra.mxu0 %v3055
    %3940 = vmatpush.bf16.msra.mxu0 %v3051
    %3941 = vmatmul.bf16.gmra.mxu0 %v822
    %v3942 = vpop.f32.mrf.mxu0
    %v3943 = vadd.f32 %v3929, %v3942
    %v3944 = vpop.f32.mrf.mxu0
    %v3945 = vadd.f32 %v3931, %v3944
    %3946 = vdwg.mxu0
    %3947 = vmatpush.bf16.msra.mxu0 %v3111
    %3948 = vmatpush.bf16.msra.mxu0 %v3107
    %3949 = vmatpush.bf16.msra.mxu0 %v3103
    %3950 = vmatpush.bf16.msra.mxu0 %v3099
    %3951 = vmatpush.bf16.msra.mxu0 %v3095
    %3952 = vmatpush.bf16.msra.mxu0 %v3091
    %3953 = vmatpush.bf16.msra.mxu0 %v3087
    %3954 = vmatpush.bf16.msra.mxu0 %v3083
    %3955 = vmatmul.bf16.gmra.mxu0 %v823
    %v3956 = vpop.f32.mrf.mxu0
    %v3957 = vadd.f32 %v3943, %v3956
    %v3958 = vpop.f32.mrf.mxu0
    %v3959 = vadd.f32 %v3945, %v3958
    %3960 = vdwg.mxu0
    %3961 = vmatpush.bf16.msra.mxu0 %v3143
    %3962 = vmatpush.bf16.msra.mxu0 %v3139
    %3963 = vmatpush.bf16.msra.mxu0 %v3135
    %3964 = vmatpush.bf16.msra.mxu0 %v3131
    %3965 = vmatpush.bf16.msra.mxu0 %v3127
    %3966 = vmatpush.bf16.msra.mxu0 %v3123
    %3967 = vmatpush.bf16.msra.mxu0 %v3119
    %3968 = vmatpush.bf16.msra.mxu0 %v3115
    %3969 = vmatmul.bf16.gmra.mxu0 %v824
    %v3970 = vpop.f32.mrf.mxu0
    %v3971 = vadd.f32 %v3957, %v3970
    %v3972 = vpop.f32.mrf.mxu0
    %v3973 = vadd.f32 %v3959, %v3972
    %3974 = vdwg.mxu0
    %3975 = vmatpush.bf16.msra.mxu0 %v2600
    %3976 = vmatpush.bf16.msra.mxu0 %v2596
    %3977 = vmatpush.bf16.msra.mxu0 %v2592
    %3978 = vmatpush.bf16.msra.mxu0 %v2588
    %3979 = vmatpush.bf16.msra.mxu0 %v2584
    %3980 = vmatpush.bf16.msra.mxu0 %v2580
    %3981 = vmatpush.bf16.msra.mxu0 %v2576
    %3982 = vmatpush.bf16.msra.mxu0 %v2572
    %3983 = vmatmul.bf16.gmra.mxu0 %v807
    %v3984 = vpop.f32.mrf.mxu0
    %v3985 = vadd.f32 %v746, %v3984
    %v3986 = vpop.f32.mrf.mxu0
    %v3987 = vadd.f32 %v746, %v3986
    %3988 = vdwg.mxu0
    %3989 = vmatpush.bf16.msra.mxu0 %v2632
    %3990 = vmatpush.bf16.msra.mxu0 %v2628
    %3991 = vmatpush.bf16.msra.mxu0 %v2624
    %3992 = vmatpush.bf16.msra.mxu0 %v2620
    %3993 = vmatpush.bf16.msra.mxu0 %v2616
    %3994 = vmatpush.bf16.msra.mxu0 %v2612
    %3995 = vmatpush.bf16.msra.mxu0 %v2608
    %3996 = vmatpush.bf16.msra.mxu0 %v2604
    %3997 = vmatmul.bf16.gmra.mxu0 %v808
    %v3998 = vpop.f32.mrf.mxu0
    %v3999 = vadd.f32 %v3985, %v3998
    %v4000 = vpop.f32.mrf.mxu0
    %v4001 = vadd.f32 %v3987, %v4000
    %4002 = vdwg.mxu0
    %4003 = vmatpush.bf16.msra.mxu0 %v2664
    %4004 = vmatpush.bf16.msra.mxu0 %v2660
    %4005 = vmatpush.bf16.msra.mxu0 %v2656
    %4006 = vmatpush.bf16.msra.mxu0 %v2652
    %4007 = vmatpush.bf16.msra.mxu0 %v2648
    %4008 = vmatpush.bf16.msra.mxu0 %v2644
    %4009 = vmatpush.bf16.msra.mxu0 %v2640
    %4010 = vmatpush.bf16.msra.mxu0 %v2636
    %4011 = vmatmul.bf16.gmra.mxu0 %v809
    %v4012 = vpop.f32.mrf.mxu0
    %v4013 = vadd.f32 %v3999, %v4012
    %v4014 = vpop.f32.mrf.mxu0
    %v4015 = vadd.f32 %v4001, %v4014
    %4016 = vdwg.mxu0
    %4017 = vmatpush.bf16.msra.mxu0 %v2696
    %4018 = vmatpush.bf16.msra.mxu0 %v2692
    %4019 = vmatpush.bf16.msra.mxu0 %v2688
    %4020 = vmatpush.bf16.msra.mxu0 %v2684
    %4021 = vmatpush.bf16.msra.mxu0 %v2680
    %4022 = vmatpush.bf16.msra.mxu0 %v2676
    %4023 = vmatpush.bf16.msra.mxu0 %v2672
    %4024 = vmatpush.bf16.msra.mxu0 %v2668
    %4025 = vmatmul.bf16.gmra.mxu0 %v810
    %v4026 = vpop.f32.mrf.mxu0
    %v4027 = vadd.f32 %v4013, %v4026
    %v4028 = vpop.f32.mrf.mxu0
    %v4029 = vadd.f32 %v4015, %v4028
    %4030 = vdwg.mxu0
    %4031 = vmatpush.bf16.msra.mxu0 %v2728
    %4032 = vmatpush.bf16.msra.mxu0 %v2724
    %4033 = vmatpush.bf16.msra.mxu0 %v2720
    %4034 = vmatpush.bf16.msra.mxu0 %v2716
    %4035 = vmatpush.bf16.msra.mxu0 %v2712
    %4036 = vmatpush.bf16.msra.mxu0 %v2708
    %4037 = vmatpush.bf16.msra.mxu0 %v2704
    %4038 = vmatpush.bf16.msra.mxu0 %v2700
    %4039 = vmatmul.bf16.gmra.mxu0 %v811
    %v4040 = vpop.f32.mrf.mxu0
    %v4041 = vadd.f32 %v4027, %v4040
    %v4042 = vpop.f32.mrf.mxu0
    %v4043 = vadd.f32 %v4029, %v4042
    %4044 = vdwg.mxu0
    %4045 = vmatpush.bf16.msra.mxu0 %v2760
    %4046 = vmatpush.bf16.msra.mxu0 %v2756
    %4047 = vmatpush.bf16.msra.mxu0 %v2752
    %4048 = vmatpush.bf16.msra.mxu0 %v2748
    %4049 = vmatpush.bf16.msra.mxu0 %v2744
    %4050 = vmatpush.bf16.msra.mxu0 %v2740
    %4051 = vmatpush.bf16.msra.mxu0 %v2736
    %4052 = vmatpush.bf16.msra.mxu0 %v2732
    %4053 = vmatmul.bf16.gmra.mxu0 %v812
    %v4054 = vpop.f32.mrf.mxu0
    %v4055 = vadd.f32 %v4041, %v4054
    %v4056 = vpop.f32.mrf.mxu0
    %v4057 = vadd.f32 %v4043, %v4056
    %4058 = vdwg.mxu0
    %4059 = vmatpush.bf16.msra.mxu0 %v2792
    %4060 = vmatpush.bf16.msra.mxu0 %v2788
    %4061 = vmatpush.bf16.msra.mxu0 %v2784
    %4062 = vmatpush.bf16.msra.mxu0 %v2780
    %4063 = vmatpush.bf16.msra.mxu0 %v2776
    %4064 = vmatpush.bf16.msra.mxu0 %v2772
    %4065 = vmatpush.bf16.msra.mxu0 %v2768
    %4066 = vmatpush.bf16.msra.mxu0 %v2764
    %4067 = vmatmul.bf16.gmra.mxu0 %v813
    %v4068 = vpop.f32.mrf.mxu0
    %v4069 = vadd.f32 %v4055, %v4068
    %v4070 = vpop.f32.mrf.mxu0
    %v4071 = vadd.f32 %v4057, %v4070
    %4072 = vdwg.mxu0
    %4073 = vmatpush.bf16.msra.mxu0 %v2824
    %4074 = vmatpush.bf16.msra.mxu0 %v2820
    %4075 = vmatpush.bf16.msra.mxu0 %v2816
    %4076 = vmatpush.bf16.msra.mxu0 %v2812
    %4077 = vmatpush.bf16.msra.mxu0 %v2808
    %4078 = vmatpush.bf16.msra.mxu0 %v2804
    %4079 = vmatpush.bf16.msra.mxu0 %v2800
    %4080 = vmatpush.bf16.msra.mxu0 %v2796
    %4081 = vmatmul.bf16.gmra.mxu0 %v814
    %v4082 = vpop.f32.mrf.mxu0
    %v4083 = vadd.f32 %v4069, %v4082
    %v4084 = vpop.f32.mrf.mxu0
    %v4085 = vadd.f32 %v4071, %v4084
    %4086 = vdwg.mxu0
    %4087 = vmatpush.bf16.msra.mxu0 %v2856
    %4088 = vmatpush.bf16.msra.mxu0 %v2852
    %4089 = vmatpush.bf16.msra.mxu0 %v2848
    %4090 = vmatpush.bf16.msra.mxu0 %v2844
    %4091 = vmatpush.bf16.msra.mxu0 %v2840
    %4092 = vmatpush.bf16.msra.mxu0 %v2836
    %4093 = vmatpush.bf16.msra.mxu0 %v2832
    %4094 = vmatpush.bf16.msra.mxu0 %v2828
    %4095 = vmatmul.bf16.gmra.mxu0 %v815
    %v4096 = vpop.f32.mrf.mxu0
    %v4097 = vadd.f32 %v4083, %v4096
    %v4098 = vpop.f32.mrf.mxu0
    %v4099 = vadd.f32 %v4085, %v4098
    %4100 = vdwg.mxu0
    %4101 = vmatpush.bf16.msra.mxu0 %v2888
    %4102 = vmatpush.bf16.msra.mxu0 %v2884
    %4103 = vmatpush.bf16.msra.mxu0 %v2880
    %4104 = vmatpush.bf16.msra.mxu0 %v2876
    %4105 = vmatpush.bf16.msra.mxu0 %v2872
    %4106 = vmatpush.bf16.msra.mxu0 %v2868
    %4107 = vmatpush.bf16.msra.mxu0 %v2864
    %4108 = vmatpush.bf16.msra.mxu0 %v2860
    %4109 = vmatmul.bf16.gmra.mxu0 %v816
    %v4110 = vpop.f32.mrf.mxu0
    %v4111 = vadd.f32 %v4097, %v4110
    %v4112 = vpop.f32.mrf.mxu0
    %v4113 = vadd.f32 %v4099, %v4112
    %4114 = vdwg.mxu0
    %4115 = vmatpush.bf16.msra.mxu0 %v2920
    %4116 = vmatpush.bf16.msra.mxu0 %v2916
    %4117 = vmatpush.bf16.msra.mxu0 %v2912
    %4118 = vmatpush.bf16.msra.mxu0 %v2908
    %4119 = vmatpush.bf16.msra.mxu0 %v2904
    %4120 = vmatpush.bf16.msra.mxu0 %v2900
    %4121 = vmatpush.bf16.msra.mxu0 %v2896
    %4122 = vmatpush.bf16.msra.mxu0 %v2892
    %4123 = vmatmul.bf16.gmra.mxu0 %v817
    %v4124 = vpop.f32.mrf.mxu0
    %v4125 = vadd.f32 %v4111, %v4124
    %v4126 = vpop.f32.mrf.mxu0
    %v4127 = vadd.f32 %v4113, %v4126
    %4128 = vdwg.mxu0
    %4129 = vmatpush.bf16.msra.mxu0 %v2952
    %4130 = vmatpush.bf16.msra.mxu0 %v2948
    %4131 = vmatpush.bf16.msra.mxu0 %v2944
    %4132 = vmatpush.bf16.msra.mxu0 %v2940
    %4133 = vmatpush.bf16.msra.mxu0 %v2936
    %4134 = vmatpush.bf16.msra.mxu0 %v2932
    %4135 = vmatpush.bf16.msra.mxu0 %v2928
    %4136 = vmatpush.bf16.msra.mxu0 %v2924
    %4137 = vmatmul.bf16.gmra.mxu0 %v818
    %v4138 = vpop.f32.mrf.mxu0
    %v4139 = vadd.f32 %v4125, %v4138
    %v4140 = vpop.f32.mrf.mxu0
    %v4141 = vadd.f32 %v4127, %v4140
    %4142 = vdwg.mxu0
    %4143 = vmatpush.bf16.msra.mxu0 %v2984
    %4144 = vmatpush.bf16.msra.mxu0 %v2980
    %4145 = vmatpush.bf16.msra.mxu0 %v2976
    %4146 = vmatpush.bf16.msra.mxu0 %v2972
    %4147 = vmatpush.bf16.msra.mxu0 %v2968
    %4148 = vmatpush.bf16.msra.mxu0 %v2964
    %4149 = vmatpush.bf16.msra.mxu0 %v2960
    %4150 = vmatpush.bf16.msra.mxu0 %v2956
    %4151 = vmatmul.bf16.gmra.mxu0 %v819
    %v4152 = vpop.f32.mrf.mxu0
    %v4153 = vadd.f32 %v4139, %v4152
    %v4154 = vpop.f32.mrf.mxu0
    %v4155 = vadd.f32 %v4141, %v4154
    %4156 = vdwg.mxu0
    %4157 = vmatpush.bf16.msra.mxu0 %v3016
    %4158 = vmatpush.bf16.msra.mxu0 %v3012
    %4159 = vmatpush.bf16.msra.mxu0 %v3008
    %4160 = vmatpush.bf16.msra.mxu0 %v3004
    %4161 = vmatpush.bf16.msra.mxu0 %v3000
    %4162 = vmatpush.bf16.msra.mxu0 %v2996
    %4163 = vmatpush.bf16.msra.mxu0 %v2992
    %4164 = vmatpush.bf16.msra.mxu0 %v2988
    %4165 = vmatmul.bf16.gmra.mxu0 %v820
    %v4166 = vpop.f32.mrf.mxu0
    %v4167 = vadd.f32 %v4153, %v4166
    %v4168 = vpop.f32.mrf.mxu0
    %v4169 = vadd.f32 %v4155, %v4168
    %4170 = vdwg.mxu0
    %4171 = vmatpush.bf16.msra.mxu0 %v3048
    %4172 = vmatpush.bf16.msra.mxu0 %v3044
    %4173 = vmatpush.bf16.msra.mxu0 %v3040
    %4174 = vmatpush.bf16.msra.mxu0 %v3036
    %4175 = vmatpush.bf16.msra.mxu0 %v3032
    %4176 = vmatpush.bf16.msra.mxu0 %v3028
    %4177 = vmatpush.bf16.msra.mxu0 %v3024
    %4178 = vmatpush.bf16.msra.mxu0 %v3020
    %4179 = vmatmul.bf16.gmra.mxu0 %v821
    %v4180 = vpop.f32.mrf.mxu0
    %v4181 = vadd.f32 %v4167, %v4180
    %v4182 = vpop.f32.mrf.mxu0
    %v4183 = vadd.f32 %v4169, %v4182
    %4184 = vdwg.mxu0
    %4185 = vmatpush.bf16.msra.mxu0 %v3080
    %4186 = vmatpush.bf16.msra.mxu0 %v3076
    %4187 = vmatpush.bf16.msra.mxu0 %v3072
    %4188 = vmatpush.bf16.msra.mxu0 %v3068
    %4189 = vmatpush.bf16.msra.mxu0 %v3064
    %4190 = vmatpush.bf16.msra.mxu0 %v3060
    %4191 = vmatpush.bf16.msra.mxu0 %v3056
    %4192 = vmatpush.bf16.msra.mxu0 %v3052
    %4193 = vmatmul.bf16.gmra.mxu0 %v822
    %v4194 = vpop.f32.mrf.mxu0
    %v4195 = vadd.f32 %v4181, %v4194
    %v4196 = vpop.f32.mrf.mxu0
    %v4197 = vadd.f32 %v4183, %v4196
    %4198 = vdwg.mxu0
    %4199 = vmatpush.bf16.msra.mxu0 %v3112
    %4200 = vmatpush.bf16.msra.mxu0 %v3108
    %4201 = vmatpush.bf16.msra.mxu0 %v3104
    %4202 = vmatpush.bf16.msra.mxu0 %v3100
    %4203 = vmatpush.bf16.msra.mxu0 %v3096
    %4204 = vmatpush.bf16.msra.mxu0 %v3092
    %4205 = vmatpush.bf16.msra.mxu0 %v3088
    %4206 = vmatpush.bf16.msra.mxu0 %v3084
    %4207 = vmatmul.bf16.gmra.mxu0 %v823
    %v4208 = vpop.f32.mrf.mxu0
    %v4209 = vadd.f32 %v4195, %v4208
    %v4210 = vpop.f32.mrf.mxu0
    %v4211 = vadd.f32 %v4197, %v4210
    %4212 = vdwg.mxu0
    %4213 = vmatpush.bf16.msra.mxu0 %v3144
    %4214 = vmatpush.bf16.msra.mxu0 %v3140
    %4215 = vmatpush.bf16.msra.mxu0 %v3136
    %4216 = vmatpush.bf16.msra.mxu0 %v3132
    %4217 = vmatpush.bf16.msra.mxu0 %v3128
    %4218 = vmatpush.bf16.msra.mxu0 %v3124
    %4219 = vmatpush.bf16.msra.mxu0 %v3120
    %4220 = vmatpush.bf16.msra.mxu0 %v3116
    %4221 = vmatmul.bf16.gmra.mxu0 %v824
    %v4222 = vpop.f32.mrf.mxu0
    %v4223 = vadd.f32 %v4209, %v4222
    %v4224 = vpop.f32.mrf.mxu0
    %v4225 = vadd.f32 %v4211, %v4224
    %4226 = vdwg.mxu0
    %4227 = vmatpush.bf16.msra.mxu0 %v2601
    %4228 = vmatpush.bf16.msra.mxu0 %v2597
    %4229 = vmatpush.bf16.msra.mxu0 %v2593
    %4230 = vmatpush.bf16.msra.mxu0 %v2589
    %4231 = vmatpush.bf16.msra.mxu0 %v2585
    %4232 = vmatpush.bf16.msra.mxu0 %v2581
    %4233 = vmatpush.bf16.msra.mxu0 %v2577
    %4234 = vmatpush.bf16.msra.mxu0 %v2573
    %4235 = vmatmul.bf16.gmra.mxu0 %v807
    %v4236 = vpop.f32.mrf.mxu0
    %v4237 = vadd.f32 %v747, %v4236
    %v4238 = vpop.f32.mrf.mxu0
    %v4239 = vadd.f32 %v747, %v4238
    %4240 = vdwg.mxu0
    %4241 = vmatpush.bf16.msra.mxu0 %v2633
    %4242 = vmatpush.bf16.msra.mxu0 %v2629
    %4243 = vmatpush.bf16.msra.mxu0 %v2625
    %4244 = vmatpush.bf16.msra.mxu0 %v2621
    %4245 = vmatpush.bf16.msra.mxu0 %v2617
    %4246 = vmatpush.bf16.msra.mxu0 %v2613
    %4247 = vmatpush.bf16.msra.mxu0 %v2609
    %4248 = vmatpush.bf16.msra.mxu0 %v2605
    %4249 = vmatmul.bf16.gmra.mxu0 %v808
    %v4250 = vpop.f32.mrf.mxu0
    %v4251 = vadd.f32 %v4237, %v4250
    %v4252 = vpop.f32.mrf.mxu0
    %v4253 = vadd.f32 %v4239, %v4252
    %4254 = vdwg.mxu0
    %4255 = vmatpush.bf16.msra.mxu0 %v2665
    %4256 = vmatpush.bf16.msra.mxu0 %v2661
    %4257 = vmatpush.bf16.msra.mxu0 %v2657
    %4258 = vmatpush.bf16.msra.mxu0 %v2653
    %4259 = vmatpush.bf16.msra.mxu0 %v2649
    %4260 = vmatpush.bf16.msra.mxu0 %v2645
    %4261 = vmatpush.bf16.msra.mxu0 %v2641
    %4262 = vmatpush.bf16.msra.mxu0 %v2637
    %4263 = vmatmul.bf16.gmra.mxu0 %v809
    %v4264 = vpop.f32.mrf.mxu0
    %v4265 = vadd.f32 %v4251, %v4264
    %v4266 = vpop.f32.mrf.mxu0
    %v4267 = vadd.f32 %v4253, %v4266
    %4268 = vdwg.mxu0
    %4269 = vmatpush.bf16.msra.mxu0 %v2697
    %4270 = vmatpush.bf16.msra.mxu0 %v2693
    %4271 = vmatpush.bf16.msra.mxu0 %v2689
    %4272 = vmatpush.bf16.msra.mxu0 %v2685
    %4273 = vmatpush.bf16.msra.mxu0 %v2681
    %4274 = vmatpush.bf16.msra.mxu0 %v2677
    %4275 = vmatpush.bf16.msra.mxu0 %v2673
    %4276 = vmatpush.bf16.msra.mxu0 %v2669
    %4277 = vmatmul.bf16.gmra.mxu0 %v810
    %v4278 = vpop.f32.mrf.mxu0
    %v4279 = vadd.f32 %v4265, %v4278
    %v4280 = vpop.f32.mrf.mxu0
    %v4281 = vadd.f32 %v4267, %v4280
    %4282 = vdwg.mxu0
    %4283 = vmatpush.bf16.msra.mxu0 %v2729
    %4284 = vmatpush.bf16.msra.mxu0 %v2725
    %4285 = vmatpush.bf16.msra.mxu0 %v2721
    %4286 = vmatpush.bf16.msra.mxu0 %v2717
    %4287 = vmatpush.bf16.msra.mxu0 %v2713
    %4288 = vmatpush.bf16.msra.mxu0 %v2709
    %4289 = vmatpush.bf16.msra.mxu0 %v2705
    %4290 = vmatpush.bf16.msra.mxu0 %v2701
    %4291 = vmatmul.bf16.gmra.mxu0 %v811
    %v4292 = vpop.f32.mrf.mxu0
    %v4293 = vadd.f32 %v4279, %v4292
    %v4294 = vpop.f32.mrf.mxu0
    %v4295 = vadd.f32 %v4281, %v4294
    %4296 = vdwg.mxu0
    %4297 = vmatpush.bf16.msra.mxu0 %v2761
    %4298 = vmatpush.bf16.msra.mxu0 %v2757
    %4299 = vmatpush.bf16.msra.mxu0 %v2753
    %4300 = vmatpush.bf16.msra.mxu0 %v2749
    %4301 = vmatpush.bf16.msra.mxu0 %v2745
    %4302 = vmatpush.bf16.msra.mxu0 %v2741
    %4303 = vmatpush.bf16.msra.mxu0 %v2737
    %4304 = vmatpush.bf16.msra.mxu0 %v2733
    %4305 = vmatmul.bf16.gmra.mxu0 %v812
    %v4306 = vpop.f32.mrf.mxu0
    %v4307 = vadd.f32 %v4293, %v4306
    %v4308 = vpop.f32.mrf.mxu0
    %v4309 = vadd.f32 %v4295, %v4308
    %4310 = vdwg.mxu0
    %4311 = vmatpush.bf16.msra.mxu0 %v2793
    %4312 = vmatpush.bf16.msra.mxu0 %v2789
    %4313 = vmatpush.bf16.msra.mxu0 %v2785
    %4314 = vmatpush.bf16.msra.mxu0 %v2781
    %4315 = vmatpush.bf16.msra.mxu0 %v2777
    %4316 = vmatpush.bf16.msra.mxu0 %v2773
    %4317 = vmatpush.bf16.msra.mxu0 %v2769
    %4318 = vmatpush.bf16.msra.mxu0 %v2765
    %4319 = vmatmul.bf16.gmra.mxu0 %v813
    %v4320 = vpop.f32.mrf.mxu0
    %v4321 = vadd.f32 %v4307, %v4320
    %v4322 = vpop.f32.mrf.mxu0
    %v4323 = vadd.f32 %v4309, %v4322
    %4324 = vdwg.mxu0
    %4325 = vmatpush.bf16.msra.mxu0 %v2825
    %4326 = vmatpush.bf16.msra.mxu0 %v2821
    %4327 = vmatpush.bf16.msra.mxu0 %v2817
    %4328 = vmatpush.bf16.msra.mxu0 %v2813
    %4329 = vmatpush.bf16.msra.mxu0 %v2809
    %4330 = vmatpush.bf16.msra.mxu0 %v2805
    %4331 = vmatpush.bf16.msra.mxu0 %v2801
    %4332 = vmatpush.bf16.msra.mxu0 %v2797
    %4333 = vmatmul.bf16.gmra.mxu0 %v814
    %v4334 = vpop.f32.mrf.mxu0
    %v4335 = vadd.f32 %v4321, %v4334
    %v4336 = vpop.f32.mrf.mxu0
    %v4337 = vadd.f32 %v4323, %v4336
    %4338 = vdwg.mxu0
    %4339 = vmatpush.bf16.msra.mxu0 %v2857
    %4340 = vmatpush.bf16.msra.mxu0 %v2853
    %4341 = vmatpush.bf16.msra.mxu0 %v2849
    %4342 = vmatpush.bf16.msra.mxu0 %v2845
    %4343 = vmatpush.bf16.msra.mxu0 %v2841
    %4344 = vmatpush.bf16.msra.mxu0 %v2837
    %4345 = vmatpush.bf16.msra.mxu0 %v2833
    %4346 = vmatpush.bf16.msra.mxu0 %v2829
    %4347 = vmatmul.bf16.gmra.mxu0 %v815
    %v4348 = vpop.f32.mrf.mxu0
    %v4349 = vadd.f32 %v4335, %v4348
    %v4350 = vpop.f32.mrf.mxu0
    %v4351 = vadd.f32 %v4337, %v4350
    %4352 = vdwg.mxu0
    %4353 = vmatpush.bf16.msra.mxu0 %v2889
    %4354 = vmatpush.bf16.msra.mxu0 %v2885
    %4355 = vmatpush.bf16.msra.mxu0 %v2881
    %4356 = vmatpush.bf16.msra.mxu0 %v2877
    %4357 = vmatpush.bf16.msra.mxu0 %v2873
    %4358 = vmatpush.bf16.msra.mxu0 %v2869
    %4359 = vmatpush.bf16.msra.mxu0 %v2865
    %4360 = vmatpush.bf16.msra.mxu0 %v2861
    %4361 = vmatmul.bf16.gmra.mxu0 %v816
    %v4362 = vpop.f32.mrf.mxu0
    %v4363 = vadd.f32 %v4349, %v4362
    %v4364 = vpop.f32.mrf.mxu0
    %v4365 = vadd.f32 %v4351, %v4364
    %4366 = vdwg.mxu0
    %4367 = vmatpush.bf16.msra.mxu0 %v2921
    %4368 = vmatpush.bf16.msra.mxu0 %v2917
    %4369 = vmatpush.bf16.msra.mxu0 %v2913
    %4370 = vmatpush.bf16.msra.mxu0 %v2909
    %4371 = vmatpush.bf16.msra.mxu0 %v2905
    %4372 = vmatpush.bf16.msra.mxu0 %v2901
    %4373 = vmatpush.bf16.msra.mxu0 %v2897
    %4374 = vmatpush.bf16.msra.mxu0 %v2893
    %4375 = vmatmul.bf16.gmra.mxu0 %v817
    %v4376 = vpop.f32.mrf.mxu0
    %v4377 = vadd.f32 %v4363, %v4376
    %v4378 = vpop.f32.mrf.mxu0
    %v4379 = vadd.f32 %v4365, %v4378
    %4380 = vdwg.mxu0
    %4381 = vmatpush.bf16.msra.mxu0 %v2953
    %4382 = vmatpush.bf16.msra.mxu0 %v2949
    %4383 = vmatpush.bf16.msra.mxu0 %v2945
    %4384 = vmatpush.bf16.msra.mxu0 %v2941
    %4385 = vmatpush.bf16.msra.mxu0 %v2937
    %4386 = vmatpush.bf16.msra.mxu0 %v2933
    %4387 = vmatpush.bf16.msra.mxu0 %v2929
    %4388 = vmatpush.bf16.msra.mxu0 %v2925
    %4389 = vmatmul.bf16.gmra.mxu0 %v818
    %v4390 = vpop.f32.mrf.mxu0
    %v4391 = vadd.f32 %v4377, %v4390
    %v4392 = vpop.f32.mrf.mxu0
    %v4393 = vadd.f32 %v4379, %v4392
    %4394 = vdwg.mxu0
    %4395 = vmatpush.bf16.msra.mxu0 %v2985
    %4396 = vmatpush.bf16.msra.mxu0 %v2981
    %4397 = vmatpush.bf16.msra.mxu0 %v2977
    %4398 = vmatpush.bf16.msra.mxu0 %v2973
    %4399 = vmatpush.bf16.msra.mxu0 %v2969
    %4400 = vmatpush.bf16.msra.mxu0 %v2965
    %4401 = vmatpush.bf16.msra.mxu0 %v2961
    %4402 = vmatpush.bf16.msra.mxu0 %v2957
    %4403 = vmatmul.bf16.gmra.mxu0 %v819
    %v4404 = vpop.f32.mrf.mxu0
    %v4405 = vadd.f32 %v4391, %v4404
    %v4406 = vpop.f32.mrf.mxu0
    %v4407 = vadd.f32 %v4393, %v4406
    %4408 = vdwg.mxu0
    %4409 = vmatpush.bf16.msra.mxu0 %v3017
    %4410 = vmatpush.bf16.msra.mxu0 %v3013
    %4411 = vmatpush.bf16.msra.mxu0 %v3009
    %4412 = vmatpush.bf16.msra.mxu0 %v3005
    %4413 = vmatpush.bf16.msra.mxu0 %v3001
    %4414 = vmatpush.bf16.msra.mxu0 %v2997
    %4415 = vmatpush.bf16.msra.mxu0 %v2993
    %4416 = vmatpush.bf16.msra.mxu0 %v2989
    %4417 = vmatmul.bf16.gmra.mxu0 %v820
    %v4418 = vpop.f32.mrf.mxu0
    %v4419 = vadd.f32 %v4405, %v4418
    %v4420 = vpop.f32.mrf.mxu0
    %v4421 = vadd.f32 %v4407, %v4420
    %4422 = vdwg.mxu0
    %4423 = vmatpush.bf16.msra.mxu0 %v3049
    %4424 = vmatpush.bf16.msra.mxu0 %v3045
    %4425 = vmatpush.bf16.msra.mxu0 %v3041
    %4426 = vmatpush.bf16.msra.mxu0 %v3037
    %4427 = vmatpush.bf16.msra.mxu0 %v3033
    %4428 = vmatpush.bf16.msra.mxu0 %v3029
    %4429 = vmatpush.bf16.msra.mxu0 %v3025
    %4430 = vmatpush.bf16.msra.mxu0 %v3021
    %4431 = vmatmul.bf16.gmra.mxu0 %v821
    %v4432 = vpop.f32.mrf.mxu0
    %v4433 = vadd.f32 %v4419, %v4432
    %v4434 = vpop.f32.mrf.mxu0
    %v4435 = vadd.f32 %v4421, %v4434
    %4436 = vdwg.mxu0
    %4437 = vmatpush.bf16.msra.mxu0 %v3081
    %4438 = vmatpush.bf16.msra.mxu0 %v3077
    %4439 = vmatpush.bf16.msra.mxu0 %v3073
    %4440 = vmatpush.bf16.msra.mxu0 %v3069
    %4441 = vmatpush.bf16.msra.mxu0 %v3065
    %4442 = vmatpush.bf16.msra.mxu0 %v3061
    %4443 = vmatpush.bf16.msra.mxu0 %v3057
    %4444 = vmatpush.bf16.msra.mxu0 %v3053
    %4445 = vmatmul.bf16.gmra.mxu0 %v822
    %v4446 = vpop.f32.mrf.mxu0
    %v4447 = vadd.f32 %v4433, %v4446
    %v4448 = vpop.f32.mrf.mxu0
    %v4449 = vadd.f32 %v4435, %v4448
    %4450 = vdwg.mxu0
    %4451 = vmatpush.bf16.msra.mxu0 %v3113
    %4452 = vmatpush.bf16.msra.mxu0 %v3109
    %4453 = vmatpush.bf16.msra.mxu0 %v3105
    %4454 = vmatpush.bf16.msra.mxu0 %v3101
    %4455 = vmatpush.bf16.msra.mxu0 %v3097
    %4456 = vmatpush.bf16.msra.mxu0 %v3093
    %4457 = vmatpush.bf16.msra.mxu0 %v3089
    %4458 = vmatpush.bf16.msra.mxu0 %v3085
    %4459 = vmatmul.bf16.gmra.mxu0 %v823
    %v4460 = vpop.f32.mrf.mxu0
    %v4461 = vadd.f32 %v4447, %v4460
    %v4462 = vpop.f32.mrf.mxu0
    %v4463 = vadd.f32 %v4449, %v4462
    %4464 = vdwg.mxu0
    %4465 = vmatpush.bf16.msra.mxu0 %v3145
    %4466 = vmatpush.bf16.msra.mxu0 %v3141
    %4467 = vmatpush.bf16.msra.mxu0 %v3137
    %4468 = vmatpush.bf16.msra.mxu0 %v3133
    %4469 = vmatpush.bf16.msra.mxu0 %v3129
    %4470 = vmatpush.bf16.msra.mxu0 %v3125
    %4471 = vmatpush.bf16.msra.mxu0 %v3121
    %4472 = vmatpush.bf16.msra.mxu0 %v3117
    %4473 = vmatmul.bf16.gmra.mxu0 %v824
    %v4474 = vpop.f32.mrf.mxu0
    %v4475 = vadd.f32 %v4461, %v4474
    %v4476 = vpop.f32.mrf.mxu0
    %v4477 = vadd.f32 %v4463, %v4476
    %4478 = vdwg.mxu0
    %4479 = vmatpush.bf16.msra.mxu0 %v2602
    %4480 = vmatpush.bf16.msra.mxu0 %v2598
    %4481 = vmatpush.bf16.msra.mxu0 %v2594
    %4482 = vmatpush.bf16.msra.mxu0 %v2590
    %4483 = vmatpush.bf16.msra.mxu0 %v2586
    %4484 = vmatpush.bf16.msra.mxu0 %v2582
    %4485 = vmatpush.bf16.msra.mxu0 %v2578
    %4486 = vmatpush.bf16.msra.mxu0 %v2574
    %4487 = vmatmul.bf16.gmra.mxu0 %v807
    %v4488 = vpop.f32.mrf.mxu0
    %v4489 = vadd.f32 %v748, %v4488
    %v4490 = vpop.f32.mrf.mxu0
    %v4491 = vadd.f32 %v748, %v4490
    %4492 = vdwg.mxu0
    %4493 = vmatpush.bf16.msra.mxu0 %v2634
    %4494 = vmatpush.bf16.msra.mxu0 %v2630
    %4495 = vmatpush.bf16.msra.mxu0 %v2626
    %4496 = vmatpush.bf16.msra.mxu0 %v2622
    %4497 = vmatpush.bf16.msra.mxu0 %v2618
    %4498 = vmatpush.bf16.msra.mxu0 %v2614
    %4499 = vmatpush.bf16.msra.mxu0 %v2610
    %4500 = vmatpush.bf16.msra.mxu0 %v2606
    %4501 = vmatmul.bf16.gmra.mxu0 %v808
    %v4502 = vpop.f32.mrf.mxu0
    %v4503 = vadd.f32 %v4489, %v4502
    %v4504 = vpop.f32.mrf.mxu0
    %v4505 = vadd.f32 %v4491, %v4504
    %4506 = vdwg.mxu0
    %4507 = vmatpush.bf16.msra.mxu0 %v2666
    %4508 = vmatpush.bf16.msra.mxu0 %v2662
    %4509 = vmatpush.bf16.msra.mxu0 %v2658
    %4510 = vmatpush.bf16.msra.mxu0 %v2654
    %4511 = vmatpush.bf16.msra.mxu0 %v2650
    %4512 = vmatpush.bf16.msra.mxu0 %v2646
    %4513 = vmatpush.bf16.msra.mxu0 %v2642
    %4514 = vmatpush.bf16.msra.mxu0 %v2638
    %4515 = vmatmul.bf16.gmra.mxu0 %v809
    %v4516 = vpop.f32.mrf.mxu0
    %v4517 = vadd.f32 %v4503, %v4516
    %v4518 = vpop.f32.mrf.mxu0
    %v4519 = vadd.f32 %v4505, %v4518
    %4520 = vdwg.mxu0
    %4521 = vmatpush.bf16.msra.mxu0 %v2698
    %4522 = vmatpush.bf16.msra.mxu0 %v2694
    %4523 = vmatpush.bf16.msra.mxu0 %v2690
    %4524 = vmatpush.bf16.msra.mxu0 %v2686
    %4525 = vmatpush.bf16.msra.mxu0 %v2682
    %4526 = vmatpush.bf16.msra.mxu0 %v2678
    %4527 = vmatpush.bf16.msra.mxu0 %v2674
    %4528 = vmatpush.bf16.msra.mxu0 %v2670
    %4529 = vmatmul.bf16.gmra.mxu0 %v810
    %v4530 = vpop.f32.mrf.mxu0
    %v4531 = vadd.f32 %v4517, %v4530
    %v4532 = vpop.f32.mrf.mxu0
    %v4533 = vadd.f32 %v4519, %v4532
    %4534 = vdwg.mxu0
    %4535 = vmatpush.bf16.msra.mxu0 %v2730
    %4536 = vmatpush.bf16.msra.mxu0 %v2726
    %4537 = vmatpush.bf16.msra.mxu0 %v2722
    %4538 = vmatpush.bf16.msra.mxu0 %v2718
    %4539 = vmatpush.bf16.msra.mxu0 %v2714
    %4540 = vmatpush.bf16.msra.mxu0 %v2710
    %4541 = vmatpush.bf16.msra.mxu0 %v2706
    %4542 = vmatpush.bf16.msra.mxu0 %v2702
    %4543 = vmatmul.bf16.gmra.mxu0 %v811
    %v4544 = vpop.f32.mrf.mxu0
    %v4545 = vadd.f32 %v4531, %v4544
    %v4546 = vpop.f32.mrf.mxu0
    %v4547 = vadd.f32 %v4533, %v4546
    %4548 = vdwg.mxu0
    %4549 = vmatpush.bf16.msra.mxu0 %v2762
    %4550 = vmatpush.bf16.msra.mxu0 %v2758
    %4551 = vmatpush.bf16.msra.mxu0 %v2754
    %4552 = vmatpush.bf16.msra.mxu0 %v2750
    %4553 = vmatpush.bf16.msra.mxu0 %v2746
    %4554 = vmatpush.bf16.msra.mxu0 %v2742
    %4555 = vmatpush.bf16.msra.mxu0 %v2738
    %4556 = vmatpush.bf16.msra.mxu0 %v2734
    %4557 = vmatmul.bf16.gmra.mxu0 %v812
    %v4558 = vpop.f32.mrf.mxu0
    %v4559 = vadd.f32 %v4545, %v4558
    %v4560 = vpop.f32.mrf.mxu0
    %v4561 = vadd.f32 %v4547, %v4560
    %4562 = vdwg.mxu0
    %4563 = vmatpush.bf16.msra.mxu0 %v2794
    %4564 = vmatpush.bf16.msra.mxu0 %v2790
    %4565 = vmatpush.bf16.msra.mxu0 %v2786
    %4566 = vmatpush.bf16.msra.mxu0 %v2782
    %4567 = vmatpush.bf16.msra.mxu0 %v2778
    %4568 = vmatpush.bf16.msra.mxu0 %v2774
    %4569 = vmatpush.bf16.msra.mxu0 %v2770
    %4570 = vmatpush.bf16.msra.mxu0 %v2766
    %4571 = vmatmul.bf16.gmra.mxu0 %v813
    %v4572 = vpop.f32.mrf.mxu0
    %v4573 = vadd.f32 %v4559, %v4572
    %v4574 = vpop.f32.mrf.mxu0
    %v4575 = vadd.f32 %v4561, %v4574
    %4576 = vdwg.mxu0
    %4577 = vmatpush.bf16.msra.mxu0 %v2826
    %4578 = vmatpush.bf16.msra.mxu0 %v2822
    %4579 = vmatpush.bf16.msra.mxu0 %v2818
    %4580 = vmatpush.bf16.msra.mxu0 %v2814
    %4581 = vmatpush.bf16.msra.mxu0 %v2810
    %4582 = vmatpush.bf16.msra.mxu0 %v2806
    %4583 = vmatpush.bf16.msra.mxu0 %v2802
    %4584 = vmatpush.bf16.msra.mxu0 %v2798
    %4585 = vmatmul.bf16.gmra.mxu0 %v814
    %v4586 = vpop.f32.mrf.mxu0
    %v4587 = vadd.f32 %v4573, %v4586
    %v4588 = vpop.f32.mrf.mxu0
    %v4589 = vadd.f32 %v4575, %v4588
    %4590 = vdwg.mxu0
    %4591 = vmatpush.bf16.msra.mxu0 %v2858
    %4592 = vmatpush.bf16.msra.mxu0 %v2854
    %4593 = vmatpush.bf16.msra.mxu0 %v2850
    %4594 = vmatpush.bf16.msra.mxu0 %v2846
    %4595 = vmatpush.bf16.msra.mxu0 %v2842
    %4596 = vmatpush.bf16.msra.mxu0 %v2838
    %4597 = vmatpush.bf16.msra.mxu0 %v2834
    %4598 = vmatpush.bf16.msra.mxu0 %v2830
    %4599 = vmatmul.bf16.gmra.mxu0 %v815
    %v4600 = vpop.f32.mrf.mxu0
    %v4601 = vadd.f32 %v4587, %v4600
    %v4602 = vpop.f32.mrf.mxu0
    %v4603 = vadd.f32 %v4589, %v4602
    %4604 = vdwg.mxu0
    %4605 = vmatpush.bf16.msra.mxu0 %v2890
    %4606 = vmatpush.bf16.msra.mxu0 %v2886
    %4607 = vmatpush.bf16.msra.mxu0 %v2882
    %4608 = vmatpush.bf16.msra.mxu0 %v2878
    %4609 = vmatpush.bf16.msra.mxu0 %v2874
    %4610 = vmatpush.bf16.msra.mxu0 %v2870
    %4611 = vmatpush.bf16.msra.mxu0 %v2866
    %4612 = vmatpush.bf16.msra.mxu0 %v2862
    %4613 = vmatmul.bf16.gmra.mxu0 %v816
    %v4614 = vpop.f32.mrf.mxu0
    %v4615 = vadd.f32 %v4601, %v4614
    %v4616 = vpop.f32.mrf.mxu0
    %v4617 = vadd.f32 %v4603, %v4616
    %4618 = vdwg.mxu0
    %4619 = vmatpush.bf16.msra.mxu0 %v2922
    %4620 = vmatpush.bf16.msra.mxu0 %v2918
    %4621 = vmatpush.bf16.msra.mxu0 %v2914
    %4622 = vmatpush.bf16.msra.mxu0 %v2910
    %4623 = vmatpush.bf16.msra.mxu0 %v2906
    %4624 = vmatpush.bf16.msra.mxu0 %v2902
    %4625 = vmatpush.bf16.msra.mxu0 %v2898
    %4626 = vmatpush.bf16.msra.mxu0 %v2894
    %4627 = vmatmul.bf16.gmra.mxu0 %v817
    %v4628 = vpop.f32.mrf.mxu0
    %v4629 = vadd.f32 %v4615, %v4628
    %v4630 = vpop.f32.mrf.mxu0
    %v4631 = vadd.f32 %v4617, %v4630
    %4632 = vdwg.mxu0
    %4633 = vmatpush.bf16.msra.mxu0 %v2954
    %4634 = vmatpush.bf16.msra.mxu0 %v2950
    %4635 = vmatpush.bf16.msra.mxu0 %v2946
    %4636 = vmatpush.bf16.msra.mxu0 %v2942
    %4637 = vmatpush.bf16.msra.mxu0 %v2938
    %4638 = vmatpush.bf16.msra.mxu0 %v2934
    %4639 = vmatpush.bf16.msra.mxu0 %v2930
    %4640 = vmatpush.bf16.msra.mxu0 %v2926
    %4641 = vmatmul.bf16.gmra.mxu0 %v818
    %v4642 = vpop.f32.mrf.mxu0
    %v4643 = vadd.f32 %v4629, %v4642
    %v4644 = vpop.f32.mrf.mxu0
    %v4645 = vadd.f32 %v4631, %v4644
    %4646 = vdwg.mxu0
    %4647 = vmatpush.bf16.msra.mxu0 %v2986
    %4648 = vmatpush.bf16.msra.mxu0 %v2982
    %4649 = vmatpush.bf16.msra.mxu0 %v2978
    %4650 = vmatpush.bf16.msra.mxu0 %v2974
    %4651 = vmatpush.bf16.msra.mxu0 %v2970
    %4652 = vmatpush.bf16.msra.mxu0 %v2966
    %4653 = vmatpush.bf16.msra.mxu0 %v2962
    %4654 = vmatpush.bf16.msra.mxu0 %v2958
    %4655 = vmatmul.bf16.gmra.mxu0 %v819
    %v4656 = vpop.f32.mrf.mxu0
    %v4657 = vadd.f32 %v4643, %v4656
    %v4658 = vpop.f32.mrf.mxu0
    %v4659 = vadd.f32 %v4645, %v4658
    %4660 = vdwg.mxu0
    %4661 = vmatpush.bf16.msra.mxu0 %v3018
    %4662 = vmatpush.bf16.msra.mxu0 %v3014
    %4663 = vmatpush.bf16.msra.mxu0 %v3010
    %4664 = vmatpush.bf16.msra.mxu0 %v3006
    %4665 = vmatpush.bf16.msra.mxu0 %v3002
    %4666 = vmatpush.bf16.msra.mxu0 %v2998
    %4667 = vmatpush.bf16.msra.mxu0 %v2994
    %4668 = vmatpush.bf16.msra.mxu0 %v2990
    %4669 = vmatmul.bf16.gmra.mxu0 %v820
    %v4670 = vpop.f32.mrf.mxu0
    %v4671 = vadd.f32 %v4657, %v4670
    %v4672 = vpop.f32.mrf.mxu0
    %v4673 = vadd.f32 %v4659, %v4672
    %4674 = vdwg.mxu0
    %4675 = vmatpush.bf16.msra.mxu0 %v3050
    %4676 = vmatpush.bf16.msra.mxu0 %v3046
    %4677 = vmatpush.bf16.msra.mxu0 %v3042
    %4678 = vmatpush.bf16.msra.mxu0 %v3038
    %4679 = vmatpush.bf16.msra.mxu0 %v3034
    %4680 = vmatpush.bf16.msra.mxu0 %v3030
    %4681 = vmatpush.bf16.msra.mxu0 %v3026
    %4682 = vmatpush.bf16.msra.mxu0 %v3022
    %4683 = vmatmul.bf16.gmra.mxu0 %v821
    %v4684 = vpop.f32.mrf.mxu0
    %v4685 = vadd.f32 %v4671, %v4684
    %v4686 = vpop.f32.mrf.mxu0
    %v4687 = vadd.f32 %v4673, %v4686
    %4688 = vdwg.mxu0
    %4689 = vmatpush.bf16.msra.mxu0 %v3082
    %4690 = vmatpush.bf16.msra.mxu0 %v3078
    %4691 = vmatpush.bf16.msra.mxu0 %v3074
    %4692 = vmatpush.bf16.msra.mxu0 %v3070
    %4693 = vmatpush.bf16.msra.mxu0 %v3066
    %4694 = vmatpush.bf16.msra.mxu0 %v3062
    %4695 = vmatpush.bf16.msra.mxu0 %v3058
    %4696 = vmatpush.bf16.msra.mxu0 %v3054
    %4697 = vmatmul.bf16.gmra.mxu0 %v822
    %v4698 = vpop.f32.mrf.mxu0
    %v4699 = vadd.f32 %v4685, %v4698
    %v4700 = vpop.f32.mrf.mxu0
    %v4701 = vadd.f32 %v4687, %v4700
    %4702 = vdwg.mxu0
    %4703 = vmatpush.bf16.msra.mxu0 %v3114
    %4704 = vmatpush.bf16.msra.mxu0 %v3110
    %4705 = vmatpush.bf16.msra.mxu0 %v3106
    %4706 = vmatpush.bf16.msra.mxu0 %v3102
    %4707 = vmatpush.bf16.msra.mxu0 %v3098
    %4708 = vmatpush.bf16.msra.mxu0 %v3094
    %4709 = vmatpush.bf16.msra.mxu0 %v3090
    %4710 = vmatpush.bf16.msra.mxu0 %v3086
    %4711 = vmatmul.bf16.gmra.mxu0 %v823
    %v4712 = vpop.f32.mrf.mxu0
    %v4713 = vadd.f32 %v4699, %v4712
    %v4714 = vpop.f32.mrf.mxu0
    %v4715 = vadd.f32 %v4701, %v4714
    %4716 = vdwg.mxu0
    %4717 = vmatpush.bf16.msra.mxu0 %v3146
    %4718 = vmatpush.bf16.msra.mxu0 %v3142
    %4719 = vmatpush.bf16.msra.mxu0 %v3138
    %4720 = vmatpush.bf16.msra.mxu0 %v3134
    %4721 = vmatpush.bf16.msra.mxu0 %v3130
    %4722 = vmatpush.bf16.msra.mxu0 %v3126
    %4723 = vmatpush.bf16.msra.mxu0 %v3122
    %4724 = vmatpush.bf16.msra.mxu0 %v3118
    %4725 = vmatmul.bf16.gmra.mxu0 %v824
    %v4726 = vpop.f32.mrf.mxu0
    %v4727 = vadd.f32 %v4713, %v4726
    %v4728 = vpop.f32.mrf.mxu0
    %v4729 = vadd.f32 %v4715, %v4728
    %4730 = vdwg.mxu0
    %v4731 = vmax.f32 %v3971, 0.0
    %v4732 = vmax.f32 %v4223, 0.0
    %v4733 = vmax.f32 %v4475, 0.0
    %v4734 = vmax.f32 %v4727, 0.0
    %v4735 = vmax.f32 %v3973, 0.0
    %v4736 = vmax.f32 %v4225, 0.0
    %v4737 = vmax.f32 %v4477, 0.0
    %v4738 = vmax.f32 %v4729, 0.0
    %v4739 = vpack.c.bf16 %v4735, %v4731
    %v4740 = vpack.c.bf16 %v4736, %v4732
    %v4741 = vpack.c.bf16 %v4737, %v4733
    %v4742 = vpack.c.bf16 %v4738, %v4734
    %v4743 = vld [vmem:[#allocation6] sm:$0xff]
    %v4744 = vld [vmem:[#allocation6 + $0x8] sm:$0xff]
    %v4745 = vld [vmem:[#allocation6 + $0x10] sm:$0xf]
    %v4746 = vld [vmem:[#allocation6 + $0x14] sm:$0xff]
    %v4747 = vld [vmem:[#allocation6 + $0x1c] sm:$0xff]
    %v4748 = vld [vmem:[#allocation6 + $0x24] sm:$0xf]
    %v4749 = vld [vmem:[#allocation6 + $0x28] sm:$0xff]
    %v4750 = vld [vmem:[#allocation6 + $0x30] sm:$0xff]
    %v4751 = vld [vmem:[#allocation6 + $0x38] sm:$0xf]
    %v4752 = vld [vmem:[#allocation6 + $0x3c] sm:$0xff]
    %v4753 = vld [vmem:[#allocation6 + $0x44] sm:$0xff]
    %v4754 = vld [vmem:[#allocation6 + $0x4c] sm:$0xf]
    %v4755 = vld [vmem:[#allocation6 + $0x50] sm:$0xff]
    %v4756 = vld [vmem:[#allocation6 + $0x58] sm:$0xff]
    %v4757 = vld [vmem:[#allocation6 + $0x60] sm:$0xf]
    %v4758 = vld [vmem:[#allocation6 + $0x64] sm:$0xff]
    %v4759 = vld [vmem:[#allocation6 + $0x6c] sm:$0xff]
    %v4760 = vld [vmem:[#allocation6 + $0x74] sm:$0xf]
    %v4761 = vld [vmem:[#allocation6 + $0x78] sm:$0xff]
    %v4762 = vld [vmem:[#allocation6 + $0x80] sm:$0xff]
    %v4763 = vld [vmem:[#allocation6 + $0x88] sm:$0xf]
    %v4764 = vld [vmem:[#allocation6 + $0x8c] sm:$0xff]
    %v4765 = vld [vmem:[#allocation6 + $0x94] sm:$0xff]
    %v4766 = vld [vmem:[#allocation6 + $0x9c] sm:$0xf]
    %v4767 = vld [vmem:[#allocation6 + $0xa0] sm:$0xff]
    %v4768 = vld [vmem:[#allocation6 + $0xa8] sm:$0xff]
    %v4769 = vld [vmem:[#allocation6 + $0xb0] sm:$0xf]
    %v4770 = vld [vmem:[#allocation6 + $0xb4] sm:$0xff]
    %v4771 = vld [vmem:[#allocation6 + $0xbc] sm:$0xff]
    %v4772 = vld [vmem:[#allocation6 + $0xc4] sm:$0xf]
    %v4773 = vld [vmem:[#allocation6 + $0xc8] sm:$0xff]
    %v4774 = vld [vmem:[#allocation6 + $0xd0] sm:$0xff]
    %v4775 = vld [vmem:[#allocation6 + $0xd8] sm:$0xf]
    %v4776 = vld [vmem:[#allocation6 + $0xdc] sm:$0xff]
    %v4777 = vld [vmem:[#allocation6 + $0xe4] sm:$0xff]
    %v4778 = vld [vmem:[#allocation6 + $0xec] sm:$0xf]
    %v4779 = vld [vmem:[#allocation6 + $0xf0] sm:$0xff]
    %v4780 = vld [vmem:[#allocation6 + $0xf8] sm:$0xff]
    %v4781 = vld [vmem:[#allocation6 + $0x100] sm:$0xf]
    %v4782 = vld [vmem:[#allocation6 + $0x104] sm:$0xff]
    %v4783 = vld [vmem:[#allocation6 + $0x10c] sm:$0xff]
    %v4784 = vld [vmem:[#allocation6 + $0x114] sm:$0xf]
    %v4785 = vld [vmem:[#allocation6 + $0x118] sm:$0xff]
    %v4786 = vld [vmem:[#allocation6 + $0x120] sm:$0xff]
    %v4787 = vld [vmem:[#allocation6 + $0x128] sm:$0xf]
    %v4788 = vld [vmem:[#allocation6 + $0x12c] sm:$0xff]
    %v4789 = vld [vmem:[#allocation6 + $0x134] sm:$0xff]
    %v4790 = vld [vmem:[#allocation6 + $0x13c] sm:$0xf]
    %v4791 = vld [vmem:[#allocation6 + $0x140] sm:$0xff]
    %v4792 = vld [vmem:[#allocation6 + $0x148] sm:$0xff]
    %v4793 = vld [vmem:[#allocation6 + $0x150] sm:$0xf]
    %v4794 = vld [vmem:[#allocation6 + $0x154] sm:$0xff]
    %v4795 = vld [vmem:[#allocation6 + $0x15c] sm:$0xff]
    %v4796 = vld [vmem:[#allocation6 + $0x164] sm:$0xf]
    %v4797 = vld [vmem:[#allocation6 + $0x168] sm:$0xff]
    %v4798 = vld [vmem:[#allocation6 + $0x170] sm:$0xff]
    %v4799 = vld [vmem:[#allocation6 + $0x178] sm:$0xf]
    %v4800 = vld [vmem:[#allocation6 + $0x17c] sm:$0xff]
    %v4801 = vld [vmem:[#allocation6 + $0x184] sm:$0xff]
    %v4802 = vld [vmem:[#allocation6 + $0x18c] sm:$0xf]
    %v4803 = vld [vmem:[#allocation6 + $0x190] sm:$0xff]
    %v4804 = vld [vmem:[#allocation6 + $0x198] sm:$0xff]
    %v4805 = vld [vmem:[#allocation6 + $0x1a0] sm:$0xf]
    %v4806 = vld [vmem:[#allocation6 + $0x1a4] sm:$0xff]
    %v4807 = vld [vmem:[#allocation6 + $0x1ac] sm:$0xff]
    %v4808 = vld [vmem:[#allocation6 + $0x1b4] sm:$0xf]
    %v4809 = vld [vmem:[#allocation6 + $0x1b8] sm:$0xff]
    %v4810 = vld [vmem:[#allocation6 + $0x1c0] sm:$0xff]
    %v4811 = vld [vmem:[#allocation6 + $0x1c8] sm:$0xf]
    %v4812 = vld [vmem:[#allocation6 + $0x1cc] sm:$0xff]
    %v4813 = vld [vmem:[#allocation6 + $0x1d4] sm:$0xff]
    %v4814 = vld [vmem:[#allocation6 + $0x1dc] sm:$0xf]
    %v4815 = vld [vmem:[#allocation6 + $0x1e0] sm:$0xff]
    %v4816 = vld [vmem:[#allocation6 + $0x1e8] sm:$0xff]
    %v4817 = vld [vmem:[#allocation6 + $0x1f0] sm:$0xf]
    %v4818 = vld [vmem:[#allocation6 + $0x1f4] sm:$0xff]
    %v4819 = vld [vmem:[#allocation6 + $0x1fc] sm:$0xff]
    %v4820 = vld [vmem:[#allocation6 + $0x204] sm:$0xf]
    %v4821 = vld [vmem:[#allocation6 + $0x208] sm:$0xff]
    %v4822 = vld [vmem:[#allocation6 + $0x210] sm:$0xff]
    %v4823 = vld [vmem:[#allocation6 + $0x218] sm:$0xf]
    %v4824 = vld [vmem:[#allocation6 + $0x21c] sm:$0xff]
    %v4825 = vld [vmem:[#allocation6 + $0x224] sm:$0xff]
    %v4826 = vld [vmem:[#allocation6 + $0x22c] sm:$0xf]
    %v4827 = vld [vmem:[#allocation6 + $0x230] sm:$0xff]
    %v4828 = vld [vmem:[#allocation6 + $0x238] sm:$0xff]
    %v4829 = vld [vmem:[#allocation6 + $0x240] sm:$0xf]
    %v4830 = vld [vmem:[#allocation6 + $0x244] sm:$0xff]
    %v4831 = vld [vmem:[#allocation6 + $0x24c] sm:$0xff]
    %v4832 = vld [vmem:[#allocation6 + $0x254] sm:$0xf]
    %v4833 = vld [vmem:[#allocation6 + $0x258] sm:$0xff]
    %v4834 = vld [vmem:[#allocation6 + $0x260] sm:$0xff]
    %v4835 = vld [vmem:[#allocation6 + $0x268] sm:$0xf]
    %v4836 = vld [vmem:[#allocation6 + $0x26c] sm:$0xff]
    %v4837 = vld [vmem:[#allocation6 + $0x274] sm:$0xff]
    %v4838 = vld [vmem:[#allocation6 + $0x27c] sm:$0xf]
    %v4839 = vld [vmem:[#allocation6 + $0x280] sm:$0xff]
    %v4840 = vld [vmem:[#allocation6 + $0x288] sm:$0xff]
    %v4841 = vld [vmem:[#allocation6 + $0x290] sm:$0xf]
    %v4842 = vld [vmem:[#allocation6 + $0x294] sm:$0xff]
    %v4843 = vld [vmem:[#allocation6 + $0x29c] sm:$0xff]
    %v4844 = vld [vmem:[#allocation6 + $0x2a4] sm:$0xf]
    %v4845 = vld [vmem:[#allocation6 + $0x2a8] sm:$0xff]
    %v4846 = vld [vmem:[#allocation6 + $0x2b0] sm:$0xff]
    %v4847 = vld [vmem:[#allocation6 + $0x2b8] sm:$0xf]
    %v4848 = vld [vmem:[#allocation6 + $0x2bc] sm:$0xff]
    %v4849 = vld [vmem:[#allocation6 + $0x2c4] sm:$0xff]
    %v4850 = vld [vmem:[#allocation6 + $0x2cc] sm:$0xf]
    %v4851 = vld [vmem:[#allocation6 + $0x2d0] sm:$0xff]
    %v4852 = vld [vmem:[#allocation6 + $0x2d8] sm:$0xff]
    %v4853 = vld [vmem:[#allocation6 + $0x2e0] sm:$0xf]
    %v4854 = vld [vmem:[#allocation6 + $0x2e4] sm:$0xff]
    %v4855 = vld [vmem:[#allocation6 + $0x2ec] sm:$0xff]
    %v4856 = vld [vmem:[#allocation6 + $0x2f4] sm:$0xf]
    %v4857 = vld [vmem:[#allocation6 + $0x2f8] sm:$0xff]
    %v4858 = vld [vmem:[#allocation6 + $0x300] sm:$0xff]
    %v4859 = vld [vmem:[#allocation6 + $0x308] sm:$0xf]
    %v4860 = vld [vmem:[#allocation6 + $0x30c] sm:$0xff]
    %v4861 = vld [vmem:[#allocation6 + $0x314] sm:$0xff]
    %v4862 = vld [vmem:[#allocation6 + $0x31c] sm:$0xf]
    %v4863 = vld [vmem:[#allocation6 + $0x320] sm:$0xff]
    %v4864 = vld [vmem:[#allocation6 + $0x328] sm:$0xff]
    %v4865 = vld [vmem:[#allocation6 + $0x330] sm:$0xf]
    %v4866 = vld [vmem:[#allocation6 + $0x334] sm:$0xff]
    %v4867 = vld [vmem:[#allocation6 + $0x33c] sm:$0xff]
    %v4868 = vld [vmem:[#allocation6 + $0x344] sm:$0xf]
    %v4869 = vld [vmem:[#allocation6 + $0x348] sm:$0xff]
    %v4870 = vld [vmem:[#allocation6 + $0x350] sm:$0xff]
    %v4871 = vld [vmem:[#allocation6 + $0x358] sm:$0xf]
    %v4872 = vld [vmem:[#allocation6 + $0x35c] sm:$0xff]
    %v4873 = vld [vmem:[#allocation6 + $0x364] sm:$0xff]
    %v4874 = vld [vmem:[#allocation6 + $0x36c] sm:$0xf]
    %v4875 = vld [vmem:[#allocation6 + $0x370] sm:$0xff]
    %v4876 = vld [vmem:[#allocation6 + $0x378] sm:$0xff]
    %v4877 = vld [vmem:[#allocation6 + $0x380] sm:$0xf]
    %v4878 = vld [vmem:[#allocation6 + $0x384] sm:$0xff]
    %v4879 = vld [vmem:[#allocation6 + $0x38c] sm:$0xff]
    %v4880 = vld [vmem:[#allocation6 + $0x394] sm:$0xf]
    %v4881 = vld [vmem:[#allocation6 + $0x398] sm:$0xff]
    %v4882 = vld [vmem:[#allocation6 + $0x3a0] sm:$0xff]
    %v4883 = vld [vmem:[#allocation6 + $0x3a8] sm:$0xf]
    %v4884 = vld [vmem:[#allocation6 + $0x3ac] sm:$0xff]
    %v4885 = vld [vmem:[#allocation6 + $0x3b4] sm:$0xff]
    %v4886 = vld [vmem:[#allocation6 + $0x3bc] sm:$0xf]
    %v4887 = vld [vmem:[#allocation6 + $0x3c0] sm:$0xff]
    %v4888 = vld [vmem:[#allocation6 + $0x3c8] sm:$0xff]
    %v4889 = vld [vmem:[#allocation6 + $0x3d0] sm:$0xf]
    %v4890 = vld [vmem:[#allocation6 + $0x3d4] sm:$0xff]
    %v4891 = vld [vmem:[#allocation6 + $0x3dc] sm:$0xff]
    %v4892 = vld [vmem:[#allocation6 + $0x3e4] sm:$0xf]
    %v4893 = vld [vmem:[#allocation6 + $0x3e8] sm:$0xff]
    %v4894 = vld [vmem:[#allocation6 + $0x3f0] sm:$0xff]
    %v4895 = vld [vmem:[#allocation6 + $0x3f8] sm:$0xf]
    %v4896 = vld [vmem:[#allocation6 + $0x3fc] sm:$0xff]
    %v4897 = vld [vmem:[#allocation6 + $0x404] sm:$0xff]
    %v4898 = vld [vmem:[#allocation6 + $0x40c] sm:$0xf]
    %v4899 = vld [vmem:[#allocation6 + $0x410] sm:$0xff]
    %v4900 = vld [vmem:[#allocation6 + $0x418] sm:$0xff]
    %v4901 = vld [vmem:[#allocation6 + $0x420] sm:$0xf]
    %v4902 = vld [vmem:[#allocation6 + $0x424] sm:$0xff]
    %v4903 = vld [vmem:[#allocation6 + $0x42c] sm:$0xff]
    %v4904 = vld [vmem:[#allocation6 + $0x434] sm:$0xf]
    %v4905 = vld [vmem:[#allocation6 + $0x438] sm:$0xff]
    %v4906 = vld [vmem:[#allocation6 + $0x440] sm:$0xff]
    %v4907 = vld [vmem:[#allocation6 + $0x448] sm:$0xf]
    %v4908 = vld [vmem:[#allocation6 + $0x44c] sm:$0xff]
    %v4909 = vld [vmem:[#allocation6 + $0x454] sm:$0xff]
    %v4910 = vld [vmem:[#allocation6 + $0x45c] sm:$0xf]
    %v4911 = vld [vmem:[#allocation6 + $0x460] sm:$0xff]
    %v4912 = vld [vmem:[#allocation6 + $0x468] sm:$0xff]
    %v4913 = vld [vmem:[#allocation6 + $0x470] sm:$0xf]
    %v4914 = vld [vmem:[#allocation6 + $0x474] sm:$0xff]
    %v4915 = vld [vmem:[#allocation6 + $0x47c] sm:$0xff]
    %v4916 = vld [vmem:[#allocation6 + $0x484] sm:$0xf]
    %v4917 = vld [vmem:[#allocation6 + $0x488] sm:$0xff]
    %v4918 = vld [vmem:[#allocation6 + $0x490] sm:$0xff]
    %v4919 = vld [vmem:[#allocation6 + $0x498] sm:$0xf]
    %v4920 = vld [vmem:[#allocation6 + $0x49c] sm:$0xff]
    %v4921 = vld [vmem:[#allocation6 + $0x4a4] sm:$0xff]
    %v4922 = vld [vmem:[#allocation6 + $0x4ac] sm:$0xf]
    %v4923 = vld [vmem:[#allocation6 + $0x4b0] sm:$0xff]
    %v4924 = vld [vmem:[#allocation6 + $0x4b8] sm:$0xff]
    %v4925 = vld [vmem:[#allocation6 + $0x4c0] sm:$0xf]
    %v4926 = vld [vmem:[#allocation6 + $0x4c4] sm:$0xff]
    %v4927 = vld [vmem:[#allocation6 + $0x4cc] sm:$0xff]
    %v4928 = vld [vmem:[#allocation6 + $0x4d4] sm:$0xf]
    %v4929 = vld [vmem:[#allocation6 + $0x4d8] sm:$0xff]
    %v4930 = vld [vmem:[#allocation6 + $0x4e0] sm:$0xff]
    %v4931 = vld [vmem:[#allocation6 + $0x4e8] sm:$0xf]
    %v4932 = vld [vmem:[#allocation6 + $0x4ec] sm:$0xff]
    %v4933 = vld [vmem:[#allocation6 + $0x4f4] sm:$0xff]
    %v4934 = vld [vmem:[#allocation6 + $0x4fc] sm:$0xf]
    %v4935 = vld [vmem:[#allocation7] sm:$0x1f]
    %v4937 = vperm.slane %v4935, 0
    %v4938 = vperm.slane %v4935, 1
    %v4939 = vperm.slane %v4935, 2
    %v4940 = vperm.slane %v4935, 3
    %v4941 = vperm.slane %v4935, 4
    %v5139 = vunpack.c.l.b16 %v4743
    %v5140 = vunpack.c.h.b16 %v4743
    %v5141 = vunpack.c.l.b16 %v4744
    %v5142 = vunpack.c.h.b16 %v4744
    %v5143 = vunpack.c.l.b16 %v4745
    %v5144 = vunpack.c.l.b16 %v4746
    %v5145 = vunpack.c.h.b16 %v4746
    %v5146 = vunpack.c.l.b16 %v4747
    %v5147 = vunpack.c.h.b16 %v4747
    %v5148 = vunpack.c.l.b16 %v4748
    %v5149 = vunpack.c.l.b16 %v4749
    %v5150 = vunpack.c.h.b16 %v4749
    %v5151 = vunpack.c.l.b16 %v4750
    %v5152 = vunpack.c.h.b16 %v4750
    %v5153 = vunpack.c.l.b16 %v4751
    %v5154 = vunpack.c.l.b16 %v4752
    %v5155 = vunpack.c.h.b16 %v4752
    %v5156 = vunpack.c.l.b16 %v4753
    %v5157 = vunpack.c.h.b16 %v4753
    %v5158 = vunpack.c.l.b16 %v4754
    %v5159 = vunpack.c.l.b16 %v4755
    %v5160 = vunpack.c.h.b16 %v4755
    %v5161 = vunpack.c.l.b16 %v4756
    %v5162 = vunpack.c.h.b16 %v4756
    %v5163 = vunpack.c.l.b16 %v4757
    %v5164 = vunpack.c.l.b16 %v4758
    %v5165 = vunpack.c.h.b16 %v4758
    %v5166 = vunpack.c.l.b16 %v4759
    %v5167 = vunpack.c.h.b16 %v4759
    %v5168 = vunpack.c.l.b16 %v4760
    %v5169 = vunpack.c.l.b16 %v4761
    %v5170 = vunpack.c.h.b16 %v4761
    %v5171 = vunpack.c.l.b16 %v4762
    %v5172 = vunpack.c.h.b16 %v4762
    %v5173 = vunpack.c.l.b16 %v4763
    %v5174 = vunpack.c.l.b16 %v4764
    %v5175 = vunpack.c.h.b16 %v4764
    %v5176 = vunpack.c.l.b16 %v4765
    %v5177 = vunpack.c.h.b16 %v4765
    %v5178 = vunpack.c.l.b16 %v4766
    %v5179 = vunpack.c.l.b16 %v4767
    %v5180 = vunpack.c.h.b16 %v4767
    %v5181 = vunpack.c.l.b16 %v4768
    %v5182 = vunpack.c.h.b16 %v4768
    %v5183 = vunpack.c.l.b16 %v4769
    %v5184 = vunpack.c.l.b16 %v4770
    %v5185 = vunpack.c.h.b16 %v4770
    %v5186 = vunpack.c.l.b16 %v4771
    %v5187 = vunpack.c.h.b16 %v4771
    %v5188 = vunpack.c.l.b16 %v4772
    %v5189 = vunpack.c.l.b16 %v4773
    %v5190 = vunpack.c.h.b16 %v4773
    %v5191 = vunpack.c.l.b16 %v4774
    %v5192 = vunpack.c.h.b16 %v4774
    %v5193 = vunpack.c.l.b16 %v4775
    %v5194 = vunpack.c.l.b16 %v4776
    %v5195 = vunpack.c.h.b16 %v4776
    %v5196 = vunpack.c.l.b16 %v4777
    %v5197 = vunpack.c.h.b16 %v4777
    %v5198 = vunpack.c.l.b16 %v4778
    %v5199 = vunpack.c.l.b16 %v4779
    %v5200 = vunpack.c.h.b16 %v4779
    %v5201 = vunpack.c.l.b16 %v4780
    %v5202 = vunpack.c.h.b16 %v4780
    %v5203 = vunpack.c.l.b16 %v4781
    %v5204 = vunpack.c.l.b16 %v4782
    %v5205 = vunpack.c.h.b16 %v4782
    %v5206 = vunpack.c.l.b16 %v4783
    %v5207 = vunpack.c.h.b16 %v4783
    %v5208 = vunpack.c.l.b16 %v4784
    %v5209 = vunpack.c.l.b16 %v4785
    %v5210 = vunpack.c.h.b16 %v4785
    %v5211 = vunpack.c.l.b16 %v4786
    %v5212 = vunpack.c.h.b16 %v4786
    %v5213 = vunpack.c.l.b16 %v4787
    %v5214 = vunpack.c.l.b16 %v4788
    %v5215 = vunpack.c.h.b16 %v4788
    %v5216 = vunpack.c.l.b16 %v4789
    %v5217 = vunpack.c.h.b16 %v4789
    %v5218 = vunpack.c.l.b16 %v4790
    %v5219 = vunpack.c.l.b16 %v4791
    %v5220 = vunpack.c.h.b16 %v4791
    %v5221 = vunpack.c.l.b16 %v4792
    %v5222 = vunpack.c.h.b16 %v4792
    %v5223 = vunpack.c.l.b16 %v4793
    %v5224 = vunpack.c.l.b16 %v4794
    %v5225 = vunpack.c.h.b16 %v4794
    %v5226 = vunpack.c.l.b16 %v4795
    %v5227 = vunpack.c.h.b16 %v4795
    %v5228 = vunpack.c.l.b16 %v4796
    %v5229 = vunpack.c.l.b16 %v4797
    %v5230 = vunpack.c.h.b16 %v4797
    %v5231 = vunpack.c.l.b16 %v4798
    %v5232 = vunpack.c.h.b16 %v4798
    %v5233 = vunpack.c.l.b16 %v4799
    %v5234 = vunpack.c.l.b16 %v4800
    %v5235 = vunpack.c.h.b16 %v4800
    %v5236 = vunpack.c.l.b16 %v4801
    %v5237 = vunpack.c.h.b16 %v4801
    %v5238 = vunpack.c.l.b16 %v4802
    %v5239 = vunpack.c.l.b16 %v4803
    %v5240 = vunpack.c.h.b16 %v4803
    %v5241 = vunpack.c.l.b16 %v4804
    %v5242 = vunpack.c.h.b16 %v4804
    %v5243 = vunpack.c.l.b16 %v4805
    %v5244 = vunpack.c.l.b16 %v4806
    %v5245 = vunpack.c.h.b16 %v4806
    %v5246 = vunpack.c.l.b16 %v4807
    %v5247 = vunpack.c.h.b16 %v4807
    %v5248 = vunpack.c.l.b16 %v4808
    %v5249 = vunpack.c.l.b16 %v4809
    %v5250 = vunpack.c.h.b16 %v4809
    %v5251 = vunpack.c.l.b16 %v4810
    %v5252 = vunpack.c.h.b16 %v4810
    %v5253 = vunpack.c.l.b16 %v4811
    %v5254 = vunpack.c.l.b16 %v4812
    %v5255 = vunpack.c.h.b16 %v4812
    %v5256 = vunpack.c.l.b16 %v4813
    %v5257 = vunpack.c.h.b16 %v4813
    %v5258 = vunpack.c.l.b16 %v4814
    %v5259 = vunpack.c.l.b16 %v4815
    %v5260 = vunpack.c.h.b16 %v4815
    %v5261 = vunpack.c.l.b16 %v4816
    %v5262 = vunpack.c.h.b16 %v4816
    %v5263 = vunpack.c.l.b16 %v4817
    %v5264 = vunpack.c.l.b16 %v4818
    %v5265 = vunpack.c.h.b16 %v4818
    %v5266 = vunpack.c.l.b16 %v4819
    %v5267 = vunpack.c.h.b16 %v4819
    %v5268 = vunpack.c.l.b16 %v4820
    %v5269 = vunpack.c.l.b16 %v4821
    %v5270 = vunpack.c.h.b16 %v4821
    %v5271 = vunpack.c.l.b16 %v4822
    %v5272 = vunpack.c.h.b16 %v4822
    %v5273 = vunpack.c.l.b16 %v4823
    %v5274 = vunpack.c.l.b16 %v4824
    %v5275 = vunpack.c.h.b16 %v4824
    %v5276 = vunpack.c.l.b16 %v4825
    %v5277 = vunpack.c.h.b16 %v4825
    %v5278 = vunpack.c.l.b16 %v4826
    %v5279 = vunpack.c.l.b16 %v4827
    %v5280 = vunpack.c.h.b16 %v4827
    %v5281 = vunpack.c.l.b16 %v4828
    %v5282 = vunpack.c.h.b16 %v4828
    %v5283 = vunpack.c.l.b16 %v4829
    %v5284 = vunpack.c.l.b16 %v4830
    %v5285 = vunpack.c.h.b16 %v4830
    %v5286 = vunpack.c.l.b16 %v4831
    %v5287 = vunpack.c.h.b16 %v4831
    %v5288 = vunpack.c.l.b16 %v4832
    %v5289 = vunpack.c.l.b16 %v4833
    %v5290 = vunpack.c.h.b16 %v4833
    %v5291 = vunpack.c.l.b16 %v4834
    %v5292 = vunpack.c.h.b16 %v4834
    %v5293 = vunpack.c.l.b16 %v4835
    %v5294 = vunpack.c.l.b16 %v4836
    %v5295 = vunpack.c.h.b16 %v4836
    %v5296 = vunpack.c.l.b16 %v4837
    %v5297 = vunpack.c.h.b16 %v4837
    %v5298 = vunpack.c.l.b16 %v4838
    %v5299 = vunpack.c.l.b16 %v4839
    %v5300 = vunpack.c.h.b16 %v4839
    %v5301 = vunpack.c.l.b16 %v4840
    %v5302 = vunpack.c.h.b16 %v4840
    %v5303 = vunpack.c.l.b16 %v4841
    %v5304 = vunpack.c.l.b16 %v4842
    %v5305 = vunpack.c.h.b16 %v4842
    %v5306 = vunpack.c.l.b16 %v4843
    %v5307 = vunpack.c.h.b16 %v4843
    %v5308 = vunpack.c.l.b16 %v4844
    %v5309 = vunpack.c.l.b16 %v4845
    %v5310 = vunpack.c.h.b16 %v4845
    %v5311 = vunpack.c.l.b16 %v4846
    %v5312 = vunpack.c.h.b16 %v4846
    %v5313 = vunpack.c.l.b16 %v4847
    %v5314 = vunpack.c.l.b16 %v4848
    %v5315 = vunpack.c.h.b16 %v4848
    %v5316 = vunpack.c.l.b16 %v4849
    %v5317 = vunpack.c.h.b16 %v4849
    %v5318 = vunpack.c.l.b16 %v4850
    %v5319 = vunpack.c.l.b16 %v4851
    %v5320 = vunpack.c.h.b16 %v4851
    %v5321 = vunpack.c.l.b16 %v4852
    %v5322 = vunpack.c.h.b16 %v4852
    %v5323 = vunpack.c.l.b16 %v4853
    %v5324 = vunpack.c.l.b16 %v4854
    %v5325 = vunpack.c.h.b16 %v4854
    %v5326 = vunpack.c.l.b16 %v4855
    %v5327 = vunpack.c.h.b16 %v4855
    %v5328 = vunpack.c.l.b16 %v4856
    %v5329 = vunpack.c.l.b16 %v4857
    %v5330 = vunpack.c.h.b16 %v4857
    %v5331 = vunpack.c.l.b16 %v4858
    %v5332 = vunpack.c.h.b16 %v4858
    %v5333 = vunpack.c.l.b16 %v4859
    %v5334 = vunpack.c.l.b16 %v4860
    %v5335 = vunpack.c.h.b16 %v4860
    %v5336 = vunpack.c.l.b16 %v4861
    %v5337 = vunpack.c.h.b16 %v4861
    %v5338 = vunpack.c.l.b16 %v4862
    %v5339 = vunpack.c.l.b16 %v4863
    %v5340 = vunpack.c.h.b16 %v4863
    %v5341 = vunpack.c.l.b16 %v4864
    %v5342 = vunpack.c.h.b16 %v4864
    %v5343 = vunpack.c.l.b16 %v4865
    %v5344 = vunpack.c.l.b16 %v4866
    %v5345 = vunpack.c.h.b16 %v4866
    %v5346 = vunpack.c.l.b16 %v4867
    %v5347 = vunpack.c.h.b16 %v4867
    %v5348 = vunpack.c.l.b16 %v4868
    %v5349 = vunpack.c.l.b16 %v4869
    %v5350 = vunpack.c.h.b16 %v4869
    %v5351 = vunpack.c.l.b16 %v4870
    %v5352 = vunpack.c.h.b16 %v4870
    %v5353 = vunpack.c.l.b16 %v4871
    %v5354 = vunpack.c.l.b16 %v4872
    %v5355 = vunpack.c.h.b16 %v4872
    %v5356 = vunpack.c.l.b16 %v4873
    %v5357 = vunpack.c.h.b16 %v4873
    %v5358 = vunpack.c.l.b16 %v4874
    %v5359 = vunpack.c.l.b16 %v4875
    %v5360 = vunpack.c.h.b16 %v4875
    %v5361 = vunpack.c.l.b16 %v4876
    %v5362 = vunpack.c.h.b16 %v4876
    %v5363 = vunpack.c.l.b16 %v4877
    %v5364 = vunpack.c.l.b16 %v4878
    %v5365 = vunpack.c.h.b16 %v4878
    %v5366 = vunpack.c.l.b16 %v4879
    %v5367 = vunpack.c.h.b16 %v4879
    %v5368 = vunpack.c.l.b16 %v4880
    %v5369 = vunpack.c.l.b16 %v4881
    %v5370 = vunpack.c.h.b16 %v4881
    %v5371 = vunpack.c.l.b16 %v4882
    %v5372 = vunpack.c.h.b16 %v4882
    %v5373 = vunpack.c.l.b16 %v4883
    %v5374 = vunpack.c.l.b16 %v4884
    %v5375 = vunpack.c.h.b16 %v4884
    %v5376 = vunpack.c.l.b16 %v4885
    %v5377 = vunpack.c.h.b16 %v4885
    %v5378 = vunpack.c.l.b16 %v4886
    %v5379 = vunpack.c.l.b16 %v4887
    %v5380 = vunpack.c.h.b16 %v4887
    %v5381 = vunpack.c.l.b16 %v4888
    %v5382 = vunpack.c.h.b16 %v4888
    %v5383 = vunpack.c.l.b16 %v4889
    %v5384 = vunpack.c.l.b16 %v4890
    %v5385 = vunpack.c.h.b16 %v4890
    %v5386 = vunpack.c.l.b16 %v4891
    %v5387 = vunpack.c.h.b16 %v4891
    %v5388 = vunpack.c.l.b16 %v4892
    %v5389 = vunpack.c.l.b16 %v4893
    %v5390 = vunpack.c.h.b16 %v4893
    %v5391 = vunpack.c.l.b16 %v4894
    %v5392 = vunpack.c.h.b16 %v4894
    %v5393 = vunpack.c.l.b16 %v4895
    %v5394 = vunpack.c.l.b16 %v4896
    %v5395 = vunpack.c.h.b16 %v4896
    %v5396 = vunpack.c.l.b16 %v4897
    %v5397 = vunpack.c.h.b16 %v4897
    %v5398 = vunpack.c.l.b16 %v4898
    %v5399 = vunpack.c.l.b16 %v4899
    %v5400 = vunpack.c.h.b16 %v4899
    %v5401 = vunpack.c.l.b16 %v4900
    %v5402 = vunpack.c.h.b16 %v4900
    %v5403 = vunpack.c.l.b16 %v4901
    %v5404 = vunpack.c.l.b16 %v4902
    %v5405 = vunpack.c.h.b16 %v4902
    %v5406 = vunpack.c.l.b16 %v4903
    %v5407 = vunpack.c.h.b16 %v4903
    %v5408 = vunpack.c.l.b16 %v4904
    %v5409 = vunpack.c.l.b16 %v4905
    %v5410 = vunpack.c.h.b16 %v4905
    %v5411 = vunpack.c.l.b16 %v4906
    %v5412 = vunpack.c.h.b16 %v4906
    %v5413 = vunpack.c.l.b16 %v4907
    %v5414 = vunpack.c.l.b16 %v4908
    %v5415 = vunpack.c.h.b16 %v4908
    %v5416 = vunpack.c.l.b16 %v4909
    %v5417 = vunpack.c.h.b16 %v4909
    %v5418 = vunpack.c.l.b16 %v4910
    %v5419 = vunpack.c.l.b16 %v4911
    %v5420 = vunpack.c.h.b16 %v4911
    %v5421 = vunpack.c.l.b16 %v4912
    %v5422 = vunpack.c.h.b16 %v4912
    %v5423 = vunpack.c.l.b16 %v4913
    %v5424 = vunpack.c.l.b16 %v4914
    %v5425 = vunpack.c.h.b16 %v4914
    %v5426 = vunpack.c.l.b16 %v4915
    %v5427 = vunpack.c.h.b16 %v4915
    %v5428 = vunpack.c.l.b16 %v4916
    %v5429 = vunpack.c.l.b16 %v4917
    %v5430 = vunpack.c.h.b16 %v4917
    %v5431 = vunpack.c.l.b16 %v4918
    %v5432 = vunpack.c.h.b16 %v4918
    %v5433 = vunpack.c.l.b16 %v4919
    %v5434 = vunpack.c.l.b16 %v4920
    %v5435 = vunpack.c.h.b16 %v4920
    %v5436 = vunpack.c.l.b16 %v4921
    %v5437 = vunpack.c.h.b16 %v4921
    %v5438 = vunpack.c.l.b16 %v4922
    %v5439 = vunpack.c.l.b16 %v4923
    %v5440 = vunpack.c.h.b16 %v4923
    %v5441 = vunpack.c.l.b16 %v4924
    %v5442 = vunpack.c.h.b16 %v4924
    %v5443 = vunpack.c.l.b16 %v4925
    %v5444 = vunpack.c.l.b16 %v4926
    %v5445 = vunpack.c.h.b16 %v4926
    %v5446 = vunpack.c.l.b16 %v4927
    %v5447 = vunpack.c.h.b16 %v4927
    %v5448 = vunpack.c.l.b16 %v4928
    %v5449 = vunpack.c.l.b16 %v4929
    %v5450 = vunpack.c.h.b16 %v4929
    %v5451 = vunpack.c.l.b16 %v4930
    %v5452 = vunpack.c.h.b16 %v4930
    %v5453 = vunpack.c.l.b16 %v4931
    %v5454 = vunpack.c.l.b16 %v4932
    %v5455 = vunpack.c.h.b16 %v4932
    %v5456 = vunpack.c.l.b16 %v4933
    %v5457 = vunpack.c.h.b16 %v4933
    %v5458 = vunpack.c.l.b16 %v4934
    %v5459 = vpack.c.b16 %v5144, %v5139
    %v5460 = vpack.c.b16 %v5145, %v5140
    %v5461 = vpack.c.b16 %v5146, %v5141
    %v5462 = vpack.c.b16 %v5147, %v5142
    %v5463 = vpack.c.b16 %v5148, %v5143
    %v5464 = vpack.c.b16 %v5154, %v5149
    %v5465 = vpack.c.b16 %v5155, %v5150
    %v5466 = vpack.c.b16 %v5156, %v5151
    %v5467 = vpack.c.b16 %v5157, %v5152
    %v5468 = vpack.c.b16 %v5158, %v5153
    %v5469 = vpack.c.b16 %v5164, %v5159
    %v5470 = vpack.c.b16 %v5165, %v5160
    %v5471 = vpack.c.b16 %v5166, %v5161
    %v5472 = vpack.c.b16 %v5167, %v5162
    %v5473 = vpack.c.b16 %v5168, %v5163
    %v5474 = vpack.c.b16 %v5174, %v5169
    %v5475 = vpack.c.b16 %v5175, %v5170
    %v5476 = vpack.c.b16 %v5176, %v5171
    %v5477 = vpack.c.b16 %v5177, %v5172
    %v5478 = vpack.c.b16 %v5178, %v5173
    %v5479 = vpack.c.b16 %v5184, %v5179
    %v5480 = vpack.c.b16 %v5185, %v5180
    %v5481 = vpack.c.b16 %v5186, %v5181
    %v5482 = vpack.c.b16 %v5187, %v5182
    %v5483 = vpack.c.b16 %v5188, %v5183
    %v5484 = vpack.c.b16 %v5194, %v5189
    %v5485 = vpack.c.b16 %v5195, %v5190
    %v5486 = vpack.c.b16 %v5196, %v5191
    %v5487 = vpack.c.b16 %v5197, %v5192
    %v5488 = vpack.c.b16 %v5198, %v5193
    %v5489 = vpack.c.b16 %v5204, %v5199
    %v5490 = vpack.c.b16 %v5205, %v5200
    %v5491 = vpack.c.b16 %v5206, %v5201
    %v5492 = vpack.c.b16 %v5207, %v5202
    %v5493 = vpack.c.b16 %v5208, %v5203
    %v5494 = vpack.c.b16 %v5214, %v5209
    %v5495 = vpack.c.b16 %v5215, %v5210
    %v5496 = vpack.c.b16 %v5216, %v5211
    %v5497 = vpack.c.b16 %v5217, %v5212
    %v5498 = vpack.c.b16 %v5218, %v5213
    %v5499 = vpack.c.b16 %v5224, %v5219
    %v5500 = vpack.c.b16 %v5225, %v5220
    %v5501 = vpack.c.b16 %v5226, %v5221
    %v5502 = vpack.c.b16 %v5227, %v5222
    %v5503 = vpack.c.b16 %v5228, %v5223
    %v5504 = vpack.c.b16 %v5234, %v5229
    %v5505 = vpack.c.b16 %v5235, %v5230
    %v5506 = vpack.c.b16 %v5236, %v5231
    %v5507 = vpack.c.b16 %v5237, %v5232
    %v5508 = vpack.c.b16 %v5238, %v5233
    %v5509 = vpack.c.b16 %v5244, %v5239
    %v5510 = vpack.c.b16 %v5245, %v5240
    %v5511 = vpack.c.b16 %v5246, %v5241
    %v5512 = vpack.c.b16 %v5247, %v5242
    %v5513 = vpack.c.b16 %v5248, %v5243
    %v5514 = vpack.c.b16 %v5254, %v5249
    %v5515 = vpack.c.b16 %v5255, %v5250
    %v5516 = vpack.c.b16 %v5256, %v5251
    %v5517 = vpack.c.b16 %v5257, %v5252
    %v5518 = vpack.c.b16 %v5258, %v5253
    %v5519 = vpack.c.b16 %v5264, %v5259
    %v5520 = vpack.c.b16 %v5265, %v5260
    %v5521 = vpack.c.b16 %v5266, %v5261
    %v5522 = vpack.c.b16 %v5267, %v5262
    %v5523 = vpack.c.b16 %v5268, %v5263
    %v5524 = vpack.c.b16 %v5274, %v5269
    %v5525 = vpack.c.b16 %v5275, %v5270
    %v5526 = vpack.c.b16 %v5276, %v5271
    %v5527 = vpack.c.b16 %v5277, %v5272
    %v5528 = vpack.c.b16 %v5278, %v5273
    %v5529 = vpack.c.b16 %v5284, %v5279
    %v5530 = vpack.c.b16 %v5285, %v5280
    %v5531 = vpack.c.b16 %v5286, %v5281
    %v5532 = vpack.c.b16 %v5287, %v5282
    %v5533 = vpack.c.b16 %v5288, %v5283
    %v5534 = vpack.c.b16 %v5294, %v5289
    %v5535 = vpack.c.b16 %v5295, %v5290
    %v5536 = vpack.c.b16 %v5296, %v5291
    %v5537 = vpack.c.b16 %v5297, %v5292
    %v5538 = vpack.c.b16 %v5298, %v5293
    %v5539 = vpack.c.b16 %v5304, %v5299
    %v5540 = vpack.c.b16 %v5305, %v5300
    %v5541 = vpack.c.b16 %v5306, %v5301
    %v5542 = vpack.c.b16 %v5307, %v5302
    %v5543 = vpack.c.b16 %v5308, %v5303
    %v5544 = vpack.c.b16 %v5314, %v5309
    %v5545 = vpack.c.b16 %v5315, %v5310
    %v5546 = vpack.c.b16 %v5316, %v5311
    %v5547 = vpack.c.b16 %v5317, %v5312
    %v5548 = vpack.c.b16 %v5318, %v5313
    %v5549 = vpack.c.b16 %v5324, %v5319
    %v5550 = vpack.c.b16 %v5325, %v5320
    %v5551 = vpack.c.b16 %v5326, %v5321
    %v5552 = vpack.c.b16 %v5327, %v5322
    %v5553 = vpack.c.b16 %v5328, %v5323
    %v5554 = vpack.c.b16 %v5334, %v5329
    %v5555 = vpack.c.b16 %v5335, %v5330
    %v5556 = vpack.c.b16 %v5336, %v5331
    %v5557 = vpack.c.b16 %v5337, %v5332
    %v5558 = vpack.c.b16 %v5338, %v5333
    %v5559 = vpack.c.b16 %v5344, %v5339
    %v5560 = vpack.c.b16 %v5345, %v5340
    %v5561 = vpack.c.b16 %v5346, %v5341
    %v5562 = vpack.c.b16 %v5347, %v5342
    %v5563 = vpack.c.b16 %v5348, %v5343
    %v5564 = vpack.c.b16 %v5354, %v5349
    %v5565 = vpack.c.b16 %v5355, %v5350
    %v5566 = vpack.c.b16 %v5356, %v5351
    %v5567 = vpack.c.b16 %v5357, %v5352
    %v5568 = vpack.c.b16 %v5358, %v5353
    %v5569 = vpack.c.b16 %v5364, %v5359
    %v5570 = vpack.c.b16 %v5365, %v5360
    %v5571 = vpack.c.b16 %v5366, %v5361
    %v5572 = vpack.c.b16 %v5367, %v5362
    %v5573 = vpack.c.b16 %v5368, %v5363
    %v5574 = vpack.c.b16 %v5374, %v5369
    %v5575 = vpack.c.b16 %v5375, %v5370
    %v5576 = vpack.c.b16 %v5376, %v5371
    %v5577 = vpack.c.b16 %v5377, %v5372
    %v5578 = vpack.c.b16 %v5378, %v5373
    %v5579 = vpack.c.b16 %v5384, %v5379
    %v5580 = vpack.c.b16 %v5385, %v5380
    %v5581 = vpack.c.b16 %v5386, %v5381
    %v5582 = vpack.c.b16 %v5387, %v5382
    %v5583 = vpack.c.b16 %v5388, %v5383
    %v5584 = vpack.c.b16 %v5394, %v5389
    %v5585 = vpack.c.b16 %v5395, %v5390
    %v5586 = vpack.c.b16 %v5396, %v5391
    %v5587 = vpack.c.b16 %v5397, %v5392
    %v5588 = vpack.c.b16 %v5398, %v5393
    %v5589 = vpack.c.b16 %v5404, %v5399
    %v5590 = vpack.c.b16 %v5405, %v5400
    %v5591 = vpack.c.b16 %v5406, %v5401
    %v5592 = vpack.c.b16 %v5407, %v5402
    %v5593 = vpack.c.b16 %v5408, %v5403
    %v5594 = vpack.c.b16 %v5414, %v5409
    %v5595 = vpack.c.b16 %v5415, %v5410
    %v5596 = vpack.c.b16 %v5416, %v5411
    %v5597 = vpack.c.b16 %v5417, %v5412
    %v5598 = vpack.c.b16 %v5418, %v5413
    %v5599 = vpack.c.b16 %v5424, %v5419
    %v5600 = vpack.c.b16 %v5425, %v5420
    %v5601 = vpack.c.b16 %v5426, %v5421
    %v5602 = vpack.c.b16 %v5427, %v5422
    %v5603 = vpack.c.b16 %v5428, %v5423
    %v5604 = vpack.c.b16 %v5434, %v5429
    %v5605 = vpack.c.b16 %v5435, %v5430
    %v5606 = vpack.c.b16 %v5436, %v5431
    %v5607 = vpack.c.b16 %v5437, %v5432
    %v5608 = vpack.c.b16 %v5438, %v5433
    %v5609 = vpack.c.b16 %v5444, %v5439
    %v5610 = vpack.c.b16 %v5445, %v5440
    %v5611 = vpack.c.b16 %v5446, %v5441
    %v5612 = vpack.c.b16 %v5447, %v5442
    %v5613 = vpack.c.b16 %v5448, %v5443
    %v5614 = vpack.c.b16 %v5454, %v5449
    %v5615 = vpack.c.b16 %v5455, %v5450
    %v5616 = vpack.c.b16 %v5456, %v5451
    %v5617 = vpack.c.b16 %v5457, %v5452
    %v5618 = vpack.c.b16 %v5458, %v5453
    %5779 = vmatpush.bf16.msra.mxu0 %v5494
    %5780 = vmatpush.bf16.msra.mxu0 %v5489
    %5781 = vmatpush.bf16.msra.mxu0 %v5484
    %5782 = vmatpush.bf16.msra.mxu0 %v5479
    %5783 = vmatpush.bf16.msra.mxu0 %v5474
    %5784 = vmatpush.bf16.msra.mxu0 %v5469
    %5785 = vmatpush.bf16.msra.mxu0 %v5464
    %5786 = vmatpush.bf16.msra.mxu0 %v5459
    %5787 = vmatmul.bf16.gmra.mxu0 %v4739
    %v5788 = vpop.f32.mrf.mxu0
    %v5789 = vadd.f32 %v4937, %v5788
    %v5790 = vpop.f32.mrf.mxu0
    %v5791 = vadd.f32 %v4937, %v5790
    %5792 = vdwg.mxu0
    %5793 = vmatpush.bf16.msra.mxu0 %v5534
    %5794 = vmatpush.bf16.msra.mxu0 %v5529
    %5795 = vmatpush.bf16.msra.mxu0 %v5524
    %5796 = vmatpush.bf16.msra.mxu0 %v5519
    %5797 = vmatpush.bf16.msra.mxu0 %v5514
    %5798 = vmatpush.bf16.msra.mxu0 %v5509
    %5799 = vmatpush.bf16.msra.mxu0 %v5504
    %5800 = vmatpush.bf16.msra.mxu0 %v5499
    %5801 = vmatmul.bf16.gmra.mxu0 %v4740
    %v5802 = vpop.f32.mrf.mxu0
    %v5803 = vadd.f32 %v5789, %v5802
    %v5804 = vpop.f32.mrf.mxu0
    %v5805 = vadd.f32 %v5791, %v5804
    %5806 = vdwg.mxu0
    %5807 = vmatpush.bf16.msra.mxu0 %v5574
    %5808 = vmatpush.bf16.msra.mxu0 %v5569
    %5809 = vmatpush.bf16.msra.mxu0 %v5564
    %5810 = vmatpush.bf16.msra.mxu0 %v5559
    %5811 = vmatpush.bf16.msra.mxu0 %v5554
    %5812 = vmatpush.bf16.msra.mxu0 %v5549
    %5813 = vmatpush.bf16.msra.mxu0 %v5544
    %5814 = vmatpush.bf16.msra.mxu0 %v5539
    %5815 = vmatmul.bf16.gmra.mxu0 %v4741
    %v5816 = vpop.f32.mrf.mxu0
    %v5817 = vadd.f32 %v5803, %v5816
    %v5818 = vpop.f32.mrf.mxu0
    %v5819 = vadd.f32 %v5805, %v5818
    %5820 = vdwg.mxu0
    %5821 = vmatpush.bf16.msra.mxu0 %v5614
    %5822 = vmatpush.bf16.msra.mxu0 %v5609
    %5823 = vmatpush.bf16.msra.mxu0 %v5604
    %5824 = vmatpush.bf16.msra.mxu0 %v5599
    %5825 = vmatpush.bf16.msra.mxu0 %v5594
    %5826 = vmatpush.bf16.msra.mxu0 %v5589
    %5827 = vmatpush.bf16.msra.mxu0 %v5584
    %5828 = vmatpush.bf16.msra.mxu0 %v5579
    %5829 = vmatmul.bf16.gmra.mxu0 %v4742
    %v5830 = vpop.f32.mrf.mxu0
    %v5831 = vadd.f32 %v5817, %v5830
    %v5832 = vpop.f32.mrf.mxu0
    %v5833 = vadd.f32 %v5819, %v5832
    %5834 = vdwg.mxu0
    %5835 = vmatpush.bf16.msra.mxu0 %v5495
    %5836 = vmatpush.bf16.msra.mxu0 %v5490
    %5837 = vmatpush.bf16.msra.mxu0 %v5485
    %5838 = vmatpush.bf16.msra.mxu0 %v5480
    %5839 = vmatpush.bf16.msra.mxu0 %v5475
    %5840 = vmatpush.bf16.msra.mxu0 %v5470
    %5841 = vmatpush.bf16.msra.mxu0 %v5465
    %5842 = vmatpush.bf16.msra.mxu0 %v5460
    %5843 = vmatmul.bf16.gmra.mxu0 %v4739
    %v5844 = vpop.f32.mrf.mxu0
    %v5845 = vadd.f32 %v4938, %v5844
    %v5846 = vpop.f32.mrf.mxu0
    %v5847 = vadd.f32 %v4938, %v5846
    %5848 = vdwg.mxu0
    %5849 = vmatpush.bf16.msra.mxu0 %v5535
    %5850 = vmatpush.bf16.msra.mxu0 %v5530
    %5851 = vmatpush.bf16.msra.mxu0 %v5525
    %5852 = vmatpush.bf16.msra.mxu0 %v5520
    %5853 = vmatpush.bf16.msra.mxu0 %v5515
    %5854 = vmatpush.bf16.msra.mxu0 %v5510
    %5855 = vmatpush.bf16.msra.mxu0 %v5505
    %5856 = vmatpush.bf16.msra.mxu0 %v5500
    %5857 = vmatmul.bf16.gmra.mxu0 %v4740
    %v5858 = vpop.f32.mrf.mxu0
    %v5859 = vadd.f32 %v5845, %v5858
    %v5860 = vpop.f32.mrf.mxu0
    %v5861 = vadd.f32 %v5847, %v5860
    %5862 = vdwg.mxu0
    %5863 = vmatpush.bf16.msra.mxu0 %v5575
    %5864 = vmatpush.bf16.msra.mxu0 %v5570
    %5865 = vmatpush.bf16.msra.mxu0 %v5565
    %5866 = vmatpush.bf16.msra.mxu0 %v5560
    %5867 = vmatpush.bf16.msra.mxu0 %v5555
    %5868 = vmatpush.bf16.msra.mxu0 %v5550
    %5869 = vmatpush.bf16.msra.mxu0 %v5545
    %5870 = vmatpush.bf16.msra.mxu0 %v5540
    %5871 = vmatmul.bf16.gmra.mxu0 %v4741
    %v5872 = vpop.f32.mrf.mxu0
    %v5873 = vadd.f32 %v5859, %v5872
    %v5874 = vpop.f32.mrf.mxu0
    %v5875 = vadd.f32 %v5861, %v5874
    %5876 = vdwg.mxu0
    %5877 = vmatpush.bf16.msra.mxu0 %v5615
    %5878 = vmatpush.bf16.msra.mxu0 %v5610
    %5879 = vmatpush.bf16.msra.mxu0 %v5605
    %5880 = vmatpush.bf16.msra.mxu0 %v5600
    %5881 = vmatpush.bf16.msra.mxu0 %v5595
    %5882 = vmatpush.bf16.msra.mxu0 %v5590
    %5883 = vmatpush.bf16.msra.mxu0 %v5585
    %5884 = vmatpush.bf16.msra.mxu0 %v5580
    %5885 = vmatmul.bf16.gmra.mxu0 %v4742
    %v5886 = vpop.f32.mrf.mxu0
    %v5887 = vadd.f32 %v5873, %v5886
    %v5888 = vpop.f32.mrf.mxu0
    %v5889 = vadd.f32 %v5875, %v5888
    %5890 = vdwg.mxu0
    %5891 = vmatpush.bf16.msra.mxu0 %v5496
    %5892 = vmatpush.bf16.msra.mxu0 %v5491
    %5893 = vmatpush.bf16.msra.mxu0 %v5486
    %5894 = vmatpush.bf16.msra.mxu0 %v5481
    %5895 = vmatpush.bf16.msra.mxu0 %v5476
    %5896 = vmatpush.bf16.msra.mxu0 %v5471
    %5897 = vmatpush.bf16.msra.mxu0 %v5466
    %5898 = vmatpush.bf16.msra.mxu0 %v5461
    %5899 = vmatmul.bf16.gmra.mxu0 %v4739
    %v5900 = vpop.f32.mrf.mxu0
    %v5901 = vadd.f32 %v4939, %v5900
    %v5902 = vpop.f32.mrf.mxu0
    %v5903 = vadd.f32 %v4939, %v5902
    %5904 = vdwg.mxu0
    %5905 = vmatpush.bf16.msra.mxu0 %v5536
    %5906 = vmatpush.bf16.msra.mxu0 %v5531
    %5907 = vmatpush.bf16.msra.mxu0 %v5526
    %5908 = vmatpush.bf16.msra.mxu0 %v5521
    %5909 = vmatpush.bf16.msra.mxu0 %v5516
    %5910 = vmatpush.bf16.msra.mxu0 %v5511
    %5911 = vmatpush.bf16.msra.mxu0 %v5506
    %5912 = vmatpush.bf16.msra.mxu0 %v5501
    %5913 = vmatmul.bf16.gmra.mxu0 %v4740
    %v5914 = vpop.f32.mrf.mxu0
    %v5915 = vadd.f32 %v5901, %v5914
    %v5916 = vpop.f32.mrf.mxu0
    %v5917 = vadd.f32 %v5903, %v5916
    %5918 = vdwg.mxu0
    %5919 = vmatpush.bf16.msra.mxu0 %v5576
    %5920 = vmatpush.bf16.msra.mxu0 %v5571
    %5921 = vmatpush.bf16.msra.mxu0 %v5566
    %5922 = vmatpush.bf16.msra.mxu0 %v5561
    %5923 = vmatpush.bf16.msra.mxu0 %v5556
    %5924 = vmatpush.bf16.msra.mxu0 %v5551
    %5925 = vmatpush.bf16.msra.mxu0 %v5546
    %5926 = vmatpush.bf16.msra.mxu0 %v5541
    %5927 = vmatmul.bf16.gmra.mxu0 %v4741
    %v5928 = vpop.f32.mrf.mxu0
    %v5929 = vadd.f32 %v5915, %v5928
    %v5930 = vpop.f32.mrf.mxu0
    %v5931 = vadd.f32 %v5917, %v5930
    %5932 = vdwg.mxu0
    %5933 = vmatpush.bf16.msra.mxu0 %v5616
    %5934 = vmatpush.bf16.msra.mxu0 %v5611
    %5935 = vmatpush.bf16.msra.mxu0 %v5606
    %5936 = vmatpush.bf16.msra.mxu0 %v5601
    %5937 = vmatpush.bf16.msra.mxu0 %v5596
    %5938 = vmatpush.bf16.msra.mxu0 %v5591
    %5939 = vmatpush.bf16.msra.mxu0 %v5586
    %5940 = vmatpush.bf16.msra.mxu0 %v5581
    %5941 = vmatmul.bf16.gmra.mxu0 %v4742
    %v5942 = vpop.f32.mrf.mxu0
    %v5943 = vadd.f32 %v5929, %v5942
    %v5944 = vpop.f32.mrf.mxu0
    %v5945 = vadd.f32 %v5931, %v5944
    %5946 = vdwg.mxu0
    %5947 = vmatpush.bf16.msra.mxu0 %v5497
    %5948 = vmatpush.bf16.msra.mxu0 %v5492
    %5949 = vmatpush.bf16.msra.mxu0 %v5487
    %5950 = vmatpush.bf16.msra.mxu0 %v5482
    %5951 = vmatpush.bf16.msra.mxu0 %v5477
    %5952 = vmatpush.bf16.msra.mxu0 %v5472
    %5953 = vmatpush.bf16.msra.mxu0 %v5467
    %5954 = vmatpush.bf16.msra.mxu0 %v5462
    %5955 = vmatmul.bf16.gmra.mxu0 %v4739
    %v5956 = vpop.f32.mrf.mxu0
    %v5957 = vadd.f32 %v4940, %v5956
    %v5958 = vpop.f32.mrf.mxu0
    %v5959 = vadd.f32 %v4940, %v5958
    %5960 = vdwg.mxu0
    %5961 = vmatpush.bf16.msra.mxu0 %v5537
    %5962 = vmatpush.bf16.msra.mxu0 %v5532
    %5963 = vmatpush.bf16.msra.mxu0 %v5527
    %5964 = vmatpush.bf16.msra.mxu0 %v5522
    %5965 = vmatpush.bf16.msra.mxu0 %v5517
    %5966 = vmatpush.bf16.msra.mxu0 %v5512
    %5967 = vmatpush.bf16.msra.mxu0 %v5507
    %5968 = vmatpush.bf16.msra.mxu0 %v5502
    %5969 = vmatmul.bf16.gmra.mxu0 %v4740
    %v5970 = vpop.f32.mrf.mxu0
    %v5971 = vadd.f32 %v5957, %v5970
    %v5972 = vpop.f32.mrf.mxu0
    %v5973 = vadd.f32 %v5959, %v5972
    %5974 = vdwg.mxu0
    %5975 = vmatpush.bf16.msra.mxu0 %v5577
    %5976 = vmatpush.bf16.msra.mxu0 %v5572
    %5977 = vmatpush.bf16.msra.mxu0 %v5567
    %5978 = vmatpush.bf16.msra.mxu0 %v5562
    %5979 = vmatpush.bf16.msra.mxu0 %v5557
    %5980 = vmatpush.bf16.msra.mxu0 %v5552
    %5981 = vmatpush.bf16.msra.mxu0 %v5547
    %5982 = vmatpush.bf16.msra.mxu0 %v5542
    %5983 = vmatmul.bf16.gmra.mxu0 %v4741
    %v5984 = vpop.f32.mrf.mxu0
    %v5985 = vadd.f32 %v5971, %v5984
    %v5986 = vpop.f32.mrf.mxu0
    %v5987 = vadd.f32 %v5973, %v5986
    %5988 = vdwg.mxu0
    %5989 = vmatpush.bf16.msra.mxu0 %v5617
    %5990 = vmatpush.bf16.msra.mxu0 %v5612
    %5991 = vmatpush.bf16.msra.mxu0 %v5607
    %5992 = vmatpush.bf16.msra.mxu0 %v5602
    %5993 = vmatpush.bf16.msra.mxu0 %v5597
    %5994 = vmatpush.bf16.msra.mxu0 %v5592
    %5995 = vmatpush.bf16.msra.mxu0 %v5587
    %5996 = vmatpush.bf16.msra.mxu0 %v5582
    %5997 = vmatmul.bf16.gmra.mxu0 %v4742
    %v5998 = vpop.f32.mrf.mxu0
    %v5999 = vadd.f32 %v5985, %v5998
    %v6000 = vpop.f32.mrf.mxu0
    %v6001 = vadd.f32 %v5987, %v6000
    %6002 = vdwg.mxu0
    %6003 = vmatpush.bf16.msra.mxu0 %v5498
    %6004 = vmatpush.bf16.msra.mxu0 %v5493
    %6005 = vmatpush.bf16.msra.mxu0 %v5488
    %6006 = vmatpush.bf16.msra.mxu0 %v5483
    %6007 = vmatpush.bf16.msra.mxu0 %v5478
    %6008 = vmatpush.bf16.msra.mxu0 %v5473
    %6009 = vmatpush.bf16.msra.mxu0 %v5468
    %6010 = vmatpush.bf16.msra.mxu0 %v5463
    %6011 = vmatmul.bf16.gmra.mxu0 %v4739
    %v6012 = vpop.f32.mrf.mxu0
    %v6013 = vadd.f32 %v4941, %v6012
    %v6014 = vpop.f32.mrf.mxu0
    %v6015 = vadd.f32 %v4941, %v6014
    %6016 = vdwg.mxu0
    %6017 = vmatpush.bf16.msra.mxu0 %v5538
    %6018 = vmatpush.bf16.msra.mxu0 %v5533
    %6019 = vmatpush.bf16.msra.mxu0 %v5528
    %6020 = vmatpush.bf16.msra.mxu0 %v5523
    %6021 = vmatpush.bf16.msra.mxu0 %v5518
    %6022 = vmatpush.bf16.msra.mxu0 %v5513
    %6023 = vmatpush.bf16.msra.mxu0 %v5508
    %6024 = vmatpush.bf16.msra.mxu0 %v5503
    %6025 = vmatmul.bf16.gmra.mxu0 %v4740
    %v6026 = vpop.f32.mrf.mxu0
    %v6027 = vadd.f32 %v6013, %v6026
    %v6028 = vpop.f32.mrf.mxu0
    %v6029 = vadd.f32 %v6015, %v6028
    %6030 = vdwg.mxu0
    %6031 = vmatpush.bf16.msra.mxu0 %v5578
    %6032 = vmatpush.bf16.msra.mxu0 %v5573
    %6033 = vmatpush.bf16.msra.mxu0 %v5568
    %6034 = vmatpush.bf16.msra.mxu0 %v5563
    %6035 = vmatpush.bf16.msra.mxu0 %v5558
    %6036 = vmatpush.bf16.msra.mxu0 %v5553
    %6037 = vmatpush.bf16.msra.mxu0 %v5548
    %6038 = vmatpush.bf16.msra.mxu0 %v5543
    %6039 = vmatmul.bf16.gmra.mxu0 %v4741
    %v6040 = vpop.f32.mrf.mxu0
    %v6041 = vadd.f32 %v6027, %v6040
    %v6042 = vpop.f32.mrf.mxu0
    %v6043 = vadd.f32 %v6029, %v6042
    %6044 = vdwg.mxu0
    %6045 = vmatpush.bf16.msra.mxu0 %v5618
    %6046 = vmatpush.bf16.msra.mxu0 %v5613
    %6047 = vmatpush.bf16.msra.mxu0 %v5608
    %6048 = vmatpush.bf16.msra.mxu0 %v5603
    %6049 = vmatpush.bf16.msra.mxu0 %v5598
    %6050 = vmatpush.bf16.msra.mxu0 %v5593
    %6051 = vmatpush.bf16.msra.mxu0 %v5588
    %6052 = vmatpush.bf16.msra.mxu0 %v5583
    %6053 = vmatmul.bf16.gmra.mxu0 %v4742
    %v6054 = vpop.f32.mrf.mxu0
    %v6055 = vadd.f32 %v6041, %v6054
    %v6056 = vpop.f32.mrf.mxu0
    %v6057 = vadd.f32 %v6043, %v6056
    %6058 = vdwg.mxu0
    %v6059 = vmax.f32 %v5831, 0.0
    %v6060 = vmax.f32 %v5887, 0.0
    %v6061 = vmax.f32 %v5943, 0.0
    %v6062 = vmax.f32 %v5999, 0.0
    %v6063 = vmax.f32 %v6055, 0.0
    %v6064 = vmax.f32 %v5833, 0.0
    %v6065 = vmax.f32 %v5889, 0.0
    %v6066 = vmax.f32 %v5945, 0.0
    %v6067 = vmax.f32 %v6001, 0.0
    %v6068 = vmax.f32 %v6057, 0.0
    %v6069 = vpack.c.bf16 %v6064, %v6059
    %v6070 = vpack.c.bf16 %v6065, %v6060
    %v6071 = vpack.c.bf16 %v6066, %v6061
    %v6072 = vpack.c.bf16 %v6067, %v6062
    %v6073 = vpack.c.bf16 %v6068, %v6063
    %v6074 = vld [vmem:[#allocation9] sm:$0xff]
    %v6075 = vld [vmem:[#allocation9 + $0x8] sm:$0xff]
    %v6076 = vld [vmem:[#allocation9 + $0x10] sm:$0xff]
    %v6077 = vld [vmem:[#allocation9 + $0x18] sm:$0xff]
    %v6078 = vld [vmem:[#allocation9 + $0x20] sm:$0xff]
    %v6079 = vld [vmem:[#allocation9 + $0x28] sm:$0xff]
    %v6080 = vld [vmem:[#allocation9 + $0x30] sm:$0xff]
    %v6081 = vld [vmem:[#allocation9 + $0x38] sm:$0xff]
    %v6082 = vld [vmem:[#allocation9 + $0x40] sm:$0xff]
    %v6083 = vld [vmem:[#allocation9 + $0x48] sm:$0xff]
    %v6084 = vld [vmem:[#allocation9 + $0x50] sm:$0xff]
    %v6085 = vld [vmem:[#allocation9 + $0x58] sm:$0xff]
    %v6086 = vld [vmem:[#allocation9 + $0x60] sm:$0xff]
    %v6087 = vld [vmem:[#allocation9 + $0x68] sm:$0xff]
    %v6088 = vld [vmem:[#allocation9 + $0x70] sm:$0xff]
    %v6089 = vld [vmem:[#allocation9 + $0x78] sm:$0xff]
    %v6090 = vld [vmem:[#allocation9 + $0x80] sm:$0xff]
    %v6091 = vld [vmem:[#allocation9 + $0x88] sm:$0xff]
    %v6092 = vld [vmem:[#allocation9 + $0x90] sm:$0xff]
    %v6093 = vld [vmem:[#allocation9 + $0x98] sm:$0xff]
    %v6094 = vld [vmem:[#allocation9 + $0xa0] sm:$0xff]
    %v6095 = vld [vmem:[#allocation9 + $0xa8] sm:$0xff]
    %v6096 = vld [vmem:[#allocation9 + $0xb0] sm:$0xff]
    %v6097 = vld [vmem:[#allocation9 + $0xb8] sm:$0xff]
    %v6098 = vld [vmem:[#allocation9 + $0xc0] sm:$0xff]
    %v6099 = vld [vmem:[#allocation9 + $0xc8] sm:$0xff]
    %v6100 = vld [vmem:[#allocation9 + $0xd0] sm:$0xff]
    %v6101 = vld [vmem:[#allocation9 + $0xd8] sm:$0xff]
    %v6102 = vld [vmem:[#allocation9 + $0xe0] sm:$0xff]
    %v6103 = vld [vmem:[#allocation9 + $0xe8] sm:$0xff]
    %v6104 = vld [vmem:[#allocation9 + $0xf0] sm:$0xff]
    %v6105 = vld [vmem:[#allocation9 + $0xf8] sm:$0xff]
    %v6106 = vld [vmem:[#allocation9 + $0x100] sm:$0xff]
    %v6107 = vld [vmem:[#allocation9 + $0x108] sm:$0xff]
    %v6108 = vld [vmem:[#allocation9 + $0x110] sm:$0xff]
    %v6109 = vld [vmem:[#allocation9 + $0x118] sm:$0xff]
    %v6110 = vld [vmem:[#allocation9 + $0x120] sm:$0xff]
    %v6111 = vld [vmem:[#allocation9 + $0x128] sm:$0xff]
    %v6112 = vld [vmem:[#allocation9 + $0x130] sm:$0xff]
    %v6113 = vld [vmem:[#allocation9 + $0x138] sm:$0xff]
    %v6114 = vld [vmem:[#allocation9 + $0x140] sm:$0xff]
    %v6115 = vld [vmem:[#allocation9 + $0x148] sm:$0xff]
    %v6116 = vld [vmem:[#allocation9 + $0x150] sm:$0xff]
    %v6117 = vld [vmem:[#allocation9 + $0x158] sm:$0xff]
    %v6118 = vld [vmem:[#allocation9 + $0x160] sm:$0xff]
    %v6119 = vld [vmem:[#allocation9 + $0x168] sm:$0xff]
    %v6120 = vld [vmem:[#allocation9 + $0x170] sm:$0xff]
    %v6121 = vld [vmem:[#allocation9 + $0x178] sm:$0xff]
    %v6122 = vld [vmem:[#allocation9 + $0x180] sm:$0xff]
    %v6123 = vld [vmem:[#allocation9 + $0x188] sm:$0xff]
    %v6124 = vld [vmem:[#allocation9 + $0x190] sm:$0xff]
    %v6125 = vld [vmem:[#allocation9 + $0x198] sm:$0xff]
    %v6126 = vld [vmem:[#allocation9 + $0x1a0] sm:$0xff]
    %v6127 = vld [vmem:[#allocation9 + $0x1a8] sm:$0xff]
    %v6128 = vld [vmem:[#allocation9 + $0x1b0] sm:$0xff]
    %v6129 = vld [vmem:[#allocation9 + $0x1b8] sm:$0xff]
    %v6130 = vld [vmem:[#allocation9 + $0x1c0] sm:$0xff]
    %v6131 = vld [vmem:[#allocation9 + $0x1c8] sm:$0xff]
    %v6132 = vld [vmem:[#allocation9 + $0x1d0] sm:$0xff]
    %v6133 = vld [vmem:[#allocation9 + $0x1d8] sm:$0xff]
    %v6134 = vld [vmem:[#allocation9 + $0x1e0] sm:$0xff]
    %v6135 = vld [vmem:[#allocation9 + $0x1e8] sm:$0xff]
    %v6136 = vld [vmem:[#allocation9 + $0x1f0] sm:$0xff]
    %v6137 = vld [vmem:[#allocation9 + $0x1f8] sm:$0xff]
    %v6138 = vld [vmem:[#allocation9 + $0x200] sm:$0xff]
    %v6139 = vld [vmem:[#allocation9 + $0x208] sm:$0xff]
    %v6140 = vld [vmem:[#allocation9 + $0x210] sm:$0xff]
    %v6141 = vld [vmem:[#allocation9 + $0x218] sm:$0xff]
    %v6142 = vld [vmem:[#allocation9 + $0x220] sm:$0xff]
    %v6143 = vld [vmem:[#allocation9 + $0x228] sm:$0xff]
    %v6144 = vld [vmem:[#allocation9 + $0x230] sm:$0xff]
    %v6145 = vld [vmem:[#allocation9 + $0x238] sm:$0xff]
    %v6146 = vld [vmem:[#allocation9 + $0x240] sm:$0xff]
    %v6147 = vld [vmem:[#allocation9 + $0x248] sm:$0xff]
    %v6148 = vld [vmem:[#allocation9 + $0x250] sm:$0xff]
    %v6149 = vld [vmem:[#allocation9 + $0x258] sm:$0xff]
    %v6150 = vld [vmem:[#allocation9 + $0x260] sm:$0xff]
    %v6151 = vld [vmem:[#allocation9 + $0x268] sm:$0xff]
    %v6152 = vld [vmem:[#allocation9 + $0x270] sm:$0xff]
    %v6153 = vld [vmem:[#allocation9 + $0x278] sm:$0xff]
    %v6154 = vld [vmem:[#allocation9 + $0x280] sm:$0xff]
    %v6155 = vld [vmem:[#allocation9 + $0x288] sm:$0xff]
    %v6156 = vld [vmem:[#allocation9 + $0x290] sm:$0xff]
    %v6157 = vld [vmem:[#allocation9 + $0x298] sm:$0xff]
    %v6158 = vld [vmem:[#allocation9 + $0x2a0] sm:$0xff]
    %v6159 = vld [vmem:[#allocation9 + $0x2a8] sm:$0xff]
    %v6160 = vld [vmem:[#allocation9 + $0x2b0] sm:$0xff]
    %v6161 = vld [vmem:[#allocation9 + $0x2b8] sm:$0xff]
    %v6162 = vld [vmem:[#allocation9 + $0x2c0] sm:$0xff]
    %v6163 = vld [vmem:[#allocation9 + $0x2c8] sm:$0xff]
    %v6164 = vld [vmem:[#allocation9 + $0x2d0] sm:$0xff]
    %v6165 = vld [vmem:[#allocation9 + $0x2d8] sm:$0xff]
    %v6166 = vld [vmem:[#allocation9 + $0x2e0] sm:$0xff]
    %v6167 = vld [vmem:[#allocation9 + $0x2e8] sm:$0xff]
    %v6168 = vld [vmem:[#allocation9 + $0x2f0] sm:$0xff]
    %v6169 = vld [vmem:[#allocation9 + $0x2f8] sm:$0xff]
    %v6170 = vld [vmem:[#allocation9 + $0x300] sm:$0xff]
    %v6171 = vld [vmem:[#allocation9 + $0x308] sm:$0xff]
    %v6172 = vld [vmem:[#allocation9 + $0x310] sm:$0xff]
    %v6173 = vld [vmem:[#allocation9 + $0x318] sm:$0xff]
    %v6174 = vld [vmem:[#allocation9 + $0x320] sm:$0xff]
    %v6175 = vld [vmem:[#allocation9 + $0x328] sm:$0xff]
    %v6176 = vld [vmem:[#allocation9 + $0x330] sm:$0xff]
    %v6177 = vld [vmem:[#allocation9 + $0x338] sm:$0xff]
    %v6178 = vld [vmem:[#allocation9 + $0x340] sm:$0xff]
    %v6179 = vld [vmem:[#allocation9 + $0x348] sm:$0xff]
    %v6180 = vld [vmem:[#allocation9 + $0x350] sm:$0xff]
    %v6181 = vld [vmem:[#allocation9 + $0x358] sm:$0xff]
    %v6182 = vld [vmem:[#allocation9 + $0x360] sm:$0xff]
    %v6183 = vld [vmem:[#allocation9 + $0x368] sm:$0xff]
    %v6184 = vld [vmem:[#allocation9 + $0x370] sm:$0xff]
    %v6185 = vld [vmem:[#allocation9 + $0x378] sm:$0xff]
    %v6186 = vld [vmem:[#allocation9 + $0x380] sm:$0xff]
    %v6187 = vld [vmem:[#allocation9 + $0x388] sm:$0xff]
    %v6188 = vld [vmem:[#allocation9 + $0x390] sm:$0xff]
    %v6189 = vld [vmem:[#allocation9 + $0x398] sm:$0xff]
    %v6190 = vld [vmem:[#allocation9 + $0x3a0] sm:$0xff]
    %v6191 = vld [vmem:[#allocation9 + $0x3a8] sm:$0xff]
    %v6192 = vld [vmem:[#allocation9 + $0x3b0] sm:$0xff]
    %v6193 = vld [vmem:[#allocation9 + $0x3b8] sm:$0xff]
    %v6194 = vld [vmem:[#allocation9 + $0x3c0] sm:$0xff]
    %v6195 = vld [vmem:[#allocation9 + $0x3c8] sm:$0xff]
    %v6196 = vld [vmem:[#allocation9 + $0x3d0] sm:$0xff]
    %v6197 = vld [vmem:[#allocation9 + $0x3d8] sm:$0xff]
    %v6198 = vld [vmem:[#allocation9 + $0x3e0] sm:$0xff]
    %v6199 = vld [vmem:[#allocation9 + $0x3e8] sm:$0xff]
    %v6200 = vld [vmem:[#allocation9 + $0x3f0] sm:$0xff]
    %v6201 = vld [vmem:[#allocation9 + $0x3f8] sm:$0xff]
    %v6202 = vld [vmem:[#allocation9 + $0x400] sm:$0xff]
    %v6203 = vld [vmem:[#allocation9 + $0x408] sm:$0xff]
    %v6204 = vld [vmem:[#allocation9 + $0x410] sm:$0xff]
    %v6205 = vld [vmem:[#allocation9 + $0x418] sm:$0xff]
    %v6206 = vld [vmem:[#allocation9 + $0x420] sm:$0xff]
    %v6207 = vld [vmem:[#allocation9 + $0x428] sm:$0xff]
    %v6208 = vld [vmem:[#allocation9 + $0x430] sm:$0xff]
    %v6209 = vld [vmem:[#allocation9 + $0x438] sm:$0xff]
    %v6210 = vld [vmem:[#allocation9 + $0x440] sm:$0xff]
    %v6211 = vld [vmem:[#allocation9 + $0x448] sm:$0xff]
    %v6212 = vld [vmem:[#allocation9 + $0x450] sm:$0xff]
    %v6213 = vld [vmem:[#allocation9 + $0x458] sm:$0xff]
    %v6214 = vld [vmem:[#allocation9 + $0x460] sm:$0xff]
    %v6215 = vld [vmem:[#allocation9 + $0x468] sm:$0xff]
    %v6216 = vld [vmem:[#allocation9 + $0x470] sm:$0xff]
    %v6217 = vld [vmem:[#allocation9 + $0x478] sm:$0xff]
    %v6218 = vld [vmem:[#allocation9 + $0x480] sm:$0xff]
    %v6219 = vld [vmem:[#allocation9 + $0x488] sm:$0xff]
    %v6220 = vld [vmem:[#allocation9 + $0x490] sm:$0xff]
    %v6221 = vld [vmem:[#allocation9 + $0x498] sm:$0xff]
    %v6222 = vld [vmem:[#allocation9 + $0x4a0] sm:$0xff]
    %v6223 = vld [vmem:[#allocation9 + $0x4a8] sm:$0xff]
    %v6224 = vld [vmem:[#allocation9 + $0x4b0] sm:$0xff]
    %v6225 = vld [vmem:[#allocation9 + $0x4b8] sm:$0xff]
    %v6226 = vld [vmem:[#allocation9 + $0x4c0] sm:$0xff]
    %v6227 = vld [vmem:[#allocation9 + $0x4c8] sm:$0xff]
    %v6228 = vld [vmem:[#allocation9 + $0x4d0] sm:$0xff]
    %v6229 = vld [vmem:[#allocation9 + $0x4d8] sm:$0xff]
    %v6230 = vld [vmem:[#allocation9 + $0x4e0] sm:$0xff]
    %v6231 = vld [vmem:[#allocation9 + $0x4e8] sm:$0xff]
    %v6232 = vld [vmem:[#allocation9 + $0x4f0] sm:$0xff]
    %v6233 = vld [vmem:[#allocation9 + $0x4f8] sm:$0xff]
    %v6234 = vld [vmem:[#allocation10] sm:$0xf]
    %v6236 = vperm.slane %v6234, 0
    %v6237 = vperm.slane %v6234, 1
    %v6238 = vperm.slane %v6234, 2
    %v6239 = vperm.slane %v6234, 3
    %v6404 = vunpack.c.l.b16 %v6074
    %v6405 = vunpack.c.h.b16 %v6074
    %v6406 = vunpack.c.l.b16 %v6075
    %v6407 = vunpack.c.h.b16 %v6075
    %v6408 = vunpack.c.l.b16 %v6076
    %v6409 = vunpack.c.h.b16 %v6076
    %v6410 = vunpack.c.l.b16 %v6077
    %v6411 = vunpack.c.h.b16 %v6077
    %v6412 = vunpack.c.l.b16 %v6078
    %v6413 = vunpack.c.h.b16 %v6078
    %v6414 = vunpack.c.l.b16 %v6079
    %v6415 = vunpack.c.h.b16 %v6079
    %v6416 = vunpack.c.l.b16 %v6080
    %v6417 = vunpack.c.h.b16 %v6080
    %v6418 = vunpack.c.l.b16 %v6081
    %v6419 = vunpack.c.h.b16 %v6081
    %v6420 = vunpack.c.l.b16 %v6082
    %v6421 = vunpack.c.h.b16 %v6082
    %v6422 = vunpack.c.l.b16 %v6083
    %v6423 = vunpack.c.h.b16 %v6083
    %v6424 = vunpack.c.l.b16 %v6084
    %v6425 = vunpack.c.h.b16 %v6084
    %v6426 = vunpack.c.l.b16 %v6085
    %v6427 = vunpack.c.h.b16 %v6085
    %v6428 = vunpack.c.l.b16 %v6086
    %v6429 = vunpack.c.h.b16 %v6086
    %v6430 = vunpack.c.l.b16 %v6087
    %v6431 = vunpack.c.h.b16 %v6087
    %v6432 = vunpack.c.l.b16 %v6088
    %v6433 = vunpack.c.h.b16 %v6088
    %v6434 = vunpack.c.l.b16 %v6089
    %v6435 = vunpack.c.h.b16 %v6089
    %v6436 = vunpack.c.l.b16 %v6090
    %v6437 = vunpack.c.h.b16 %v6090
    %v6438 = vunpack.c.l.b16 %v6091
    %v6439 = vunpack.c.h.b16 %v6091
    %v6440 = vunpack.c.l.b16 %v6092
    %v6441 = vunpack.c.h.b16 %v6092
    %v6442 = vunpack.c.l.b16 %v6093
    %v6443 = vunpack.c.h.b16 %v6093
    %v6444 = vunpack.c.l.b16 %v6094
    %v6445 = vunpack.c.h.b16 %v6094
    %v6446 = vunpack.c.l.b16 %v6095
    %v6447 = vunpack.c.h.b16 %v6095
    %v6448 = vunpack.c.l.b16 %v6096
    %v6449 = vunpack.c.h.b16 %v6096
    %v6450 = vunpack.c.l.b16 %v6097
    %v6451 = vunpack.c.h.b16 %v6097
    %v6452 = vunpack.c.l.b16 %v6098
    %v6453 = vunpack.c.h.b16 %v6098
    %v6454 = vunpack.c.l.b16 %v6099
    %v6455 = vunpack.c.h.b16 %v6099
    %v6456 = vunpack.c.l.b16 %v6100
    %v6457 = vunpack.c.h.b16 %v6100
    %v6458 = vunpack.c.l.b16 %v6101
    %v6459 = vunpack.c.h.b16 %v6101
    %v6460 = vunpack.c.l.b16 %v6102
    %v6461 = vunpack.c.h.b16 %v6102
    %v6462 = vunpack.c.l.b16 %v6103
    %v6463 = vunpack.c.h.b16 %v6103
    %v6464 = vunpack.c.l.b16 %v6104
    %v6465 = vunpack.c.h.b16 %v6104
    %v6466 = vunpack.c.l.b16 %v6105
    %v6467 = vunpack.c.h.b16 %v6105
    %v6468 = vunpack.c.l.b16 %v6106
    %v6469 = vunpack.c.h.b16 %v6106
    %v6470 = vunpack.c.l.b16 %v6107
    %v6471 = vunpack.c.h.b16 %v6107
    %v6472 = vunpack.c.l.b16 %v6108
    %v6473 = vunpack.c.h.b16 %v6108
    %v6474 = vunpack.c.l.b16 %v6109
    %v6475 = vunpack.c.h.b16 %v6109
    %v6476 = vunpack.c.l.b16 %v6110
    %v6477 = vunpack.c.h.b16 %v6110
    %v6478 = vunpack.c.l.b16 %v6111
    %v6479 = vunpack.c.h.b16 %v6111
    %v6480 = vunpack.c.l.b16 %v6112
    %v6481 = vunpack.c.h.b16 %v6112
    %v6482 = vunpack.c.l.b16 %v6113
    %v6483 = vunpack.c.h.b16 %v6113
    %v6484 = vunpack.c.l.b16 %v6114
    %v6485 = vunpack.c.h.b16 %v6114
    %v6486 = vunpack.c.l.b16 %v6115
    %v6487 = vunpack.c.h.b16 %v6115
    %v6488 = vunpack.c.l.b16 %v6116
    %v6489 = vunpack.c.h.b16 %v6116
    %v6490 = vunpack.c.l.b16 %v6117
    %v6491 = vunpack.c.h.b16 %v6117
    %v6492 = vunpack.c.l.b16 %v6118
    %v6493 = vunpack.c.h.b16 %v6118
    %v6494 = vunpack.c.l.b16 %v6119
    %v6495 = vunpack.c.h.b16 %v6119
    %v6496 = vunpack.c.l.b16 %v6120
    %v6497 = vunpack.c.h.b16 %v6120
    %v6498 = vunpack.c.l.b16 %v6121
    %v6499 = vunpack.c.h.b16 %v6121
    %v6500 = vunpack.c.l.b16 %v6122
    %v6501 = vunpack.c.h.b16 %v6122
    %v6502 = vunpack.c.l.b16 %v6123
    %v6503 = vunpack.c.h.b16 %v6123
    %v6504 = vunpack.c.l.b16 %v6124
    %v6505 = vunpack.c.h.b16 %v6124
    %v6506 = vunpack.c.l.b16 %v6125
    %v6507 = vunpack.c.h.b16 %v6125
    %v6508 = vunpack.c.l.b16 %v6126
    %v6509 = vunpack.c.h.b16 %v6126
    %v6510 = vunpack.c.l.b16 %v6127
    %v6511 = vunpack.c.h.b16 %v6127
    %v6512 = vunpack.c.l.b16 %v6128
    %v6513 = vunpack.c.h.b16 %v6128
    %v6514 = vunpack.c.l.b16 %v6129
    %v6515 = vunpack.c.h.b16 %v6129
    %v6516 = vunpack.c.l.b16 %v6130
    %v6517 = vunpack.c.h.b16 %v6130
    %v6518 = vunpack.c.l.b16 %v6131
    %v6519 = vunpack.c.h.b16 %v6131
    %v6520 = vunpack.c.l.b16 %v6132
    %v6521 = vunpack.c.h.b16 %v6132
    %v6522 = vunpack.c.l.b16 %v6133
    %v6523 = vunpack.c.h.b16 %v6133
    %v6524 = vunpack.c.l.b16 %v6134
    %v6525 = vunpack.c.h.b16 %v6134
    %v6526 = vunpack.c.l.b16 %v6135
    %v6527 = vunpack.c.h.b16 %v6135
    %v6528 = vunpack.c.l.b16 %v6136
    %v6529 = vunpack.c.h.b16 %v6136
    %v6530 = vunpack.c.l.b16 %v6137
    %v6531 = vunpack.c.h.b16 %v6137
    %v6532 = vunpack.c.l.b16 %v6138
    %v6533 = vunpack.c.h.b16 %v6138
    %v6534 = vunpack.c.l.b16 %v6139
    %v6535 = vunpack.c.h.b16 %v6139
    %v6536 = vunpack.c.l.b16 %v6140
    %v6537 = vunpack.c.h.b16 %v6140
    %v6538 = vunpack.c.l.b16 %v6141
    %v6539 = vunpack.c.h.b16 %v6141
    %v6540 = vunpack.c.l.b16 %v6142
    %v6541 = vunpack.c.h.b16 %v6142
    %v6542 = vunpack.c.l.b16 %v6143
    %v6543 = vunpack.c.h.b16 %v6143
    %v6544 = vunpack.c.l.b16 %v6144
    %v6545 = vunpack.c.h.b16 %v6144
    %v6546 = vunpack.c.l.b16 %v6145
    %v6547 = vunpack.c.h.b16 %v6145
    %v6548 = vunpack.c.l.b16 %v6146
    %v6549 = vunpack.c.h.b16 %v6146
    %v6550 = vunpack.c.l.b16 %v6147
    %v6551 = vunpack.c.h.b16 %v6147
    %v6552 = vunpack.c.l.b16 %v6148
    %v6553 = vunpack.c.h.b16 %v6148
    %v6554 = vunpack.c.l.b16 %v6149
    %v6555 = vunpack.c.h.b16 %v6149
    %v6556 = vunpack.c.l.b16 %v6150
    %v6557 = vunpack.c.h.b16 %v6150
    %v6558 = vunpack.c.l.b16 %v6151
    %v6559 = vunpack.c.h.b16 %v6151
    %v6560 = vunpack.c.l.b16 %v6152
    %v6561 = vunpack.c.h.b16 %v6152
    %v6562 = vunpack.c.l.b16 %v6153
    %v6563 = vunpack.c.h.b16 %v6153
    %v6564 = vunpack.c.l.b16 %v6154
    %v6565 = vunpack.c.h.b16 %v6154
    %v6566 = vunpack.c.l.b16 %v6155
    %v6567 = vunpack.c.h.b16 %v6155
    %v6568 = vunpack.c.l.b16 %v6156
    %v6569 = vunpack.c.h.b16 %v6156
    %v6570 = vunpack.c.l.b16 %v6157
    %v6571 = vunpack.c.h.b16 %v6157
    %v6572 = vunpack.c.l.b16 %v6158
    %v6573 = vunpack.c.h.b16 %v6158
    %v6574 = vunpack.c.l.b16 %v6159
    %v6575 = vunpack.c.h.b16 %v6159
    %v6576 = vunpack.c.l.b16 %v6160
    %v6577 = vunpack.c.h.b16 %v6160
    %v6578 = vunpack.c.l.b16 %v6161
    %v6579 = vunpack.c.h.b16 %v6161
    %v6580 = vunpack.c.l.b16 %v6162
    %v6581 = vunpack.c.h.b16 %v6162
    %v6582 = vunpack.c.l.b16 %v6163
    %v6583 = vunpack.c.h.b16 %v6163
    %v6584 = vunpack.c.l.b16 %v6164
    %v6585 = vunpack.c.h.b16 %v6164
    %v6586 = vunpack.c.l.b16 %v6165
    %v6587 = vunpack.c.h.b16 %v6165
    %v6588 = vunpack.c.l.b16 %v6166
    %v6589 = vunpack.c.h.b16 %v6166
    %v6590 = vunpack.c.l.b16 %v6167
    %v6591 = vunpack.c.h.b16 %v6167
    %v6592 = vunpack.c.l.b16 %v6168
    %v6593 = vunpack.c.h.b16 %v6168
    %v6594 = vunpack.c.l.b16 %v6169
    %v6595 = vunpack.c.h.b16 %v6169
    %v6596 = vunpack.c.l.b16 %v6170
    %v6597 = vunpack.c.h.b16 %v6170
    %v6598 = vunpack.c.l.b16 %v6171
    %v6599 = vunpack.c.h.b16 %v6171
    %v6600 = vunpack.c.l.b16 %v6172
    %v6601 = vunpack.c.h.b16 %v6172
    %v6602 = vunpack.c.l.b16 %v6173
    %v6603 = vunpack.c.h.b16 %v6173
    %v6604 = vunpack.c.l.b16 %v6174
    %v6605 = vunpack.c.h.b16 %v6174
    %v6606 = vunpack.c.l.b16 %v6175
    %v6607 = vunpack.c.h.b16 %v6175
    %v6608 = vunpack.c.l.b16 %v6176
    %v6609 = vunpack.c.h.b16 %v6176
    %v6610 = vunpack.c.l.b16 %v6177
    %v6611 = vunpack.c.h.b16 %v6177
    %v6612 = vunpack.c.l.b16 %v6178
    %v6613 = vunpack.c.h.b16 %v6178
    %v6614 = vunpack.c.l.b16 %v6179
    %v6615 = vunpack.c.h.b16 %v6179
    %v6616 = vunpack.c.l.b16 %v6180
    %v6617 = vunpack.c.h.b16 %v6180
    %v6618 = vunpack.c.l.b16 %v6181
    %v6619 = vunpack.c.h.b16 %v6181
    %v6620 = vunpack.c.l.b16 %v6182
    %v6621 = vunpack.c.h.b16 %v6182
    %v6622 = vunpack.c.l.b16 %v6183
    %v6623 = vunpack.c.h.b16 %v6183
    %v6624 = vunpack.c.l.b16 %v6184
    %v6625 = vunpack.c.h.b16 %v6184
    %v6626 = vunpack.c.l.b16 %v6185
    %v6627 = vunpack.c.h.b16 %v6185
    %v6628 = vunpack.c.l.b16 %v6186
    %v6629 = vunpack.c.h.b16 %v6186
    %v6630 = vunpack.c.l.b16 %v6187
    %v6631 = vunpack.c.h.b16 %v6187
    %v6632 = vunpack.c.l.b16 %v6188
    %v6633 = vunpack.c.h.b16 %v6188
    %v6634 = vunpack.c.l.b16 %v6189
    %v6635 = vunpack.c.h.b16 %v6189
    %v6636 = vunpack.c.l.b16 %v6190
    %v6637 = vunpack.c.h.b16 %v6190
    %v6638 = vunpack.c.l.b16 %v6191
    %v6639 = vunpack.c.h.b16 %v6191
    %v6640 = vunpack.c.l.b16 %v6192
    %v6641 = vunpack.c.h.b16 %v6192
    %v6642 = vunpack.c.l.b16 %v6193
    %v6643 = vunpack.c.h.b16 %v6193
    %v6644 = vunpack.c.l.b16 %v6194
    %v6645 = vunpack.c.h.b16 %v6194
    %v6646 = vunpack.c.l.b16 %v6195
    %v6647 = vunpack.c.h.b16 %v6195
    %v6648 = vunpack.c.l.b16 %v6196
    %v6649 = vunpack.c.h.b16 %v6196
    %v6650 = vunpack.c.l.b16 %v6197
    %v6651 = vunpack.c.h.b16 %v6197
    %v6652 = vunpack.c.l.b16 %v6198
    %v6653 = vunpack.c.h.b16 %v6198
    %v6654 = vunpack.c.l.b16 %v6199
    %v6655 = vunpack.c.h.b16 %v6199
    %v6656 = vunpack.c.l.b16 %v6200
    %v6657 = vunpack.c.h.b16 %v6200
    %v6658 = vunpack.c.l.b16 %v6201
    %v6659 = vunpack.c.h.b16 %v6201
    %v6660 = vunpack.c.l.b16 %v6202
    %v6661 = vunpack.c.h.b16 %v6202
    %v6662 = vunpack.c.l.b16 %v6203
    %v6663 = vunpack.c.h.b16 %v6203
    %v6664 = vunpack.c.l.b16 %v6204
    %v6665 = vunpack.c.h.b16 %v6204
    %v6666 = vunpack.c.l.b16 %v6205
    %v6667 = vunpack.c.h.b16 %v6205
    %v6668 = vunpack.c.l.b16 %v6206
    %v6669 = vunpack.c.h.b16 %v6206
    %v6670 = vunpack.c.l.b16 %v6207
    %v6671 = vunpack.c.h.b16 %v6207
    %v6672 = vunpack.c.l.b16 %v6208
    %v6673 = vunpack.c.h.b16 %v6208
    %v6674 = vunpack.c.l.b16 %v6209
    %v6675 = vunpack.c.h.b16 %v6209
    %v6676 = vunpack.c.l.b16 %v6210
    %v6677 = vunpack.c.h.b16 %v6210
    %v6678 = vunpack.c.l.b16 %v6211
    %v6679 = vunpack.c.h.b16 %v6211
    %v6680 = vunpack.c.l.b16 %v6212
    %v6681 = vunpack.c.h.b16 %v6212
    %v6682 = vunpack.c.l.b16 %v6213
    %v6683 = vunpack.c.h.b16 %v6213
    %v6684 = vunpack.c.l.b16 %v6214
    %v6685 = vunpack.c.h.b16 %v6214
    %v6686 = vunpack.c.l.b16 %v6215
    %v6687 = vunpack.c.h.b16 %v6215
    %v6688 = vunpack.c.l.b16 %v6216
    %v6689 = vunpack.c.h.b16 %v6216
    %v6690 = vunpack.c.l.b16 %v6217
    %v6691 = vunpack.c.h.b16 %v6217
    %v6692 = vunpack.c.l.b16 %v6218
    %v6693 = vunpack.c.h.b16 %v6218
    %v6694 = vunpack.c.l.b16 %v6219
    %v6695 = vunpack.c.h.b16 %v6219
    %v6696 = vunpack.c.l.b16 %v6220
    %v6697 = vunpack.c.h.b16 %v6220
    %v6698 = vunpack.c.l.b16 %v6221
    %v6699 = vunpack.c.h.b16 %v6221
    %v6700 = vunpack.c.l.b16 %v6222
    %v6701 = vunpack.c.h.b16 %v6222
    %v6702 = vunpack.c.l.b16 %v6223
    %v6703 = vunpack.c.h.b16 %v6223
    %v6704 = vunpack.c.l.b16 %v6224
    %v6705 = vunpack.c.h.b16 %v6224
    %v6706 = vunpack.c.l.b16 %v6225
    %v6707 = vunpack.c.h.b16 %v6225
    %v6708 = vunpack.c.l.b16 %v6226
    %v6709 = vunpack.c.h.b16 %v6226
    %v6710 = vunpack.c.l.b16 %v6227
    %v6711 = vunpack.c.h.b16 %v6227
    %v6712 = vunpack.c.l.b16 %v6228
    %v6713 = vunpack.c.h.b16 %v6228
    %v6714 = vunpack.c.l.b16 %v6229
    %v6715 = vunpack.c.h.b16 %v6229
    %v6716 = vunpack.c.l.b16 %v6230
    %v6717 = vunpack.c.h.b16 %v6230
    %v6718 = vunpack.c.l.b16 %v6231
    %v6719 = vunpack.c.h.b16 %v6231
    %v6720 = vunpack.c.l.b16 %v6232
    %v6721 = vunpack.c.h.b16 %v6232
    %v6722 = vunpack.c.l.b16 %v6233
    %v6723 = vunpack.c.h.b16 %v6233
    %v6724 = vpack.c.b16 %v6408, %v6404
    %v6725 = vpack.c.b16 %v6409, %v6405
    %v6726 = vpack.c.b16 %v6410, %v6406
    %v6727 = vpack.c.b16 %v6411, %v6407
    %v6728 = vpack.c.b16 %v6416, %v6412
    %v6729 = vpack.c.b16 %v6417, %v6413
    %v6730 = vpack.c.b16 %v6418, %v6414
    %v6731 = vpack.c.b16 %v6419, %v6415
    %v6732 = vpack.c.b16 %v6424, %v6420
    %v6733 = vpack.c.b16 %v6425, %v6421
    %v6734 = vpack.c.b16 %v6426, %v6422
    %v6735 = vpack.c.b16 %v6427, %v6423
    %v6736 = vpack.c.b16 %v6432, %v6428
    %v6737 = vpack.c.b16 %v6433, %v6429
    %v6738 = vpack.c.b16 %v6434, %v6430
    %v6739 = vpack.c.b16 %v6435, %v6431
    %v6740 = vpack.c.b16 %v6440, %v6436
    %v6741 = vpack.c.b16 %v6441, %v6437
    %v6742 = vpack.c.b16 %v6442, %v6438
    %v6743 = vpack.c.b16 %v6443, %v6439
    %v6744 = vpack.c.b16 %v6448, %v6444
    %v6745 = vpack.c.b16 %v6449, %v6445
    %v6746 = vpack.c.b16 %v6450, %v6446
    %v6747 = vpack.c.b16 %v6451, %v6447
    %v6748 = vpack.c.b16 %v6456, %v6452
    %v6749 = vpack.c.b16 %v6457, %v6453
    %v6750 = vpack.c.b16 %v6458, %v6454
    %v6751 = vpack.c.b16 %v6459, %v6455
    %v6752 = vpack.c.b16 %v6464, %v6460
    %v6753 = vpack.c.b16 %v6465, %v6461
    %v6754 = vpack.c.b16 %v6466, %v6462
    %v6755 = vpack.c.b16 %v6467, %v6463
    %v6756 = vpack.c.b16 %v6472, %v6468
    %v6757 = vpack.c.b16 %v6473, %v6469
    %v6758 = vpack.c.b16 %v6474, %v6470
    %v6759 = vpack.c.b16 %v6475, %v6471
    %v6760 = vpack.c.b16 %v6480, %v6476
    %v6761 = vpack.c.b16 %v6481, %v6477
    %v6762 = vpack.c.b16 %v6482, %v6478
    %v6763 = vpack.c.b16 %v6483, %v6479
    %v6764 = vpack.c.b16 %v6488, %v6484
    %v6765 = vpack.c.b16 %v6489, %v6485
    %v6766 = vpack.c.b16 %v6490, %v6486
    %v6767 = vpack.c.b16 %v6491, %v6487
    %v6768 = vpack.c.b16 %v6496, %v6492
    %v6769 = vpack.c.b16 %v6497, %v6493
    %v6770 = vpack.c.b16 %v6498, %v6494
    %v6771 = vpack.c.b16 %v6499, %v6495
    %v6772 = vpack.c.b16 %v6504, %v6500
    %v6773 = vpack.c.b16 %v6505, %v6501
    %v6774 = vpack.c.b16 %v6506, %v6502
    %v6775 = vpack.c.b16 %v6507, %v6503
    %v6776 = vpack.c.b16 %v6512, %v6508
    %v6777 = vpack.c.b16 %v6513, %v6509
    %v6778 = vpack.c.b16 %v6514, %v6510
    %v6779 = vpack.c.b16 %v6515, %v6511
    %v6780 = vpack.c.b16 %v6520, %v6516
    %v6781 = vpack.c.b16 %v6521, %v6517
    %v6782 = vpack.c.b16 %v6522, %v6518
    %v6783 = vpack.c.b16 %v6523, %v6519
    %v6784 = vpack.c.b16 %v6528, %v6524
    %v6785 = vpack.c.b16 %v6529, %v6525
    %v6786 = vpack.c.b16 %v6530, %v6526
    %v6787 = vpack.c.b16 %v6531, %v6527
    %v6788 = vpack.c.b16 %v6536, %v6532
    %v6789 = vpack.c.b16 %v6537, %v6533
    %v6790 = vpack.c.b16 %v6538, %v6534
    %v6791 = vpack.c.b16 %v6539, %v6535
    %v6792 = vpack.c.b16 %v6544, %v6540
    %v6793 = vpack.c.b16 %v6545, %v6541
    %v6794 = vpack.c.b16 %v6546, %v6542
    %v6795 = vpack.c.b16 %v6547, %v6543
    %v6796 = vpack.c.b16 %v6552, %v6548
    %v6797 = vpack.c.b16 %v6553, %v6549
    %v6798 = vpack.c.b16 %v6554, %v6550
    %v6799 = vpack.c.b16 %v6555, %v6551
    %v6800 = vpack.c.b16 %v6560, %v6556
    %v6801 = vpack.c.b16 %v6561, %v6557
    %v6802 = vpack.c.b16 %v6562, %v6558
    %v6803 = vpack.c.b16 %v6563, %v6559
    %v6804 = vpack.c.b16 %v6568, %v6564
    %v6805 = vpack.c.b16 %v6569, %v6565
    %v6806 = vpack.c.b16 %v6570, %v6566
    %v6807 = vpack.c.b16 %v6571, %v6567
    %v6808 = vpack.c.b16 %v6576, %v6572
    %v6809 = vpack.c.b16 %v6577, %v6573
    %v6810 = vpack.c.b16 %v6578, %v6574
    %v6811 = vpack.c.b16 %v6579, %v6575
    %v6812 = vpack.c.b16 %v6584, %v6580
    %v6813 = vpack.c.b16 %v6585, %v6581
    %v6814 = vpack.c.b16 %v6586, %v6582
    %v6815 = vpack.c.b16 %v6587, %v6583
    %v6816 = vpack.c.b16 %v6592, %v6588
    %v6817 = vpack.c.b16 %v6593, %v6589
    %v6818 = vpack.c.b16 %v6594, %v6590
    %v6819 = vpack.c.b16 %v6595, %v6591
    %v6820 = vpack.c.b16 %v6600, %v6596
    %v6821 = vpack.c.b16 %v6601, %v6597
    %v6822 = vpack.c.b16 %v6602, %v6598
    %v6823 = vpack.c.b16 %v6603, %v6599
    %v6824 = vpack.c.b16 %v6608, %v6604
    %v6825 = vpack.c.b16 %v6609, %v6605
    %v6826 = vpack.c.b16 %v6610, %v6606
    %v6827 = vpack.c.b16 %v6611, %v6607
    %v6828 = vpack.c.b16 %v6616, %v6612
    %v6829 = vpack.c.b16 %v6617, %v6613
    %v6830 = vpack.c.b16 %v6618, %v6614
    %v6831 = vpack.c.b16 %v6619, %v6615
    %v6832 = vpack.c.b16 %v6624, %v6620
    %v6833 = vpack.c.b16 %v6625, %v6621
    %v6834 = vpack.c.b16 %v6626, %v6622
    %v6835 = vpack.c.b16 %v6627, %v6623
    %v6836 = vpack.c.b16 %v6632, %v6628
    %v6837 = vpack.c.b16 %v6633, %v6629
    %v6838 = vpack.c.b16 %v6634, %v6630
    %v6839 = vpack.c.b16 %v6635, %v6631
    %v6840 = vpack.c.b16 %v6640, %v6636
    %v6841 = vpack.c.b16 %v6641, %v6637
    %v6842 = vpack.c.b16 %v6642, %v6638
    %v6843 = vpack.c.b16 %v6643, %v6639
    %v6844 = vpack.c.b16 %v6648, %v6644
    %v6845 = vpack.c.b16 %v6649, %v6645
    %v6846 = vpack.c.b16 %v6650, %v6646
    %v6847 = vpack.c.b16 %v6651, %v6647
    %v6848 = vpack.c.b16 %v6656, %v6652
    %v6849 = vpack.c.b16 %v6657, %v6653
    %v6850 = vpack.c.b16 %v6658, %v6654
    %v6851 = vpack.c.b16 %v6659, %v6655
    %v6852 = vpack.c.b16 %v6664, %v6660
    %v6853 = vpack.c.b16 %v6665, %v6661
    %v6854 = vpack.c.b16 %v6666, %v6662
    %v6855 = vpack.c.b16 %v6667, %v6663
    %v6856 = vpack.c.b16 %v6672, %v6668
    %v6857 = vpack.c.b16 %v6673, %v6669
    %v6858 = vpack.c.b16 %v6674, %v6670
    %v6859 = vpack.c.b16 %v6675, %v6671
    %v6860 = vpack.c.b16 %v6680, %v6676
    %v6861 = vpack.c.b16 %v6681, %v6677
    %v6862 = vpack.c.b16 %v6682, %v6678
    %v6863 = vpack.c.b16 %v6683, %v6679
    %v6864 = vpack.c.b16 %v6688, %v6684
    %v6865 = vpack.c.b16 %v6689, %v6685
    %v6866 = vpack.c.b16 %v6690, %v6686
    %v6867 = vpack.c.b16 %v6691, %v6687
    %v6868 = vpack.c.b16 %v6696, %v6692
    %v6869 = vpack.c.b16 %v6697, %v6693
    %v6870 = vpack.c.b16 %v6698, %v6694
    %v6871 = vpack.c.b16 %v6699, %v6695
    %v6872 = vpack.c.b16 %v6704, %v6700
    %v6873 = vpack.c.b16 %v6705, %v6701
    %v6874 = vpack.c.b16 %v6706, %v6702
    %v6875 = vpack.c.b16 %v6707, %v6703
    %v6876 = vpack.c.b16 %v6712, %v6708
    %v6877 = vpack.c.b16 %v6713, %v6709
    %v6878 = vpack.c.b16 %v6714, %v6710
    %v6879 = vpack.c.b16 %v6715, %v6711
    %v6880 = vpack.c.b16 %v6720, %v6716
    %v6881 = vpack.c.b16 %v6721, %v6717
    %v6882 = vpack.c.b16 %v6722, %v6718
    %v6883 = vpack.c.b16 %v6723, %v6719
    %7044 = vmatpush.bf16.msra.mxu0 %v6752
    %7045 = vmatpush.bf16.msra.mxu0 %v6748
    %7046 = vmatpush.bf16.msra.mxu0 %v6744
    %7047 = vmatpush.bf16.msra.mxu0 %v6740
    %7048 = vmatpush.bf16.msra.mxu0 %v6736
    %7049 = vmatpush.bf16.msra.mxu0 %v6732
    %7050 = vmatpush.bf16.msra.mxu0 %v6728
    %7051 = vmatpush.bf16.msra.mxu0 %v6724
    %7052 = vmatmul.bf16.gmra.mxu0 %v6069
    %v7053 = vpop.f32.mrf.mxu0
    %v7054 = vadd.f32 %v6236, %v7053
    %v7055 = vpop.f32.mrf.mxu0
    %v7056 = vadd.f32 %v6236, %v7055
    %7057 = vdwg.mxu0
    %7058 = vmatpush.bf16.msra.mxu0 %v6784
    %7059 = vmatpush.bf16.msra.mxu0 %v6780
    %7060 = vmatpush.bf16.msra.mxu0 %v6776
    %7061 = vmatpush.bf16.msra.mxu0 %v6772
    %7062 = vmatpush.bf16.msra.mxu0 %v6768
    %7063 = vmatpush.bf16.msra.mxu0 %v6764
    %7064 = vmatpush.bf16.msra.mxu0 %v6760
    %7065 = vmatpush.bf16.msra.mxu0 %v6756
    %7066 = vmatmul.bf16.gmra.mxu0 %v6070
    %v7067 = vpop.f32.mrf.mxu0
    %v7068 = vadd.f32 %v7054, %v7067
    %v7069 = vpop.f32.mrf.mxu0
    %v7070 = vadd.f32 %v7056, %v7069
    %7071 = vdwg.mxu0
    %7072 = vmatpush.bf16.msra.mxu0 %v6816
    %7073 = vmatpush.bf16.msra.mxu0 %v6812
    %7074 = vmatpush.bf16.msra.mxu0 %v6808
    %7075 = vmatpush.bf16.msra.mxu0 %v6804
    %7076 = vmatpush.bf16.msra.mxu0 %v6800
    %7077 = vmatpush.bf16.msra.mxu0 %v6796
    %7078 = vmatpush.bf16.msra.mxu0 %v6792
    %7079 = vmatpush.bf16.msra.mxu0 %v6788
    %7080 = vmatmul.bf16.gmra.mxu0 %v6071
    %v7081 = vpop.f32.mrf.mxu0
    %v7082 = vadd.f32 %v7068, %v7081
    %v7083 = vpop.f32.mrf.mxu0
    %v7084 = vadd.f32 %v7070, %v7083
    %7085 = vdwg.mxu0
    %7086 = vmatpush.bf16.msra.mxu0 %v6848
    %7087 = vmatpush.bf16.msra.mxu0 %v6844
    %7088 = vmatpush.bf16.msra.mxu0 %v6840
    %7089 = vmatpush.bf16.msra.mxu0 %v6836
    %7090 = vmatpush.bf16.msra.mxu0 %v6832
    %7091 = vmatpush.bf16.msra.mxu0 %v6828
    %7092 = vmatpush.bf16.msra.mxu0 %v6824
    %7093 = vmatpush.bf16.msra.mxu0 %v6820
    %7094 = vmatmul.bf16.gmra.mxu0 %v6072
    %v7095 = vpop.f32.mrf.mxu0
    %v7096 = vadd.f32 %v7082, %v7095
    %v7097 = vpop.f32.mrf.mxu0
    %v7098 = vadd.f32 %v7084, %v7097
    %7099 = vdwg.mxu0
    %7100 = vmatpush.bf16.msra.mxu0 %v6880
    %7101 = vmatpush.bf16.msra.mxu0 %v6876
    %7102 = vmatpush.bf16.msra.mxu0 %v6872
    %7103 = vmatpush.bf16.msra.mxu0 %v6868
    %7104 = vmatpush.bf16.msra.mxu0 %v6864
    %7105 = vmatpush.bf16.msra.mxu0 %v6860
    %7106 = vmatpush.bf16.msra.mxu0 %v6856
    %7107 = vmatpush.bf16.msra.mxu0 %v6852
    %7108 = vmatmul.bf16.gmra.mxu0 %v6073
    %v7109 = vpop.f32.mrf.mxu0
    %v7110 = vadd.f32 %v7096, %v7109
    %v7111 = vpop.f32.mrf.mxu0
    %v7112 = vadd.f32 %v7098, %v7111
    %7113 = vdwg.mxu0
    %7114 = vmatpush.bf16.msra.mxu0 %v6753
    %7115 = vmatpush.bf16.msra.mxu0 %v6749
    %7116 = vmatpush.bf16.msra.mxu0 %v6745
    %7117 = vmatpush.bf16.msra.mxu0 %v6741
    %7118 = vmatpush.bf16.msra.mxu0 %v6737
    %7119 = vmatpush.bf16.msra.mxu0 %v6733
    %7120 = vmatpush.bf16.msra.mxu0 %v6729
    %7121 = vmatpush.bf16.msra.mxu0 %v6725
    %7122 = vmatmul.bf16.gmra.mxu0 %v6069
    %v7123 = vpop.f32.mrf.mxu0
    %v7124 = vadd.f32 %v6237, %v7123
    %v7125 = vpop.f32.mrf.mxu0
    %v7126 = vadd.f32 %v6237, %v7125
    %7127 = vdwg.mxu0
    %7128 = vmatpush.bf16.msra.mxu0 %v6785
    %7129 = vmatpush.bf16.msra.mxu0 %v6781
    %7130 = vmatpush.bf16.msra.mxu0 %v6777
    %7131 = vmatpush.bf16.msra.mxu0 %v6773
    %7132 = vmatpush.bf16.msra.mxu0 %v6769
    %7133 = vmatpush.bf16.msra.mxu0 %v6765
    %7134 = vmatpush.bf16.msra.mxu0 %v6761
    %7135 = vmatpush.bf16.msra.mxu0 %v6757
    %7136 = vmatmul.bf16.gmra.mxu0 %v6070
    %v7137 = vpop.f32.mrf.mxu0
    %v7138 = vadd.f32 %v7124, %v7137
    %v7139 = vpop.f32.mrf.mxu0
    %v7140 = vadd.f32 %v7126, %v7139
    %7141 = vdwg.mxu0
    %7142 = vmatpush.bf16.msra.mxu0 %v6817
    %7143 = vmatpush.bf16.msra.mxu0 %v6813
    %7144 = vmatpush.bf16.msra.mxu0 %v6809
    %7145 = vmatpush.bf16.msra.mxu0 %v6805
    %7146 = vmatpush.bf16.msra.mxu0 %v6801
    %7147 = vmatpush.bf16.msra.mxu0 %v6797
    %7148 = vmatpush.bf16.msra.mxu0 %v6793
    %7149 = vmatpush.bf16.msra.mxu0 %v6789
    %7150 = vmatmul.bf16.gmra.mxu0 %v6071
    %v7151 = vpop.f32.mrf.mxu0
    %v7152 = vadd.f32 %v7138, %v7151
    %v7153 = vpop.f32.mrf.mxu0
    %v7154 = vadd.f32 %v7140, %v7153
    %7155 = vdwg.mxu0
    %7156 = vmatpush.bf16.msra.mxu0 %v6849
    %7157 = vmatpush.bf16.msra.mxu0 %v6845
    %7158 = vmatpush.bf16.msra.mxu0 %v6841
    %7159 = vmatpush.bf16.msra.mxu0 %v6837
    %7160 = vmatpush.bf16.msra.mxu0 %v6833
    %7161 = vmatpush.bf16.msra.mxu0 %v6829
    %7162 = vmatpush.bf16.msra.mxu0 %v6825
    %7163 = vmatpush.bf16.msra.mxu0 %v6821
    %7164 = vmatmul.bf16.gmra.mxu0 %v6072
    %v7165 = vpop.f32.mrf.mxu0
    %v7166 = vadd.f32 %v7152, %v7165
    %v7167 = vpop.f32.mrf.mxu0
    %v7168 = vadd.f32 %v7154, %v7167
    %7169 = vdwg.mxu0
    %7170 = vmatpush.bf16.msra.mxu0 %v6881
    %7171 = vmatpush.bf16.msra.mxu0 %v6877
    %7172 = vmatpush.bf16.msra.mxu0 %v6873
    %7173 = vmatpush.bf16.msra.mxu0 %v6869
    %7174 = vmatpush.bf16.msra.mxu0 %v6865
    %7175 = vmatpush.bf16.msra.mxu0 %v6861
    %7176 = vmatpush.bf16.msra.mxu0 %v6857
    %7177 = vmatpush.bf16.msra.mxu0 %v6853
    %7178 = vmatmul.bf16.gmra.mxu0 %v6073
    %v7179 = vpop.f32.mrf.mxu0
    %v7180 = vadd.f32 %v7166, %v7179
    %v7181 = vpop.f32.mrf.mxu0
    %v7182 = vadd.f32 %v7168, %v7181
    %7183 = vdwg.mxu0
    %7184 = vmatpush.bf16.msra.mxu0 %v6754
    %7185 = vmatpush.bf16.msra.mxu0 %v6750
    %7186 = vmatpush.bf16.msra.mxu0 %v6746
    %7187 = vmatpush.bf16.msra.mxu0 %v6742
    %7188 = vmatpush.bf16.msra.mxu0 %v6738
    %7189 = vmatpush.bf16.msra.mxu0 %v6734
    %7190 = vmatpush.bf16.msra.mxu0 %v6730
    %7191 = vmatpush.bf16.msra.mxu0 %v6726
    %7192 = vmatmul.bf16.gmra.mxu0 %v6069
    %v7193 = vpop.f32.mrf.mxu0
    %v7194 = vadd.f32 %v6238, %v7193
    %v7195 = vpop.f32.mrf.mxu0
    %v7196 = vadd.f32 %v6238, %v7195
    %7197 = vdwg.mxu0
    %7198 = vmatpush.bf16.msra.mxu0 %v6786
    %7199 = vmatpush.bf16.msra.mxu0 %v6782
    %7200 = vmatpush.bf16.msra.mxu0 %v6778
    %7201 = vmatpush.bf16.msra.mxu0 %v6774
    %7202 = vmatpush.bf16.msra.mxu0 %v6770
    %7203 = vmatpush.bf16.msra.mxu0 %v6766
    %7204 = vmatpush.bf16.msra.mxu0 %v6762
    %7205 = vmatpush.bf16.msra.mxu0 %v6758
    %7206 = vmatmul.bf16.gmra.mxu0 %v6070
    %v7207 = vpop.f32.mrf.mxu0
    %v7208 = vadd.f32 %v7194, %v7207
    %v7209 = vpop.f32.mrf.mxu0
    %v7210 = vadd.f32 %v7196, %v7209
    %7211 = vdwg.mxu0
    %7212 = vmatpush.bf16.msra.mxu0 %v6818
    %7213 = vmatpush.bf16.msra.mxu0 %v6814
    %7214 = vmatpush.bf16.msra.mxu0 %v6810
    %7215 = vmatpush.bf16.msra.mxu0 %v6806
    %7216 = vmatpush.bf16.msra.mxu0 %v6802
    %7217 = vmatpush.bf16.msra.mxu0 %v6798
    %7218 = vmatpush.bf16.msra.mxu0 %v6794
    %7219 = vmatpush.bf16.msra.mxu0 %v6790
    %7220 = vmatmul.bf16.gmra.mxu0 %v6071
    %v7221 = vpop.f32.mrf.mxu0
    %v7222 = vadd.f32 %v7208, %v7221
    %v7223 = vpop.f32.mrf.mxu0
    %v7224 = vadd.f32 %v7210, %v7223
    %7225 = vdwg.mxu0
    %7226 = vmatpush.bf16.msra.mxu0 %v6850
    %7227 = vmatpush.bf16.msra.mxu0 %v6846
    %7228 = vmatpush.bf16.msra.mxu0 %v6842
    %7229 = vmatpush.bf16.msra.mxu0 %v6838
    %7230 = vmatpush.bf16.msra.mxu0 %v6834
    %7231 = vmatpush.bf16.msra.mxu0 %v6830
    %7232 = vmatpush.bf16.msra.mxu0 %v6826
    %7233 = vmatpush.bf16.msra.mxu0 %v6822
    %7234 = vmatmul.bf16.gmra.mxu0 %v6072
    %v7235 = vpop.f32.mrf.mxu0
    %v7236 = vadd.f32 %v7222, %v7235
    %v7237 = vpop.f32.mrf.mxu0
    %v7238 = vadd.f32 %v7224, %v7237
    %7239 = vdwg.mxu0
    %7240 = vmatpush.bf16.msra.mxu0 %v6882
    %7241 = vmatpush.bf16.msra.mxu0 %v6878
    %7242 = vmatpush.bf16.msra.mxu0 %v6874
    %7243 = vmatpush.bf16.msra.mxu0 %v6870
    %7244 = vmatpush.bf16.msra.mxu0 %v6866
    %7245 = vmatpush.bf16.msra.mxu0 %v6862
    %7246 = vmatpush.bf16.msra.mxu0 %v6858
    %7247 = vmatpush.bf16.msra.mxu0 %v6854
    %7248 = vmatmul.bf16.gmra.mxu0 %v6073
    %v7249 = vpop.f32.mrf.mxu0
    %v7250 = vadd.f32 %v7236, %v7249
    %v7251 = vpop.f32.mrf.mxu0
    %v7252 = vadd.f32 %v7238, %v7251
    %7253 = vdwg.mxu0
    %7254 = vmatpush.bf16.msra.mxu0 %v6755
    %7255 = vmatpush.bf16.msra.mxu0 %v6751
    %7256 = vmatpush.bf16.msra.mxu0 %v6747
    %7257 = vmatpush.bf16.msra.mxu0 %v6743
    %7258 = vmatpush.bf16.msra.mxu0 %v6739
    %7259 = vmatpush.bf16.msra.mxu0 %v6735
    %7260 = vmatpush.bf16.msra.mxu0 %v6731
    %7261 = vmatpush.bf16.msra.mxu0 %v6727
    %7262 = vmatmul.bf16.gmra.mxu0 %v6069
    %v7263 = vpop.f32.mrf.mxu0
    %v7264 = vadd.f32 %v6239, %v7263
    %v7265 = vpop.f32.mrf.mxu0
    %v7266 = vadd.f32 %v6239, %v7265
    %7267 = vdwg.mxu0
    %7268 = vmatpush.bf16.msra.mxu0 %v6787
    %7269 = vmatpush.bf16.msra.mxu0 %v6783
    %7270 = vmatpush.bf16.msra.mxu0 %v6779
    %7271 = vmatpush.bf16.msra.mxu0 %v6775
    %7272 = vmatpush.bf16.msra.mxu0 %v6771
    %7273 = vmatpush.bf16.msra.mxu0 %v6767
    %7274 = vmatpush.bf16.msra.mxu0 %v6763
    %7275 = vmatpush.bf16.msra.mxu0 %v6759
    %7276 = vmatmul.bf16.gmra.mxu0 %v6070
    %v7277 = vpop.f32.mrf.mxu0
    %v7278 = vadd.f32 %v7264, %v7277
    %v7279 = vpop.f32.mrf.mxu0
    %v7280 = vadd.f32 %v7266, %v7279
    %7281 = vdwg.mxu0
    %7282 = vmatpush.bf16.msra.mxu0 %v6819
    %7283 = vmatpush.bf16.msra.mxu0 %v6815
    %7284 = vmatpush.bf16.msra.mxu0 %v6811
    %7285 = vmatpush.bf16.msra.mxu0 %v6807
    %7286 = vmatpush.bf16.msra.mxu0 %v6803
    %7287 = vmatpush.bf16.msra.mxu0 %v6799
    %7288 = vmatpush.bf16.msra.mxu0 %v6795
    %7289 = vmatpush.bf16.msra.mxu0 %v6791
    %7290 = vmatmul.bf16.gmra.mxu0 %v6071
    %v7291 = vpop.f32.mrf.mxu0
    %v7292 = vadd.f32 %v7278, %v7291
    %v7293 = vpop.f32.mrf.mxu0
    %v7294 = vadd.f32 %v7280, %v7293
    %7295 = vdwg.mxu0
    %7296 = vmatpush.bf16.msra.mxu0 %v6851
    %7297 = vmatpush.bf16.msra.mxu0 %v6847
    %7298 = vmatpush.bf16.msra.mxu0 %v6843
    %7299 = vmatpush.bf16.msra.mxu0 %v6839
    %7300 = vmatpush.bf16.msra.mxu0 %v6835
    %7301 = vmatpush.bf16.msra.mxu0 %v6831
    %7302 = vmatpush.bf16.msra.mxu0 %v6827
    %7303 = vmatpush.bf16.msra.mxu0 %v6823
    %7304 = vmatmul.bf16.gmra.mxu0 %v6072
    %v7305 = vpop.f32.mrf.mxu0
    %v7306 = vadd.f32 %v7292, %v7305
    %v7307 = vpop.f32.mrf.mxu0
    %v7308 = vadd.f32 %v7294, %v7307
    %7309 = vdwg.mxu0
    %7310 = vmatpush.bf16.msra.mxu0 %v6883
    %7311 = vmatpush.bf16.msra.mxu0 %v6879
    %7312 = vmatpush.bf16.msra.mxu0 %v6875
    %7313 = vmatpush.bf16.msra.mxu0 %v6871
    %7314 = vmatpush.bf16.msra.mxu0 %v6867
    %7315 = vmatpush.bf16.msra.mxu0 %v6863
    %7316 = vmatpush.bf16.msra.mxu0 %v6859
    %7317 = vmatpush.bf16.msra.mxu0 %v6855
    %7318 = vmatmul.bf16.gmra.mxu0 %v6073
    %v7319 = vpop.f32.mrf.mxu0
    %v7320 = vadd.f32 %v7306, %v7319
    %v7321 = vpop.f32.mrf.mxu0
    %v7322 = vadd.f32 %v7308, %v7321
    %7323 = vdwg.mxu0
    %v7324 = vmax.f32 %v7110, 0.0
    %v7325 = vmax.f32 %v7180, 0.0
    %v7326 = vmax.f32 %v7250, 0.0
    %v7327 = vmax.f32 %v7320, 0.0
    %v7328 = vmax.f32 %v7112, 0.0
    %v7329 = vmax.f32 %v7182, 0.0
    %v7330 = vmax.f32 %v7252, 0.0
    %v7331 = vmax.f32 %v7322, 0.0
    %v7332 = vpack.c.bf16 %v7328, %v7324
    %v7333 = vpack.c.bf16 %v7329, %v7325
    %v7334 = vpack.c.bf16 %v7330, %v7326
    %v7335 = vpack.c.bf16 %v7331, %v7327
    %v7336 = vld [vmem:[#allocation12] sm:$0xf]
    %v7337 = vld [vmem:[#allocation12 + $0x4] sm:$0xf]
    %v7338 = vld [vmem:[#allocation12 + $0x8] sm:$0xf]
    %v7339 = vld [vmem:[#allocation12 + $0xc] sm:$0xf]
    %v7340 = vld [vmem:[#allocation12 + $0x10] sm:$0xf]
    %v7341 = vld [vmem:[#allocation12 + $0x14] sm:$0xf]
    %v7342 = vld [vmem:[#allocation12 + $0x18] sm:$0xf]
    %v7343 = vld [vmem:[#allocation12 + $0x1c] sm:$0xf]
    %v7344 = vld [vmem:[#allocation12 + $0x20] sm:$0xf]
    %v7345 = vld [vmem:[#allocation12 + $0x24] sm:$0xf]
    %v7346 = vld [vmem:[#allocation12 + $0x28] sm:$0xf]
    %v7347 = vld [vmem:[#allocation12 + $0x2c] sm:$0xf]
    %v7348 = vld [vmem:[#allocation12 + $0x30] sm:$0xf]
    %v7349 = vld [vmem:[#allocation12 + $0x34] sm:$0xf]
    %v7350 = vld [vmem:[#allocation12 + $0x38] sm:$0xf]
    %v7351 = vld [vmem:[#allocation12 + $0x3c] sm:$0xf]
    %v7352 = vld [vmem:[#allocation12 + $0x40] sm:$0xf]
    %v7353 = vld [vmem:[#allocation12 + $0x44] sm:$0xf]
    %v7354 = vld [vmem:[#allocation12 + $0x48] sm:$0xf]
    %v7355 = vld [vmem:[#allocation12 + $0x4c] sm:$0xf]
    %v7356 = vld [vmem:[#allocation12 + $0x50] sm:$0xf]
    %v7357 = vld [vmem:[#allocation12 + $0x54] sm:$0xf]
    %v7358 = vld [vmem:[#allocation12 + $0x58] sm:$0xf]
    %v7359 = vld [vmem:[#allocation12 + $0x5c] sm:$0xf]
    %v7360 = vld [vmem:[#allocation12 + $0x60] sm:$0xf]
    %v7361 = vld [vmem:[#allocation12 + $0x64] sm:$0xf]
    %v7362 = vld [vmem:[#allocation12 + $0x68] sm:$0xf]
    %v7363 = vld [vmem:[#allocation12 + $0x6c] sm:$0xf]
    %v7364 = vld [vmem:[#allocation12 + $0x70] sm:$0xf]
    %v7365 = vld [vmem:[#allocation12 + $0x74] sm:$0xf]
    %v7366 = vld [vmem:[#allocation12 + $0x78] sm:$0xf]
    %v7367 = vld [vmem:[#allocation12 + $0x7c] sm:$0xf]
    %v7368 = vld [vmem:[#allocation12 + $0x80] sm:$0xf]
    %v7369 = vld [vmem:[#allocation12 + $0x84] sm:$0xf]
    %v7370 = vld [vmem:[#allocation12 + $0x88] sm:$0xf]
    %v7371 = vld [vmem:[#allocation12 + $0x8c] sm:$0xf]
    %v7372 = vld [vmem:[#allocation12 + $0x90] sm:$0xf]
    %v7373 = vld [vmem:[#allocation12 + $0x94] sm:$0xf]
    %v7374 = vld [vmem:[#allocation12 + $0x98] sm:$0xf]
    %v7375 = vld [vmem:[#allocation12 + $0x9c] sm:$0xf]
    %v7376 = vld [vmem:[#allocation12 + $0xa0] sm:$0xf]
    %v7377 = vld [vmem:[#allocation12 + $0xa4] sm:$0xf]
    %v7378 = vld [vmem:[#allocation12 + $0xa8] sm:$0xf]
    %v7379 = vld [vmem:[#allocation12 + $0xac] sm:$0xf]
    %v7380 = vld [vmem:[#allocation12 + $0xb0] sm:$0xf]
    %v7381 = vld [vmem:[#allocation12 + $0xb4] sm:$0xf]
    %v7382 = vld [vmem:[#allocation12 + $0xb8] sm:$0xf]
    %v7383 = vld [vmem:[#allocation12 + $0xbc] sm:$0xf]
    %v7384 = vld [vmem:[#allocation12 + $0xc0] sm:$0xf]
    %v7385 = vld [vmem:[#allocation12 + $0xc4] sm:$0xf]
    %v7386 = vld [vmem:[#allocation12 + $0xc8] sm:$0xf]
    %v7387 = vld [vmem:[#allocation12 + $0xcc] sm:$0xf]
    %v7388 = vld [vmem:[#allocation12 + $0xd0] sm:$0xf]
    %v7389 = vld [vmem:[#allocation12 + $0xd4] sm:$0xf]
    %v7390 = vld [vmem:[#allocation12 + $0xd8] sm:$0xf]
    %v7391 = vld [vmem:[#allocation12 + $0xdc] sm:$0xf]
    %v7392 = vld [vmem:[#allocation12 + $0xe0] sm:$0xf]
    %v7393 = vld [vmem:[#allocation12 + $0xe4] sm:$0xf]
    %v7394 = vld [vmem:[#allocation12 + $0xe8] sm:$0xf]
    %v7395 = vld [vmem:[#allocation12 + $0xec] sm:$0xf]
    %v7396 = vld [vmem:[#allocation12 + $0xf0] sm:$0xf]
    %v7397 = vld [vmem:[#allocation12 + $0xf4] sm:$0xf]
    %v7398 = vld [vmem:[#allocation12 + $0xf8] sm:$0xf]
    %v7399 = vld [vmem:[#allocation12 + $0xfc] sm:$0xf]
    %v7400 = vld [vmem:[#allocation13] sm:$0x1]
    %v7402 = vperm.slane %v7400, 0
    %v7468 = vunpack.c.l.b16 %v7336
    %v7469 = vunpack.c.l.b16 %v7337
    %v7470 = vunpack.c.l.b16 %v7338
    %v7471 = vunpack.c.l.b16 %v7339
    %v7472 = vunpack.c.l.b16 %v7340
    %v7473 = vunpack.c.l.b16 %v7341
    %v7474 = vunpack.c.l.b16 %v7342
    %v7475 = vunpack.c.l.b16 %v7343
    %v7476 = vunpack.c.l.b16 %v7344
    %v7477 = vunpack.c.l.b16 %v7345
    %v7478 = vunpack.c.l.b16 %v7346
    %v7479 = vunpack.c.l.b16 %v7347
    %v7480 = vunpack.c.l.b16 %v7348
    %v7481 = vunpack.c.l.b16 %v7349
    %v7482 = vunpack.c.l.b16 %v7350
    %v7483 = vunpack.c.l.b16 %v7351
    %v7484 = vunpack.c.l.b16 %v7352
    %v7485 = vunpack.c.l.b16 %v7353
    %v7486 = vunpack.c.l.b16 %v7354
    %v7487 = vunpack.c.l.b16 %v7355
    %v7488 = vunpack.c.l.b16 %v7356
    %v7489 = vunpack.c.l.b16 %v7357
    %v7490 = vunpack.c.l.b16 %v7358
    %v7491 = vunpack.c.l.b16 %v7359
    %v7492 = vunpack.c.l.b16 %v7360
    %v7493 = vunpack.c.l.b16 %v7361
    %v7494 = vunpack.c.l.b16 %v7362
    %v7495 = vunpack.c.l.b16 %v7363
    %v7496 = vunpack.c.l.b16 %v7364
    %v7497 = vunpack.c.l.b16 %v7365
    %v7498 = vunpack.c.l.b16 %v7366
    %v7499 = vunpack.c.l.b16 %v7367
    %v7500 = vunpack.c.l.b16 %v7368
    %v7501 = vunpack.c.l.b16 %v7369
    %v7502 = vunpack.c.l.b16 %v7370
    %v7503 = vunpack.c.l.b16 %v7371
    %v7504 = vunpack.c.l.b16 %v7372
    %v7505 = vunpack.c.l.b16 %v7373
    %v7506 = vunpack.c.l.b16 %v7374
    %v7507 = vunpack.c.l.b16 %v7375
    %v7508 = vunpack.c.l.b16 %v7376
    %v7509 = vunpack.c.l.b16 %v7377
    %v7510 = vunpack.c.l.b16 %v7378
    %v7511 = vunpack.c.l.b16 %v7379
    %v7512 = vunpack.c.l.b16 %v7380
    %v7513 = vunpack.c.l.b16 %v7381
    %v7514 = vunpack.c.l.b16 %v7382
    %v7515 = vunpack.c.l.b16 %v7383
    %v7516 = vunpack.c.l.b16 %v7384
    %v7517 = vunpack.c.l.b16 %v7385
    %v7518 = vunpack.c.l.b16 %v7386
    %v7519 = vunpack.c.l.b16 %v7387
    %v7520 = vunpack.c.l.b16 %v7388
    %v7521 = vunpack.c.l.b16 %v7389
    %v7522 = vunpack.c.l.b16 %v7390
    %v7523 = vunpack.c.l.b16 %v7391
    %v7524 = vunpack.c.l.b16 %v7392
    %v7525 = vunpack.c.l.b16 %v7393
    %v7526 = vunpack.c.l.b16 %v7394
    %v7527 = vunpack.c.l.b16 %v7395
    %v7528 = vunpack.c.l.b16 %v7396
    %v7529 = vunpack.c.l.b16 %v7397
    %v7530 = vunpack.c.l.b16 %v7398
    %v7531 = vunpack.c.l.b16 %v7399
    %v7532 = vpack.c.b16 %v7469, %v7468
    %v7533 = vpack.c.b16 %v7471, %v7470
    %v7534 = vpack.c.b16 %v7473, %v7472
    %v7535 = vpack.c.b16 %v7475, %v7474
    %v7536 = vpack.c.b16 %v7477, %v7476
    %v7537 = vpack.c.b16 %v7479, %v7478
    %v7538 = vpack.c.b16 %v7481, %v7480
    %v7539 = vpack.c.b16 %v7483, %v7482
    %v7540 = vpack.c.b16 %v7485, %v7484
    %v7541 = vpack.c.b16 %v7487, %v7486
    %v7542 = vpack.c.b16 %v7489, %v7488
    %v7543 = vpack.c.b16 %v7491, %v7490
    %v7544 = vpack.c.b16 %v7493, %v7492
    %v7545 = vpack.c.b16 %v7495, %v7494
    %v7546 = vpack.c.b16 %v7497, %v7496
    %v7547 = vpack.c.b16 %v7499, %v7498
    %v7548 = vpack.c.b16 %v7501, %v7500
    %v7549 = vpack.c.b16 %v7503, %v7502
    %v7550 = vpack.c.b16 %v7505, %v7504
    %v7551 = vpack.c.b16 %v7507, %v7506
    %v7552 = vpack.c.b16 %v7509, %v7508
    %v7553 = vpack.c.b16 %v7511, %v7510
    %v7554 = vpack.c.b16 %v7513, %v7512
    %v7555 = vpack.c.b16 %v7515, %v7514
    %v7556 = vpack.c.b16 %v7517, %v7516
    %v7557 = vpack.c.b16 %v7519, %v7518
    %v7558 = vpack.c.b16 %v7521, %v7520
    %v7559 = vpack.c.b16 %v7523, %v7522
    %v7560 = vpack.c.b16 %v7525, %v7524
    %v7561 = vpack.c.b16 %v7527, %v7526
    %v7562 = vpack.c.b16 %v7529, %v7528
    %v7563 = vpack.c.b16 %v7531, %v7530
    %7596 = vmatpush.bf16.msra.mxu0 %v7539
    %7597 = vmatpush.bf16.msra.mxu0 %v7538
    %7598 = vmatpush.bf16.msra.mxu0 %v7537
    %7599 = vmatpush.bf16.msra.mxu0 %v7536
    %7600 = vmatpush.bf16.msra.mxu0 %v7535
    %7601 = vmatpush.bf16.msra.mxu0 %v7534
    %7602 = vmatpush.bf16.msra.mxu0 %v7533
    %7603 = vmatpush.bf16.msra.mxu0 %v7532
    %7604 = vmatmul.bf16.gmra.mxu0 %v7332
    %v7605 = vpop.f32.mrf.mxu0
    %v7606 = vadd.f32 %v7402, %v7605
    %v7607 = vpop.f32.mrf.mxu0
    %v7608 = vadd.f32 %v7402, %v7607
    %7609 = vdwg.mxu0
    %7610 = vmatpush.bf16.msra.mxu0 %v7547
    %7611 = vmatpush.bf16.msra.mxu0 %v7546
    %7612 = vmatpush.bf16.msra.mxu0 %v7545
    %7613 = vmatpush.bf16.msra.mxu0 %v7544
    %7614 = vmatpush.bf16.msra.mxu0 %v7543
    %7615 = vmatpush.bf16.msra.mxu0 %v7542
    %7616 = vmatpush.bf16.msra.mxu0 %v7541
    %7617 = vmatpush.bf16.msra.mxu0 %v7540
    %7618 = vmatmul.bf16.gmra.mxu0 %v7333
    %v7619 = vpop.f32.mrf.mxu0
    %v7620 = vadd.f32 %v7606, %v7619
    %v7621 = vpop.f32.mrf.mxu0
    %v7622 = vadd.f32 %v7608, %v7621
    %7623 = vdwg.mxu0
    %7624 = vmatpush.bf16.msra.mxu0 %v7555
    %7625 = vmatpush.bf16.msra.mxu0 %v7554
    %7626 = vmatpush.bf16.msra.mxu0 %v7553
    %7627 = vmatpush.bf16.msra.mxu0 %v7552
    %7628 = vmatpush.bf16.msra.mxu0 %v7551
    %7629 = vmatpush.bf16.msra.mxu0 %v7550
    %7630 = vmatpush.bf16.msra.mxu0 %v7549
    %7631 = vmatpush.bf16.msra.mxu0 %v7548
    %7632 = vmatmul.bf16.gmra.mxu0 %v7334
    %v7633 = vpop.f32.mrf.mxu0
    %v7634 = vadd.f32 %v7620, %v7633
    %v7635 = vpop.f32.mrf.mxu0
    %v7636 = vadd.f32 %v7622, %v7635
    %7637 = vdwg.mxu0
    %7638 = vmatpush.bf16.msra.mxu0 %v7563
    %7639 = vmatpush.bf16.msra.mxu0 %v7562
    %7640 = vmatpush.bf16.msra.mxu0 %v7561
    %7641 = vmatpush.bf16.msra.mxu0 %v7560
    %7642 = vmatpush.bf16.msra.mxu0 %v7559
    %7643 = vmatpush.bf16.msra.mxu0 %v7558
    %7644 = vmatpush.bf16.msra.mxu0 %v7557
    %7645 = vmatpush.bf16.msra.mxu0 %v7556
    %7646 = vmatmul.bf16.gmra.mxu0 %v7335
    %v7647 = vpop.f32.mrf.mxu0
    %v7648 = vadd.f32 %v7634, %v7647
    %v7649 = vpop.f32.mrf.mxu0
    %v7650 = vadd.f32 %v7636, %v7649
    %7651 = vdwg.mxu0
    %7652 = vst [vmem:[%s9] sm:$0xff] %v7648
    %7653 = vst [vmem:[%s9 + $0x8] sm:$0xff] %v7650
    // Predicated region
    $region70: #{actor_critic_forward.1} parent=1 // pred_check
      _
    $region71: #{actor_critic_forward.1} parent=1 // pred_check_branch
      %7655 = sbr.rel (0) target = $region73
    $region72: #{actor_critic_forward.1} parent=1 // pred_region
      _
    $region73: #{actor_critic_forward.1} parent=1 // pred_fallthru
      _
    // Predicated region
    $region74: #{actor_critic_forward.1} parent=1 // pred_check
      _
    $region75: #{actor_critic_forward.1} parent=1 // pred_check_branch
      %7657 = sbr.rel (0) target = $region77
    $region76: #{actor_critic_forward.1} parent=1 // pred_region
      _
    $region77: #{actor_critic_forward.1} parent=1 // pred_fallthru
      _
    %7658 = vsyncpa [#allocation3], 1
    %7659 = vsyncpa [#allocation5], 1
    %7660 = vsyncpa [#allocation8], 1
    %7661 = vsyncpa [#allocation11], 1
    %7662 = vsyncpa [#allocation14], 1

</llo_original>
